<compile_context>
chip_gen: v7x
topology: tpu7x:2x2x1
jax: 0.10.0
libtpu: 0.0.40
codegen_flags: <defaults>
</compile_context>

<pallas_src>
import functools

import jax
import jax.numpy as jnp
from jax import lax
from jax.experimental import pallas as pl
from jax.experimental.pallas import tpu as pltpu


def _make_fused_tcn_kernel(dilations, T, C, NB):
    """Kernel computing the whole dilated-conv+ReLU stack for NB batch rows."""

    def kernel(x_ref, w_ref, b_ref, o_ref):
        # x_ref: (NB, T, C) f32   w_ref: (L, 3C, C) bf16   b_ref: (L, 1, C) f32
        # o_ref: (NB, T, C) f32
        cdt = w_ref.dtype                       # bf16 matmul-operand dtype
        x = x_ref[...]                          # f32 activations, VMEM resident

        # Hoisted ONCE (JAX does not CSE broadcast/iota): time index reused by
        # the zero-padding masks of every layer and both outer taps.
        t_idx = lax.broadcasted_iota(jnp.int32, (NB, T, C), 1)

        for li, d in enumerate(dilations):
            if d < T:
                # Shifted taps with Conv1d zero padding, computed on the whole
                # (NB, T, C) block (roll along time is independent per row).
                x_m = jnp.where(
                    t_idx >= d, pltpu.roll(x, shift=d, axis=1), 0.0
                )
                x_p = jnp.where(
                    t_idx < T - d, pltpu.roll(x, shift=T - d, axis=1), 0.0
                )
                # (NB*T, 3C) bf16 lhs: [x[t-d] | x[t] | x[t+d]] along lanes.
                # Cast per tap BEFORE the concat to halve vreg/VMEM pressure.
                lhs = jnp.concatenate(
                    [x_m.astype(cdt), x.astype(cdt), x_p.astype(cdt)], axis=-1
                ).reshape(NB * T, 3 * C)
                w = w_ref[li]                   # (3C, C) fused-tap weight
            else:
                # Outer taps read only zero padding: center tap only.  Static
                # ref slice -> never loads the unused 2/3 of the weight tile.
                lhs = x.astype(cdt).reshape(NB * T, C)
                w = w_ref[li, C:2 * C, :]       # (C, C) center tap

            acc = jnp.dot(lhs, w, preferred_element_type=jnp.float32)
            acc = acc + b_ref[li]               # (1, C) broadcasts over rows
            x = jnp.maximum(acc, 0.0).reshape(NB, T, C)   # ReLU, back to block

        o_ref[...] = x.astype(o_ref.dtype)      # single lane-dense store

    return kernel


def _fused_tcn_ntc(x_ntc, w_stack, b_stack, dilations, batch_block):
    N, T, C = x_ntc.shape
    L = w_stack.shape[0]
    NB = batch_block
    assert N % NB == 0, "batch must be divisible by batch_block"
    return pl.pallas_call(
        _make_fused_tcn_kernel(dilations, T, C, NB),
        out_shape=jax.ShapeDtypeStruct((N, T, C), x_ntc.dtype),
        grid=(N // NB,),
        in_specs=[
            pl.BlockSpec((NB, T, C), lambda n: (n, 0, 0)),
            # Constant index maps: weight/bias blocks are DMA'd only once.
            pl.BlockSpec((L, 3 * C, C), lambda n: (0, 0, 0)),
            pl.BlockSpec((L, 1, C), lambda n: (0, 0, 0)),
        ],
        out_specs=pl.BlockSpec((NB, T, C), lambda n: (n, 0, 0)),
        compiler_params=pltpu.CompilerParams(
            dimension_semantics=("parallel",)
        ),
    )(x_ntc, w_stack, b_stack)


def pick_batch_block(N):
    """NB=N (one grid step) on 1-TC chips; NB=N//2 (two steps) on megacore."""
    try:
        kind = jax.devices()[0].device_kind.lower()
    except Exception:  # pragma: no cover - defensive
        kind = ""
    two_tensorcores = any(tag in kind for tag in ("v7", "tpu7", "v4", "v5p"))
    if two_tensorcores and N >= 2 and N % 2 == 0:
        return N // 2
    return N


@functools.partial(jax.jit, static_argnames=("dilations", "batch_block"))
def tcn_forward_ntc(x_ntc, w_stack, b_stack, dilations, batch_block=None):
    """TCN forward on NTC-layout input (no wrapper transposes)."""
    if batch_block is None:
        batch_block = pick_batch_block(x_ntc.shape[0])
    return _fused_tcn_ntc(x_ntc, w_stack, b_stack, dilations, batch_block)


@functools.partial(jax.jit, static_argnames=("dilations", "batch_block"))
def tcn_forward(x_ncw, w_stack, b_stack, dilations, batch_block=None):
    """TCN forward.  x_ncw: (N, C, T) float32 (PyTorch NCW convention).

    Prefer tcn_forward_ntc if the surrounding model already keeps activations
    in NTC layout (avoids the two wrapper transposes / HBM round trips).
    """
    if batch_block is None:
        batch_block = pick_batch_block(x_ncw.shape[0])
    x = jnp.transpose(x_ncw, (0, 2, 1))            # -> (N, T, C)
    y = _fused_tcn_ntc(x, w_stack, b_stack, dilations, batch_block)
    return jnp.transpose(y, (0, 2, 1))             # back to (N, C, T)


def init_tcn_params(key, num_layers: int, num_channels: int):
    """Deterministic PyTorch-style init: U(-k, k), k = 1/sqrt(fan_in)."""
    params = []
    k = 1.0 / jnp.sqrt(jnp.float32(num_channels * 3))
    for _ in range(num_layers):
        key, kw, kb = jax.random.split(key, 3)
        # PyTorch Conv1d weight: (C_out, C_in, 3)
        w = jax.random.uniform(
            kw, (num_channels, num_channels, 3), jnp.float32, -k, k
        )
        b = jax.random.uniform(kb, (num_channels,), jnp.float32, -k, k)
        params.append((w, b))
    return params


def prepare_tcn_params(params, compute_dtype=jnp.bfloat16):
    """One-time prep: weights -> (L, 3C, C) bf16, biases -> (L, 1, C) f32.

    Tap order matches lhs = [x[t-d] | x[t] | x[t+d]]:
      rows [0:C]   = W_{k=0} (left tap), [C:2C] = W_{k=1} (center),
      rows [2C:3C] = W_{k=2} (right tap), each transposed so that x @ W works.
    """
    ws, bs = [], []
    for w, b in params:
        w_taps = jnp.transpose(w, (2, 1, 0))             # (3, C_in, C_out)
        ws.append(w_taps.reshape(-1, w_taps.shape[-1]))  # (3C, C)
        bs.append(b.reshape(1, -1))
    return jnp.stack(ws).astype(compute_dtype), jnp.stack(bs)


def tcn_reference(x_ncw, params):
    """Pure-JAX f32 reference using lax.conv_general_dilated (NCW)."""
    x = x_ncw
    for i, (w, b) in enumerate(params):
        d = 2 ** i
        y = lax.conv_general_dilated(
            x,
            w,
            window_strides=(1,),
            padding=[(d, d)],
            rhs_dilation=(d,),
            dimension_numbers=("NCH", "OIH", "NCH"),
        )
        x = jnp.maximum(y + b[None, :, None], 0.0)
    return x


if __name__ == "__main__":
    # Small shapes consistent with the module (TCN applied to NCW input):
    # batch=8, channels=128, time=32, 6 layers (dilations 1..32; the last
    # layer's dilation >= T exercises the center-tap-only branch).
    N, C, T = 8, 128, 32
    NUM_LAYERS = 6
    dilations = tuple(2 ** i for i in range(NUM_LAYERS))

    key = jax.random.PRNGKey(0)
    key, kx = jax.random.split(key)
    x = jax.random.normal(kx, (N, C, T), jnp.float32)

    params = init_tcn_params(key, NUM_LAYERS, C)
    w_stack, b_stack = prepare_tcn_params(params)          # bf16 weights

    # v5e/v6e: NB=N -> one grid step, M = N*T = 256 matmul rows.
    # v7x/megacore: NB=N//2 -> two "parallel" steps, M = 128 rows per core.
    nb = pick_batch_block(N)

    out = tcn_forward(x, w_stack, b_stack, dilations, batch_block=nb)
    out = jax.block_until_ready(out)

    ref = jax.block_until_ready(tcn_reference(x, params))
    assert out.shape == (N, C, T)
    # bf16 matmul operands vs f32 reference: check error relative to the
    # reference's dynamic range (structural bugs would show ~100% error).
    max_err = float(jnp.max(jnp.abs(out - ref)))
    scale = float(jnp.max(jnp.abs(ref))) + 1e-6
    assert max_err <= 5e-2 * scale + 1e-5, f"mismatch vs reference: {max_err}"

    print("KERNEL_OK")
</pallas_src>

<mosaic_0001>
module attributes {stable_mosaic.version = 11 : i64} {
  func.func @kernel(%arg0: i32, %arg1: memref<8x32x128xf32, #tpu.memory_space<vmem>>, %arg2: memref<6x384x128xbf16, #tpu.memory_space<vmem>>, %arg3: memref<6x1x128xf32, #tpu.memory_space<vmem>>, %arg4: memref<8x32x128xf32, #tpu.memory_space<vmem>>) attributes {dimension_semantics = [#tpu.dimension_semantics<parallel>], iteration_bounds = array<i64: 1>, scalar_prefetch = 0 : i64, scratch_operands = 0 : i64, tpu.core_type = #tpu.core_type<tc>, window_params = [{transform_indices = @transform_0, window_bounds = array<i64: 8, 32, 128>}, {pipeline_mode = #tpu.pipeline_mode<synchronous>, transform_indices = @transform_1, window_bounds = array<i64: 6, 384, 128>}, {pipeline_mode = #tpu.pipeline_mode<synchronous>, transform_indices = @transform_2, window_bounds = array<i64: 6, 1, 128>}, {transform_indices = @transform_3, window_bounds = array<i64: 8, 32, 128>}]} {
    %c0 = arith.constant 0 : index
    %c0_0 = arith.constant 0 : index
    %c0_1 = arith.constant 0 : index
    %0 = vector.load %arg1[%c0, %c0_0, %c0_1] : memref<8x32x128xf32, #tpu.memory_space<vmem>>, vector<8x32x128xf32>
    %1 = tpu.iota {dimensions = array<i32: 1>} : vector<8x32x128xi32>
    %c1_i32 = arith.constant 1 : i32
    %2 = vector.broadcast %c1_i32 : i32 to vector<8x32x128xi32>
    %3 = arith.cmpi sge, %1, %2 : vector<8x32x128xi32>
    %c1_i32_2 = arith.constant 1 : i32
    %4 = tpu.dynamic_rotate %0 by %c1_i32_2 dim 1 : vector<8x32x128xf32>, i32 -> vector<8x32x128xf32>
    %cst = arith.constant 0.000000e+00 : f32
    %5 = vector.broadcast %cst : f32 to vector<8x32x128xf32>
    %6 = arith.select %3, %4, %5 : vector<8x32x128xi1>, vector<8x32x128xf32>
    %c31_i32 = arith.constant 31 : i32
    %7 = vector.broadcast %c31_i32 : i32 to vector<8x32x128xi32>
    %8 = arith.cmpi slt, %1, %7 : vector<8x32x128xi32>
    %c31_i32_3 = arith.constant 31 : i32
    %9 = tpu.dynamic_rotate %0 by %c31_i32_3 dim 1 : vector<8x32x128xf32>, i32 -> vector<8x32x128xf32>
    %cst_4 = arith.constant 0.000000e+00 : f32
    %10 = vector.broadcast %cst_4 : f32 to vector<8x32x128xf32>
    %11 = arith.select %8, %9, %10 : vector<8x32x128xi1>, vector<8x32x128xf32>
    %12 = arith.truncf %6 : vector<8x32x128xf32> to vector<8x32x128xbf16>
    %13 = arith.truncf %0 : vector<8x32x128xf32> to vector<8x32x128xbf16>
    %14 = arith.truncf %11 : vector<8x32x128xf32> to vector<8x32x128xbf16>
    %15 = tpu.concatenate %12, %13, %14 in 2 : vector<8x32x128xbf16>, vector<8x32x128xbf16>, vector<8x32x128xbf16> -> vector<8x32x384xbf16>
    %16 = vector.shape_cast %15 : vector<8x32x384xbf16> to vector<256x384xbf16>
    %c0_5 = arith.constant 0 : index
    %c0_6 = arith.constant 0 : index
    %c0_7 = arith.constant 0 : index
    %17 = vector.load %arg2[%c0_5, %c0_6, %c0_7] : memref<6x384x128xbf16, #tpu.memory_space<vmem>>, vector<1x384x128xbf16>
    %18 = vector.shape_cast %17 : vector<1x384x128xbf16> to vector<384x128xbf16>
    %cst_8 = arith.constant dense<0.000000e+00> : vector<256x128xf32>
    %19 = tpu.matmul %16, %18, %cst_8 {dimension_numbers = #tpu.dot_dimension_numbers<[1], [0], [0], [1], [0, 0, 1, 1], [], []>} : vector<256x384xbf16>, vector<384x128xbf16>, vector<256x128xf32> -> vector<256x128xf32>
    %c0_9 = arith.constant 0 : index
    %c0_10 = arith.constant 0 : index
    %c0_11 = arith.constant 0 : index
    %20 = vector.load %arg3[%c0_9, %c0_10, %c0_11] : memref<6x1x128xf32, #tpu.memory_space<vmem>>, vector<1x1x128xf32>
    %21 = vector.shape_cast %20 : vector<1x1x128xf32> to vector<1x128xf32>
    %22 = vector.broadcast %21 : vector<1x128xf32> to vector<256x128xf32>
    %23 = arith.addf %19, %22 : vector<256x128xf32>
    %cst_12 = arith.constant 0.000000e+00 : f32
    %24 = vector.broadcast %cst_12 : f32 to vector<256x128xf32>
    %25 = arith.maximumf %23, %24 : vector<256x128xf32>
    %26 = vector.shape_cast %25 : vector<256x128xf32> to vector<8x32x128xf32>
    %c2_i32 = arith.constant 2 : i32
    %27 = vector.broadcast %c2_i32 : i32 to vector<8x32x128xi32>
    %28 = arith.cmpi sge, %1, %27 : vector<8x32x128xi32>
    %c2_i32_13 = arith.constant 2 : i32
    %29 = tpu.dynamic_rotate %26 by %c2_i32_13 dim 1 : vector<8x32x128xf32>, i32 -> vector<8x32x128xf32>
    %cst_14 = arith.constant 0.000000e+00 : f32
    %30 = vector.broadcast %cst_14 : f32 to vector<8x32x128xf32>
    %31 = arith.select %28, %29, %30 : vector<8x32x128xi1>, vector<8x32x128xf32>
    %c30_i32 = arith.constant 30 : i32
    %32 = vector.broadcast %c30_i32 : i32 to vector<8x32x128xi32>
    %33 = arith.cmpi slt, %1, %32 : vector<8x32x128xi32>
    %c30_i32_15 = arith.constant 30 : i32
    %34 = tpu.dynamic_rotate %26 by %c30_i32_15 dim 1 : vector<8x32x128xf32>, i32 -> vector<8x32x128xf32>
    %cst_16 = arith.constant 0.000000e+00 : f32
    %35 = vector.broadcast %cst_16 : f32 to vector<8x32x128xf32>
    %36 = arith.select %33, %34, %35 : vector<8x32x128xi1>, vector<8x32x128xf32>
    %37 = arith.truncf %31 : vector<8x32x128xf32> to vector<8x32x128xbf16>
    %38 = arith.truncf %26 : vector<8x32x128xf32> to vector<8x32x128xbf16>
    %39 = arith.truncf %36 : vector<8x32x128xf32> to vector<8x32x128xbf16>
    %40 = tpu.concatenate %37, %38, %39 in 2 : vector<8x32x128xbf16>, vector<8x32x128xbf16>, vector<8x32x128xbf16> -> vector<8x32x384xbf16>
    %41 = vector.shape_cast %40 : vector<8x32x384xbf16> to vector<256x384xbf16>
    %c1 = arith.constant 1 : index
    %c0_17 = arith.constant 0 : index
    %c0_18 = arith.constant 0 : index
    %42 = vector.load %arg2[%c1, %c0_17, %c0_18] : memref<6x384x128xbf16, #tpu.memory_space<vmem>>, vector<1x384x128xbf16>
    %43 = vector.shape_cast %42 : vector<1x384x128xbf16> to vector<384x128xbf16>
    %cst_19 = arith.constant dense<0.000000e+00> : vector<256x128xf32>
    %44 = tpu.matmul %41, %43, %cst_19 {dimension_numbers = #tpu.dot_dimension_numbers<[1], [0], [0], [1], [0, 0, 1, 1], [], []>} : vector<256x384xbf16>, vector<384x128xbf16>, vector<256x128xf32> -> vector<256x128xf32>
    %c1_20 = arith.constant 1 : index
    %c0_21 = arith.constant 0 : index
    %c0_22 = arith.constant 0 : index
    %45 = vector.load %arg3[%c1_20, %c0_21, %c0_22] : memref<6x1x128xf32, #tpu.memory_space<vmem>>, vector<1x1x128xf32>
    %46 = vector.shape_cast %45 : vector<1x1x128xf32> to vector<1x128xf32>
    %47 = vector.broadcast %46 : vector<1x128xf32> to vector<256x128xf32>
    %48 = arith.addf %44, %47 : vector<256x128xf32>
    %cst_23 = arith.constant 0.000000e+00 : f32
    %49 = vector.broadcast %cst_23 : f32 to vector<256x128xf32>
    %50 = arith.maximumf %48, %49 : vector<256x128xf32>
    %51 = vector.shape_cast %50 : vector<256x128xf32> to vector<8x32x128xf32>
    %c4_i32 = arith.constant 4 : i32
    %52 = vector.broadcast %c4_i32 : i32 to vector<8x32x128xi32>
    %53 = arith.cmpi sge, %1, %52 : vector<8x32x128xi32>
    %c4_i32_24 = arith.constant 4 : i32
    %54 = tpu.dynamic_rotate %51 by %c4_i32_24 dim 1 : vector<8x32x128xf32>, i32 -> vector<8x32x128xf32>
    %cst_25 = arith.constant 0.000000e+00 : f32
    %55 = vector.broadcast %cst_25 : f32 to vector<8x32x128xf32>
    %56 = arith.select %53, %54, %55 : vector<8x32x128xi1>, vector<8x32x128xf32>
    %c28_i32 = arith.constant 28 : i32
    %57 = vector.broadcast %c28_i32 : i32 to vector<8x32x128xi32>
    %58 = arith.cmpi slt, %1, %57 : vector<8x32x128xi32>
    %c28_i32_26 = arith.constant 28 : i32
    %59 = tpu.dynamic_rotate %51 by %c28_i32_26 dim 1 : vector<8x32x128xf32>, i32 -> vector<8x32x128xf32>
    %cst_27 = arith.constant 0.000000e+00 : f32
    %60 = vector.broadcast %cst_27 : f32 to vector<8x32x128xf32>
    %61 = arith.select %58, %59, %60 : vector<8x32x128xi1>, vector<8x32x128xf32>
    %62 = arith.truncf %56 : vector<8x32x128xf32> to vector<8x32x128xbf16>
    %63 = arith.truncf %51 : vector<8x32x128xf32> to vector<8x32x128xbf16>
    %64 = arith.truncf %61 : vector<8x32x128xf32> to vector<8x32x128xbf16>
    %65 = tpu.concatenate %62, %63, %64 in 2 : vector<8x32x128xbf16>, vector<8x32x128xbf16>, vector<8x32x128xbf16> -> vector<8x32x384xbf16>
    %66 = vector.shape_cast %65 : vector<8x32x384xbf16> to vector<256x384xbf16>
    %c2 = arith.constant 2 : index
    %c0_28 = arith.constant 0 : index
    %c0_29 = arith.constant 0 : index
    %67 = vector.load %arg2[%c2, %c0_28, %c0_29] : memref<6x384x128xbf16, #tpu.memory_space<vmem>>, vector<1x384x128xbf16>
    %68 = vector.shape_cast %67 : vector<1x384x128xbf16> to vector<384x128xbf16>
    %cst_30 = arith.constant dense<0.000000e+00> : vector<256x128xf32>
    %69 = tpu.matmul %66, %68, %cst_30 {dimension_numbers = #tpu.dot_dimension_numbers<[1], [0], [0], [1], [0, 0, 1, 1], [], []>} : vector<256x384xbf16>, vector<384x128xbf16>, vector<256x128xf32> -> vector<256x128xf32>
    %c2_31 = arith.constant 2 : index
    %c0_32 = arith.constant 0 : index
    %c0_33 = arith.constant 0 : index
    %70 = vector.load %arg3[%c2_31, %c0_32, %c0_33] : memref<6x1x128xf32, #tpu.memory_space<vmem>>, vector<1x1x128xf32>
    %71 = vector.shape_cast %70 : vector<1x1x128xf32> to vector<1x128xf32>
    %72 = vector.broadcast %71 : vector<1x128xf32> to vector<256x128xf32>
    %73 = arith.addf %69, %72 : vector<256x128xf32>
    %cst_34 = arith.constant 0.000000e+00 : f32
    %74 = vector.broadcast %cst_34 : f32 to vector<256x128xf32>
    %75 = arith.maximumf %73, %74 : vector<256x128xf32>
    %76 = vector.shape_cast %75 : vector<256x128xf32> to vector<8x32x128xf32>
    %c8_i32 = arith.constant 8 : i32
    %77 = vector.broadcast %c8_i32 : i32 to vector<8x32x128xi32>
    %78 = arith.cmpi sge, %1, %77 : vector<8x32x128xi32>
    %c8_i32_35 = arith.constant 8 : i32
    %79 = tpu.dynamic_rotate %76 by %c8_i32_35 dim 1 : vector<8x32x128xf32>, i32 -> vector<8x32x128xf32>
    %cst_36 = arith.constant 0.000000e+00 : f32
    %80 = vector.broadcast %cst_36 : f32 to vector<8x32x128xf32>
    %81 = arith.select %78, %79, %80 : vector<8x32x128xi1>, vector<8x32x128xf32>
    %c24_i32 = arith.constant 24 : i32
    %82 = vector.broadcast %c24_i32 : i32 to vector<8x32x128xi32>
    %83 = arith.cmpi slt, %1, %82 : vector<8x32x128xi32>
    %c24_i32_37 = arith.constant 24 : i32
    %84 = tpu.dynamic_rotate %76 by %c24_i32_37 dim 1 : vector<8x32x128xf32>, i32 -> vector<8x32x128xf32>
    %cst_38 = arith.constant 0.000000e+00 : f32
    %85 = vector.broadcast %cst_38 : f32 to vector<8x32x128xf32>
    %86 = arith.select %83, %84, %85 : vector<8x32x128xi1>, vector<8x32x128xf32>
    %87 = arith.truncf %81 : vector<8x32x128xf32> to vector<8x32x128xbf16>
    %88 = arith.truncf %76 : vector<8x32x128xf32> to vector<8x32x128xbf16>
    %89 = arith.truncf %86 : vector<8x32x128xf32> to vector<8x32x128xbf16>
    %90 = tpu.concatenate %87, %88, %89 in 2 : vector<8x32x128xbf16>, vector<8x32x128xbf16>, vector<8x32x128xbf16> -> vector<8x32x384xbf16>
    %91 = vector.shape_cast %90 : vector<8x32x384xbf16> to vector<256x384xbf16>
    %c3 = arith.constant 3 : index
    %c0_39 = arith.constant 0 : index
    %c0_40 = arith.constant 0 : index
    %92 = vector.load %arg2[%c3, %c0_39, %c0_40] : memref<6x384x128xbf16, #tpu.memory_space<vmem>>, vector<1x384x128xbf16>
    %93 = vector.shape_cast %92 : vector<1x384x128xbf16> to vector<384x128xbf16>
    %cst_41 = arith.constant dense<0.000000e+00> : vector<256x128xf32>
    %94 = tpu.matmul %91, %93, %cst_41 {dimension_numbers = #tpu.dot_dimension_numbers<[1], [0], [0], [1], [0, 0, 1, 1], [], []>} : vector<256x384xbf16>, vector<384x128xbf16>, vector<256x128xf32> -> vector<256x128xf32>
    %c3_42 = arith.constant 3 : index
    %c0_43 = arith.constant 0 : index
    %c0_44 = arith.constant 0 : index
    %95 = vector.load %arg3[%c3_42, %c0_43, %c0_44] : memref<6x1x128xf32, #tpu.memory_space<vmem>>, vector<1x1x128xf32>
    %96 = vector.shape_cast %95 : vector<1x1x128xf32> to vector<1x128xf32>
    %97 = vector.broadcast %96 : vector<1x128xf32> to vector<256x128xf32>
    %98 = arith.addf %94, %97 : vector<256x128xf32>
    %cst_45 = arith.constant 0.000000e+00 : f32
    %99 = vector.broadcast %cst_45 : f32 to vector<256x128xf32>
    %100 = arith.maximumf %98, %99 : vector<256x128xf32>
    %101 = vector.shape_cast %100 : vector<256x128xf32> to vector<8x32x128xf32>
    %c16_i32 = arith.constant 16 : i32
    %102 = vector.broadcast %c16_i32 : i32 to vector<8x32x128xi32>
    %103 = arith.cmpi sge, %1, %102 : vector<8x32x128xi32>
    %c16_i32_46 = arith.constant 16 : i32
    %104 = tpu.dynamic_rotate %101 by %c16_i32_46 dim 1 : vector<8x32x128xf32>, i32 -> vector<8x32x128xf32>
    %cst_47 = arith.constant 0.000000e+00 : f32
    %105 = vector.broadcast %cst_47 : f32 to vector<8x32x128xf32>
    %106 = arith.select %103, %104, %105 : vector<8x32x128xi1>, vector<8x32x128xf32>
    %c16_i32_48 = arith.constant 16 : i32
    %107 = vector.broadcast %c16_i32_48 : i32 to vector<8x32x128xi32>
    %108 = arith.cmpi slt, %1, %107 : vector<8x32x128xi32>
    %c16_i32_49 = arith.constant 16 : i32
    %109 = tpu.dynamic_rotate %101 by %c16_i32_49 dim 1 : vector<8x32x128xf32>, i32 -> vector<8x32x128xf32>
    %cst_50 = arith.constant 0.000000e+00 : f32
    %110 = vector.broadcast %cst_50 : f32 to vector<8x32x128xf32>
    %111 = arith.select %108, %109, %110 : vector<8x32x128xi1>, vector<8x32x128xf32>
    %112 = arith.truncf %106 : vector<8x32x128xf32> to vector<8x32x128xbf16>
    %113 = arith.truncf %101 : vector<8x32x128xf32> to vector<8x32x128xbf16>
    %114 = arith.truncf %111 : vector<8x32x128xf32> to vector<8x32x128xbf16>
    %115 = tpu.concatenate %112, %113, %114 in 2 : vector<8x32x128xbf16>, vector<8x32x128xbf16>, vector<8x32x128xbf16> -> vector<8x32x384xbf16>
    %116 = vector.shape_cast %115 : vector<8x32x384xbf16> to vector<256x384xbf16>
    %c4 = arith.constant 4 : index
    %c0_51 = arith.constant 0 : index
    %c0_52 = arith.constant 0 : index
    %117 = vector.load %arg2[%c4, %c0_51, %c0_52] : memref<6x384x128xbf16, #tpu.memory_space<vmem>>, vector<1x384x128xbf16>
    %118 = vector.shape_cast %117 : vector<1x384x128xbf16> to vector<384x128xbf16>
    %cst_53 = arith.constant dense<0.000000e+00> : vector<256x128xf32>
    %119 = tpu.matmul %116, %118, %cst_53 {dimension_numbers = #tpu.dot_dimension_numbers<[1], [0], [0], [1], [0, 0, 1, 1], [], []>} : vector<256x384xbf16>, vector<384x128xbf16>, vector<256x128xf32> -> vector<256x128xf32>
    %c4_54 = arith.constant 4 : index
    %c0_55 = arith.constant 0 : index
    %c0_56 = arith.constant 0 : index
    %120 = vector.load %arg3[%c4_54, %c0_55, %c0_56] : memref<6x1x128xf32, #tpu.memory_space<vmem>>, vector<1x1x128xf32>
    %121 = vector.shape_cast %120 : vector<1x1x128xf32> to vector<1x128xf32>
    %122 = vector.broadcast %121 : vector<1x128xf32> to vector<256x128xf32>
    %123 = arith.addf %119, %122 : vector<256x128xf32>
    %cst_57 = arith.constant 0.000000e+00 : f32
    %124 = vector.broadcast %cst_57 : f32 to vector<256x128xf32>
    %125 = arith.maximumf %123, %124 : vector<256x128xf32>
    %126 = vector.shape_cast %125 : vector<256x128xf32> to vector<8x32x128xf32>
    %127 = arith.truncf %126 : vector<8x32x128xf32> to vector<8x32x128xbf16>
    %128 = vector.shape_cast %127 : vector<8x32x128xbf16> to vector<256x128xbf16>
    %c5 = arith.constant 5 : index
    %c128 = arith.constant 128 : index
    %c0_58 = arith.constant 0 : index
    %129 = vector.load %arg2[%c5, %c128, %c0_58] : memref<6x384x128xbf16, #tpu.memory_space<vmem>>, vector<1x128x128xbf16>
    %130 = vector.shape_cast %129 : vector<1x128x128xbf16> to vector<128x128xbf16>
    %cst_59 = arith.constant dense<0.000000e+00> : vector<256x128xf32>
    %131 = tpu.matmul %128, %130, %cst_59 {dimension_numbers = #tpu.dot_dimension_numbers<[1], [0], [0], [1], [0, 0, 1, 1], [], []>} : vector<256x128xbf16>, vector<128x128xbf16>, vector<256x128xf32> -> vector<256x128xf32>
    %c5_60 = arith.constant 5 : index
    %c0_61 = arith.constant 0 : index
    %c0_62 = arith.constant 0 : index
    %132 = vector.load %arg3[%c5_60, %c0_61, %c0_62] : memref<6x1x128xf32, #tpu.memory_space<vmem>>, vector<1x1x128xf32>
    %133 = vector.shape_cast %132 : vector<1x1x128xf32> to vector<1x128xf32>
    %134 = vector.broadcast %133 : vector<1x128xf32> to vector<256x128xf32>
    %135 = arith.addf %131, %134 : vector<256x128xf32>
    %cst_63 = arith.constant 0.000000e+00 : f32
    %136 = vector.broadcast %cst_63 : f32 to vector<256x128xf32>
    %137 = arith.maximumf %135, %136 : vector<256x128xf32>
    %138 = vector.shape_cast %137 : vector<256x128xf32> to vector<8x32x128xf32>
    %c0_64 = arith.constant 0 : index
    %c0_65 = arith.constant 0 : index
    %c0_66 = arith.constant 0 : index
    %139 = vector.load %arg4[%c0_64, %c0_65, %c0_66] : memref<8x32x128xf32, #tpu.memory_space<vmem>>, vector<8x32x128xf32>
    tpu.vector_store %arg4[%c0_64, %c0_65, %c0_66], %138 {strides = array<i32>} : memref<8x32x128xf32, #tpu.memory_space<vmem>>, vector<8x32x128xf32>,
    return
  }
  func.func @transform_0(%arg0: i32) -> (i32, i32, i32) {
    %c0_i32 = arith.constant 0 : i32
    %c0_i32_0 = arith.constant 0 : i32
    %c0_i32_1 = arith.constant 0 : i32
    return %arg0, %c0_i32, %c0_i32_0 : i32, i32, i32
  }
  func.func @transform_1(%arg0: i32) -> (i32, i32, i32) {
    %c0_i32 = arith.constant 0 : i32
    %c0_i32_0 = arith.constant 0 : i32
    %c0_i32_1 = arith.constant 0 : i32
    %c0_i32_2 = arith.constant 0 : i32
    return %c0_i32, %c0_i32_0, %c0_i32_1 : i32, i32, i32
  }
  func.func @transform_2(%arg0: i32) -> (i32, i32, i32) {
    %c0_i32 = arith.constant 0 : i32
    %c0_i32_0 = arith.constant 0 : i32
    %c0_i32_1 = arith.constant 0 : i32
    %c0_i32_2 = arith.constant 0 : i32
    return %c0_i32, %c0_i32_0, %c0_i32_1 : i32, i32, i32
  }
  func.func @transform_3(%arg0: i32) -> (i32, i32, i32) {
    %c0_i32 = arith.constant 0 : i32
    %c0_i32_0 = arith.constant 0 : i32
    %c0_i32_1 = arith.constant 0 : i32
    return %arg0, %c0_i32, %c0_i32_0 : i32, i32, i32
  }
}

</mosaic_0001>

<llo_original>
// kernel: tcn_forward.1
$region0: #{tcn_forward.1}
  #allocation0 [shape = 'u32[]', space=smem, size = 0x4, offset = 0x4, fixed_abs, tag = 'smem constant byte address 0x4 - core index']
  #allocation1 [shape = 'u32[144,128]{1,0:T(1,128)}', space=vmem, size = 0x12000, scoped, tag = 'internal scratch']
  %s0 = inlined_call_operand.hbm [shape: f32[8,32,128], index: 0, kind: input, shape index: {}]
  %s1 = inlined_call_operand.hbm [shape: bf16[6,384,128], index: 1, kind: input, shape index: {}]
  %s2 = inlined_call_operand.vmem [shape: f32[6,1,128], index: 2, kind: input, shape index: {}]
  %s3 = inlined_call_operand.hbm [shape: f32[8,32,128], index: 3, kind: output, shape index: {}]
  %s4 = sld [smem:[#allocation0]]
  $region30: #{tcn_forward.1} parent=0
    _
  %s6 = ssub.s32 1, %s4
  %s7 = scalar_select 0, %s6, %s4
  $region1: #{tcn_forward.1} parent=0
    #allocation2 [shape = 'u8[131072]{0}', space=vmem, size = 0x20000, scoped, tag = 'input window, operand 0, single buffered']
    #allocation3 [shape = 's32[1]{0}', space=sflag, size = 0x4, scoped, tag = 'scoped memory for tcn_forward.1']
    #allocation4 [shape = 's32[1]{0}', space=sflag, size = 0x4, scoped, tag = 'scoped memory for tcn_forward.1']
    #allocation5 [shape = 'u8[589824]{0}', space=vmem, size = 0x90000, scoped, tag = 'input window, operand 1, single buffered']
    #allocation6 [shape = 's32[1]{0}', space=sflag, size = 0x4, scoped, tag = 'scoped memory for tcn_forward.1']
    #allocation7 [shape = 'u8[131072]{0}', space=vmem, size = 0x20000, scoped, tag = 'output window, operand 0, single buffered']
    %8 = vsyncpa [#allocation3], 0
    %9 = vsyncpa [#allocation6], 0
    %10 = vsyncpa [#allocation4], 0
    // Predicated region
    $region2: #{tcn_forward.1} parent=1 // pred_check
      _
    $region3: #{tcn_forward.1} parent=1 // pred_check_branch
      %12 = sbr.rel (0) target = $region5
    $region4: #{tcn_forward.1} parent=1 // pred_region
      %s14 = ssub.s32 4096, 4096
      %15 = vsyncadd [#allocation3], %s14
      %s16 = sshll.u32 [#allocation2], 4
      %s17 = int_to_ptr.vmem [resolvable:$true] %s16
      %22 = dma.hbm_to_vmem [thread:$0]  %s0, 4096, %s17, [#allocation3], 128, 128, 8
    $region5: #{tcn_forward.1} parent=1 // pred_fallthru
      _
    // Predicated region
    $region6: #{tcn_forward.1} parent=1 // pred_check
      _
    $region7: #{tcn_forward.1} parent=1 // pred_check_branch
      %24 = sbr.rel (0) target = $region9
    $region8: #{tcn_forward.1} parent=1 // pred_region
      %s26 = ssub.s32 18432, 18432
      %27 = vsyncadd [#allocation6], %s26
      %s28 = sshll.u32 [#allocation5], 4
      %s29 = int_to_ptr.vmem [resolvable:$true] %s28
      %34 = dma.hbm_to_vmem [thread:$0]  %s1, 18432, %s29, [#allocation6], 64, 64, 4
    $region9: #{tcn_forward.1} parent=1 // pred_fallthru
      _
    // Predicated region
    $region10: #{tcn_forward.1} parent=1 // pred_check
      _
    $region11: #{tcn_forward.1} parent=1 // pred_check_branch
      %36 = sbr.rel (0) target = $region13
    $region12: #{tcn_forward.1} parent=1 // pred_region
      _
    $region13: #{tcn_forward.1} parent=1 // pred_fallthru
      _
    // Predicated region
    $region14: #{tcn_forward.1} parent=1 // pred_check
      _
    $region15: #{tcn_forward.1} parent=1 // pred_check_branch
      %38 = sbr.rel (0) target = $region17
    $region16: #{tcn_forward.1} parent=1 // pred_region
      %39 = dma.done [#allocation3], 4096
    $region17: #{tcn_forward.1} parent=1 // pred_fallthru
      _
    // Predicated region
    $region18: #{tcn_forward.1} parent=1 // pred_check
      _
    $region19: #{tcn_forward.1} parent=1 // pred_check_branch
      %41 = sbr.rel (0) target = $region21
    $region20: #{tcn_forward.1} parent=1 // pred_region
      %42 = dma.done [#allocation6], 18432
    $region21: #{tcn_forward.1} parent=1 // pred_fallthru
      _
    %v44 = vld [vmem:[#allocation2] sm:$0xff]
    %v45 = vld [vmem:[#allocation2 + $0x8] sm:$0xff]
    %v46 = vld [vmem:[#allocation2 + $0x10] sm:$0xff]
    %v47 = vld [vmem:[#allocation2 + $0x18] sm:$0xff]
    %v48 = vld [vmem:[#allocation2 + $0x20] sm:$0xff]
    %v49 = vld [vmem:[#allocation2 + $0x28] sm:$0xff]
    %v50 = vld [vmem:[#allocation2 + $0x30] sm:$0xff]
    %v51 = vld [vmem:[#allocation2 + $0x38] sm:$0xff]
    %v52 = vld [vmem:[#allocation2 + $0x40] sm:$0xff]
    %v53 = vld [vmem:[#allocation2 + $0x48] sm:$0xff]
    %v54 = vld [vmem:[#allocation2 + $0x50] sm:$0xff]
    %v55 = vld [vmem:[#allocation2 + $0x58] sm:$0xff]
    %v56 = vld [vmem:[#allocation2 + $0x60] sm:$0xff]
    %v57 = vld [vmem:[#allocation2 + $0x68] sm:$0xff]
    %v58 = vld [vmem:[#allocation2 + $0x70] sm:$0xff]
    %v59 = vld [vmem:[#allocation2 + $0x78] sm:$0xff]
    %v60 = vld [vmem:[#allocation2 + $0x80] sm:$0xff]
    %v61 = vld [vmem:[#allocation2 + $0x88] sm:$0xff]
    %v62 = vld [vmem:[#allocation2 + $0x90] sm:$0xff]
    %v63 = vld [vmem:[#allocation2 + $0x98] sm:$0xff]
    %v64 = vld [vmem:[#allocation2 + $0xa0] sm:$0xff]
    %v65 = vld [vmem:[#allocation2 + $0xa8] sm:$0xff]
    %v66 = vld [vmem:[#allocation2 + $0xb0] sm:$0xff]
    %v67 = vld [vmem:[#allocation2 + $0xb8] sm:$0xff]
    %v68 = vld [vmem:[#allocation2 + $0xc0] sm:$0xff]
    %v69 = vld [vmem:[#allocation2 + $0xc8] sm:$0xff]
    %v70 = vld [vmem:[#allocation2 + $0xd0] sm:$0xff]
    %v71 = vld [vmem:[#allocation2 + $0xd8] sm:$0xff]
    %v72 = vld [vmem:[#allocation2 + $0xe0] sm:$0xff]
    %v73 = vld [vmem:[#allocation2 + $0xe8] sm:$0xff]
    %v74 = vld [vmem:[#allocation2 + $0xf0] sm:$0xff]
    %v75 = vld [vmem:[#allocation2 + $0xf8] sm:$0xff]
    %v76 = vlaneseq
    %v77 = vshrl.u32 %v76, 7
    %v78 = vadd.s32 %v77, 8
    %v79 = vadd.s32 %v77, 16
    %v80 = vadd.s32 %v77, 24
    %vm81 = vcmp.ge.s32.totalorder %v77, 1
    %vm82 = vcmp.ge.s32.totalorder %v78, 1
    %vm83 = vcmp.ge.s32.totalorder %v79, 1
    %vm84 = vcmp.ge.s32.totalorder %v80, 1
    %v85 = vrot.slane %v44, 7
    %v86 = vrot.slane %v48, 7
    %v87 = vrot.slane %v52, 7
    %v88 = vrot.slane %v56, 7
    %v89 = vrot.slane %v60, 7
    %v90 = vrot.slane %v64, 7
    %v91 = vrot.slane %v68, 7
    %v92 = vrot.slane %v72, 7
    %v93 = vrot.slane %v45, 7
    %v94 = vrot.slane %v49, 7
    %v95 = vrot.slane %v53, 7
    %v96 = vrot.slane %v57, 7
    %v97 = vrot.slane %v61, 7
    %v98 = vrot.slane %v65, 7
    %v99 = vrot.slane %v69, 7
    %v100 = vrot.slane %v73, 7
    %v101 = vrot.slane %v46, 7
    %v102 = vrot.slane %v50, 7
    %v103 = vrot.slane %v54, 7
    %v104 = vrot.slane %v58, 7
    %v105 = vrot.slane %v62, 7
    %v106 = vrot.slane %v66, 7
    %v107 = vrot.slane %v70, 7
    %v108 = vrot.slane %v74, 7
    %v109 = vrot.slane %v47, 7
    %v110 = vrot.slane %v51, 7
    %v111 = vrot.slane %v55, 7
    %v112 = vrot.slane %v59, 7
    %v113 = vrot.slane %v63, 7
    %v114 = vrot.slane %v67, 7
    %v115 = vrot.slane %v71, 7
    %v116 = vrot.slane %v75, 7
    %vm117 = vcmp.lt.s32.totalorder %v77, 1
    %v118 = vsel %vm117, %v101, %v109
    %v119 = vsel %vm117, %v102, %v110
    %v120 = vsel %vm117, %v103, %v111
    %v121 = vsel %vm117, %v104, %v112
    %v122 = vsel %vm117, %v105, %v113
    %v123 = vsel %vm117, %v106, %v114
    %v124 = vsel %vm117, %v107, %v115
    %v125 = vsel %vm117, %v108, %v116
    %v126 = vsel %vm117, %v93, %v101
    %v127 = vsel %vm117, %v94, %v102
    %v128 = vsel %vm117, %v95, %v103
    %v129 = vsel %vm117, %v96, %v104
    %v130 = vsel %vm117, %v97, %v105
    %v131 = vsel %vm117, %v98, %v106
    %v132 = vsel %vm117, %v99, %v107
    %v133 = vsel %vm117, %v100, %v108
    %v134 = vsel %vm117, %v85, %v93
    %v135 = vsel %vm117, %v86, %v94
    %v136 = vsel %vm117, %v87, %v95
    %v137 = vsel %vm117, %v88, %v96
    %v138 = vsel %vm117, %v89, %v97
    %v139 = vsel %vm117, %v90, %v98
    %v140 = vsel %vm117, %v91, %v99
    %v141 = vsel %vm117, %v92, %v100
    %v142 = vsel %vm117, %v109, %v85
    %v143 = vsel %vm117, %v110, %v86
    %v144 = vsel %vm117, %v111, %v87
    %v145 = vsel %vm117, %v112, %v88
    %v146 = vsel %vm117, %v113, %v89
    %v147 = vsel %vm117, %v114, %v90
    %v148 = vsel %vm117, %v115, %v91
    %v149 = vsel %vm117, %v116, %v92
    %v150 = vsel %vm81, %v142, 0.0
    %v151 = vsel %vm82, %v134, 0.0
    %v152 = vsel %vm83, %v126, 0.0
    %v153 = vsel %vm84, %v118, 0.0
    %v154 = vsel %vm81, %v143, 0.0
    %v155 = vsel %vm82, %v135, 0.0
    %v156 = vsel %vm83, %v127, 0.0
    %v157 = vsel %vm84, %v119, 0.0
    %v158 = vsel %vm81, %v144, 0.0
    %v159 = vsel %vm82, %v136, 0.0
    %v160 = vsel %vm83, %v128, 0.0
    %v161 = vsel %vm84, %v120, 0.0
    %v162 = vsel %vm81, %v145, 0.0
    %v163 = vsel %vm82, %v137, 0.0
    %v164 = vsel %vm83, %v129, 0.0
    %v165 = vsel %vm84, %v121, 0.0
    %v166 = vsel %vm81, %v146, 0.0
    %v167 = vsel %vm82, %v138, 0.0
    %v168 = vsel %vm83, %v130, 0.0
    %v169 = vsel %vm84, %v122, 0.0
    %v170 = vsel %vm81, %v147, 0.0
    %v171 = vsel %vm82, %v139, 0.0
    %v172 = vsel %vm83, %v131, 0.0
    %v173 = vsel %vm84, %v123, 0.0
    %v174 = vsel %vm81, %v148, 0.0
    %v175 = vsel %vm82, %v140, 0.0
    %v176 = vsel %vm83, %v132, 0.0
    %v177 = vsel %vm84, %v124, 0.0
    %v178 = vsel %vm81, %v149, 0.0
    %v179 = vsel %vm82, %v141, 0.0
    %v180 = vsel %vm83, %v133, 0.0
    %v181 = vsel %vm84, %v125, 0.0
    %vm182 = vcmp.lt.s32.totalorder %v77, 31
    %vm183 = vcmp.lt.s32.totalorder %v78, 31
    %vm184 = vcmp.lt.s32.totalorder %v79, 31
    %vm185 = vcmp.lt.s32.totalorder %v80, 31
    %v186 = vrot.slane %v44, 1
    %v187 = vrot.slane %v48, 1
    %v188 = vrot.slane %v52, 1
    %v189 = vrot.slane %v56, 1
    %v190 = vrot.slane %v60, 1
    %v191 = vrot.slane %v64, 1
    %v192 = vrot.slane %v68, 1
    %v193 = vrot.slane %v72, 1
    %v194 = vrot.slane %v45, 1
    %v195 = vrot.slane %v49, 1
    %v196 = vrot.slane %v53, 1
    %v197 = vrot.slane %v57, 1
    %v198 = vrot.slane %v61, 1
    %v199 = vrot.slane %v65, 1
    %v200 = vrot.slane %v69, 1
    %v201 = vrot.slane %v73, 1
    %v202 = vrot.slane %v46, 1
    %v203 = vrot.slane %v50, 1
    %v204 = vrot.slane %v54, 1
    %v205 = vrot.slane %v58, 1
    %v206 = vrot.slane %v62, 1
    %v207 = vrot.slane %v66, 1
    %v208 = vrot.slane %v70, 1
    %v209 = vrot.slane %v74, 1
    %v210 = vrot.slane %v47, 1
    %v211 = vrot.slane %v51, 1
    %v212 = vrot.slane %v55, 1
    %v213 = vrot.slane %v59, 1
    %v214 = vrot.slane %v63, 1
    %v215 = vrot.slane %v67, 1
    %v216 = vrot.slane %v71, 1
    %v217 = vrot.slane %v75, 1
    %vm218 = vcmp.lt.s32.totalorder %v77, 7
    %v219 = vsel %vm218, %v202, %v210
    %v220 = vsel %vm218, %v203, %v211
    %v221 = vsel %vm218, %v204, %v212
    %v222 = vsel %vm218, %v205, %v213
    %v223 = vsel %vm218, %v206, %v214
    %v224 = vsel %vm218, %v207, %v215
    %v225 = vsel %vm218, %v208, %v216
    %v226 = vsel %vm218, %v209, %v217
    %v227 = vsel %vm218, %v194, %v202
    %v228 = vsel %vm218, %v195, %v203
    %v229 = vsel %vm218, %v196, %v204
    %v230 = vsel %vm218, %v197, %v205
    %v231 = vsel %vm218, %v198, %v206
    %v232 = vsel %vm218, %v199, %v207
    %v233 = vsel %vm218, %v200, %v208
    %v234 = vsel %vm218, %v201, %v209
    %v235 = vsel %vm218, %v186, %v194
    %v236 = vsel %vm218, %v187, %v195
    %v237 = vsel %vm218, %v188, %v196
    %v238 = vsel %vm218, %v189, %v197
    %v239 = vsel %vm218, %v190, %v198
    %v240 = vsel %vm218, %v191, %v199
    %v241 = vsel %vm218, %v192, %v200
    %v242 = vsel %vm218, %v193, %v201
    %v243 = vsel %vm218, %v210, %v186
    %v244 = vsel %vm218, %v211, %v187
    %v245 = vsel %vm218, %v212, %v188
    %v246 = vsel %vm218, %v213, %v189
    %v247 = vsel %vm218, %v214, %v190
    %v248 = vsel %vm218, %v215, %v191
    %v249 = vsel %vm218, %v216, %v192
    %v250 = vsel %vm218, %v217, %v193
    %v251 = vsel %vm182, %v235, 0.0
    %v252 = vsel %vm183, %v227, 0.0
    %v253 = vsel %vm184, %v219, 0.0
    %v254 = vsel %vm185, %v243, 0.0
    %v255 = vsel %vm182, %v236, 0.0
    %v256 = vsel %vm183, %v228, 0.0
    %v257 = vsel %vm184, %v220, 0.0
    %v258 = vsel %vm185, %v244, 0.0
    %v259 = vsel %vm182, %v237, 0.0
    %v260 = vsel %vm183, %v229, 0.0
    %v261 = vsel %vm184, %v221, 0.0
    %v262 = vsel %vm185, %v245, 0.0
    %v263 = vsel %vm182, %v238, 0.0
    %v264 = vsel %vm183, %v230, 0.0
    %v265 = vsel %vm184, %v222, 0.0
    %v266 = vsel %vm185, %v246, 0.0
    %v267 = vsel %vm182, %v239, 0.0
    %v268 = vsel %vm183, %v231, 0.0
    %v269 = vsel %vm184, %v223, 0.0
    %v270 = vsel %vm185, %v247, 0.0
    %v271 = vsel %vm182, %v240, 0.0
    %v272 = vsel %vm183, %v232, 0.0
    %v273 = vsel %vm184, %v224, 0.0
    %v274 = vsel %vm185, %v248, 0.0
    %v275 = vsel %vm182, %v241, 0.0
    %v276 = vsel %vm183, %v233, 0.0
    %v277 = vsel %vm184, %v225, 0.0
    %v278 = vsel %vm185, %v249, 0.0
    %v279 = vsel %vm182, %v242, 0.0
    %v280 = vsel %vm183, %v234, 0.0
    %v281 = vsel %vm184, %v226, 0.0
    %v282 = vsel %vm185, %v250, 0.0
    %v283 = vpack.c.bf16 %v151, %v150
    %v284 = vpack.c.bf16 %v153, %v152
    %v285 = vpack.c.bf16 %v155, %v154
    %v286 = vpack.c.bf16 %v157, %v156
    %v287 = vpack.c.bf16 %v159, %v158
    %v288 = vpack.c.bf16 %v161, %v160
    %v289 = vpack.c.bf16 %v163, %v162
    %v290 = vpack.c.bf16 %v165, %v164
    %v291 = vpack.c.bf16 %v167, %v166
    %v292 = vpack.c.bf16 %v169, %v168
    %v293 = vpack.c.bf16 %v171, %v170
    %v294 = vpack.c.bf16 %v173, %v172
    %v295 = vpack.c.bf16 %v175, %v174
    %v296 = vpack.c.bf16 %v177, %v176
    %v297 = vpack.c.bf16 %v179, %v178
    %v298 = vpack.c.bf16 %v181, %v180
    %v299 = vpack.c.bf16 %v45, %v44
    %v300 = vpack.c.bf16 %v47, %v46
    %v301 = vpack.c.bf16 %v49, %v48
    %v302 = vpack.c.bf16 %v51, %v50
    %v303 = vpack.c.bf16 %v53, %v52
    %v304 = vpack.c.bf16 %v55, %v54
    %v305 = vpack.c.bf16 %v57, %v56
    %v306 = vpack.c.bf16 %v59, %v58
    %v307 = vpack.c.bf16 %v61, %v60
    %v308 = vpack.c.bf16 %v63, %v62
    %v309 = vpack.c.bf16 %v65, %v64
    %v310 = vpack.c.bf16 %v67, %v66
    %v311 = vpack.c.bf16 %v69, %v68
    %v312 = vpack.c.bf16 %v71, %v70
    %v313 = vpack.c.bf16 %v73, %v72
    %v314 = vpack.c.bf16 %v75, %v74
    %v315 = vpack.c.bf16 %v252, %v251
    %v316 = vpack.c.bf16 %v254, %v253
    %v317 = vpack.c.bf16 %v256, %v255
    %v318 = vpack.c.bf16 %v258, %v257
    %v319 = vpack.c.bf16 %v260, %v259
    %v320 = vpack.c.bf16 %v262, %v261
    %v321 = vpack.c.bf16 %v264, %v263
    %v322 = vpack.c.bf16 %v266, %v265
    %v323 = vpack.c.bf16 %v268, %v267
    %v324 = vpack.c.bf16 %v270, %v269
    %v325 = vpack.c.bf16 %v272, %v271
    %v326 = vpack.c.bf16 %v274, %v273
    %v327 = vpack.c.bf16 %v276, %v275
    %v328 = vpack.c.bf16 %v278, %v277
    %v329 = vpack.c.bf16 %v280, %v279
    %v330 = vpack.c.bf16 %v282, %v281
    %v331 = vld [vmem:[#allocation5] sm:$0xf]
    %v332 = vld [vmem:[#allocation5 + $0x4] sm:$0xf]
    %v333 = vld [vmem:[#allocation5 + $0x8] sm:$0xf]
    %v334 = vld [vmem:[#allocation5 + $0xc] sm:$0xf]
    %v335 = vld [vmem:[#allocation5 + $0x10] sm:$0xf]
    %v336 = vld [vmem:[#allocation5 + $0x14] sm:$0xf]
    %v337 = vld [vmem:[#allocation5 + $0x18] sm:$0xf]
    %v338 = vld [vmem:[#allocation5 + $0x1c] sm:$0xf]
    %v339 = vld [vmem:[#allocation5 + $0x20] sm:$0xf]
    %v340 = vld [vmem:[#allocation5 + $0x24] sm:$0xf]
    %v341 = vld [vmem:[#allocation5 + $0x28] sm:$0xf]
    %v342 = vld [vmem:[#allocation5 + $0x2c] sm:$0xf]
    %v343 = vld [vmem:[#allocation5 + $0x30] sm:$0xf]
    %v344 = vld [vmem:[#allocation5 + $0x34] sm:$0xf]
    %v345 = vld [vmem:[#allocation5 + $0x38] sm:$0xf]
    %v346 = vld [vmem:[#allocation5 + $0x3c] sm:$0xf]
    %v347 = vld [vmem:[#allocation5 + $0x40] sm:$0xf]
    %v348 = vld [vmem:[#allocation5 + $0x44] sm:$0xf]
    %v349 = vld [vmem:[#allocation5 + $0x48] sm:$0xf]
    %v350 = vld [vmem:[#allocation5 + $0x4c] sm:$0xf]
    %v351 = vld [vmem:[#allocation5 + $0x50] sm:$0xf]
    %v352 = vld [vmem:[#allocation5 + $0x54] sm:$0xf]
    %v353 = vld [vmem:[#allocation5 + $0x58] sm:$0xf]
    %v354 = vld [vmem:[#allocation5 + $0x5c] sm:$0xf]
    %v355 = vld [vmem:[#allocation5 + $0x60] sm:$0xf]
    %v356 = vld [vmem:[#allocation5 + $0x64] sm:$0xf]
    %v357 = vld [vmem:[#allocation5 + $0x68] sm:$0xf]
    %v358 = vld [vmem:[#allocation5 + $0x6c] sm:$0xf]
    %v359 = vld [vmem:[#allocation5 + $0x70] sm:$0xf]
    %v360 = vld [vmem:[#allocation5 + $0x74] sm:$0xf]
    %v361 = vld [vmem:[#allocation5 + $0x78] sm:$0xf]
    %v362 = vld [vmem:[#allocation5 + $0x7c] sm:$0xf]
    %v363 = vld [vmem:[#allocation5 + $0x80] sm:$0xf]
    %v364 = vld [vmem:[#allocation5 + $0x84] sm:$0xf]
    %v365 = vld [vmem:[#allocation5 + $0x88] sm:$0xf]
    %v366 = vld [vmem:[#allocation5 + $0x8c] sm:$0xf]
    %v367 = vld [vmem:[#allocation5 + $0x90] sm:$0xf]
    %v368 = vld [vmem:[#allocation5 + $0x94] sm:$0xf]
    %v369 = vld [vmem:[#allocation5 + $0x98] sm:$0xf]
    %v370 = vld [vmem:[#allocation5 + $0x9c] sm:$0xf]
    %v371 = vld [vmem:[#allocation5 + $0xa0] sm:$0xf]
    %v372 = vld [vmem:[#allocation5 + $0xa4] sm:$0xf]
    %v373 = vld [vmem:[#allocation5 + $0xa8] sm:$0xf]
    %v374 = vld [vmem:[#allocation5 + $0xac] sm:$0xf]
    %v375 = vld [vmem:[#allocation5 + $0xb0] sm:$0xf]
    %v376 = vld [vmem:[#allocation5 + $0xb4] sm:$0xf]
    %v377 = vld [vmem:[#allocation5 + $0xb8] sm:$0xf]
    %v378 = vld [vmem:[#allocation5 + $0xbc] sm:$0xf]
    %v379 = vld [vmem:[%s2] sm:$0x1]
    %v381 = vlaneseq
    %v382 = vshrl.u32 %v381, 7
    %v383 = vsub.s32 0, %v382
    %v384 = vrot.slane %v379, %v383
    %v434 = vunpack.c.l.b16 %v331
    %v435 = vunpack.c.l.b16 %v332
    %v436 = vunpack.c.l.b16 %v333
    %v437 = vunpack.c.l.b16 %v334
    %v438 = vunpack.c.l.b16 %v335
    %v439 = vunpack.c.l.b16 %v336
    %v440 = vunpack.c.l.b16 %v337
    %v441 = vunpack.c.l.b16 %v338
    %v442 = vunpack.c.l.b16 %v339
    %v443 = vunpack.c.l.b16 %v340
    %v444 = vunpack.c.l.b16 %v341
    %v445 = vunpack.c.l.b16 %v342
    %v446 = vunpack.c.l.b16 %v343
    %v447 = vunpack.c.l.b16 %v344
    %v448 = vunpack.c.l.b16 %v345
    %v449 = vunpack.c.l.b16 %v346
    %v450 = vunpack.c.l.b16 %v347
    %v451 = vunpack.c.l.b16 %v348
    %v452 = vunpack.c.l.b16 %v349
    %v453 = vunpack.c.l.b16 %v350
    %v454 = vunpack.c.l.b16 %v351
    %v455 = vunpack.c.l.b16 %v352
    %v456 = vunpack.c.l.b16 %v353
    %v457 = vunpack.c.l.b16 %v354
    %v458 = vunpack.c.l.b16 %v355
    %v459 = vunpack.c.l.b16 %v356
    %v460 = vunpack.c.l.b16 %v357
    %v461 = vunpack.c.l.b16 %v358
    %v462 = vunpack.c.l.b16 %v359
    %v463 = vunpack.c.l.b16 %v360
    %v464 = vunpack.c.l.b16 %v361
    %v465 = vunpack.c.l.b16 %v362
    %v466 = vunpack.c.l.b16 %v363
    %v467 = vunpack.c.l.b16 %v364
    %v468 = vunpack.c.l.b16 %v365
    %v469 = vunpack.c.l.b16 %v366
    %v470 = vunpack.c.l.b16 %v367
    %v471 = vunpack.c.l.b16 %v368
    %v472 = vunpack.c.l.b16 %v369
    %v473 = vunpack.c.l.b16 %v370
    %v474 = vunpack.c.l.b16 %v371
    %v475 = vunpack.c.l.b16 %v372
    %v476 = vunpack.c.l.b16 %v373
    %v477 = vunpack.c.l.b16 %v374
    %v478 = vunpack.c.l.b16 %v375
    %v479 = vunpack.c.l.b16 %v376
    %v480 = vunpack.c.l.b16 %v377
    %v481 = vunpack.c.l.b16 %v378
    %v482 = vpack.c.b16 %v435, %v434
    %v483 = vpack.c.b16 %v437, %v436
    %v484 = vpack.c.b16 %v439, %v438
    %v485 = vpack.c.b16 %v441, %v440
    %v486 = vpack.c.b16 %v443, %v442
    %v487 = vpack.c.b16 %v445, %v444
    %v488 = vpack.c.b16 %v447, %v446
    %v489 = vpack.c.b16 %v449, %v448
    %v490 = vpack.c.b16 %v451, %v450
    %v491 = vpack.c.b16 %v453, %v452
    %v492 = vpack.c.b16 %v455, %v454
    %v493 = vpack.c.b16 %v457, %v456
    %v494 = vpack.c.b16 %v459, %v458
    %v495 = vpack.c.b16 %v461, %v460
    %v496 = vpack.c.b16 %v463, %v462
    %v497 = vpack.c.b16 %v465, %v464
    %v498 = vpack.c.b16 %v467, %v466
    %v499 = vpack.c.b16 %v469, %v468
    %v500 = vpack.c.b16 %v471, %v470
    %v501 = vpack.c.b16 %v473, %v472
    %v502 = vpack.c.b16 %v475, %v474
    %v503 = vpack.c.b16 %v477, %v476
    %v504 = vpack.c.b16 %v479, %v478
    %v505 = vpack.c.b16 %v481, %v480
    %530 = vmatprep.subr.bf16.mxu0 0
    %531 = vmatpush1.bf16.msra.mxu0 %v482
    %532 = vmatprep.subr.bf16.mxu0 0
    %533 = vmatpush1.bf16.msra.mxu0 %v483
    %534 = vmatprep.subr.bf16.mxu0 0
    %535 = vmatpush1.bf16.msra.mxu0 %v484
    %536 = vmatprep.subr.bf16.mxu0 0
    %537 = vmatpush1.bf16.msra.mxu0 %v485
    %538 = vmatprep.subr.bf16.mxu0 0
    %539 = vmatpush1.bf16.msra.mxu0 %v486
    %540 = vmatprep.subr.bf16.mxu0 0
    %541 = vmatpush1.bf16.msra.mxu0 %v487
    %542 = vmatprep.subr.bf16.mxu0 0
    %543 = vmatpush1.bf16.msra.mxu0 %v488
    %544 = vmatprep.subr.bf16.mxu0 0
    %545 = vmatpush1.bf16.msra.mxu0 %v489
    %546 = vmatprep.subr.bf16.mxu0 0
    %547 = vmatpush1.bf16.msra.mxu0 %v490
    %548 = vmatprep.subr.bf16.mxu0 0
    %549 = vmatpush1.bf16.msra.mxu0 %v491
    %550 = vmatprep.subr.bf16.mxu0 0
    %551 = vmatpush1.bf16.msra.mxu0 %v492
    %552 = vmatprep.subr.bf16.mxu0 0
    %553 = vmatpush1.bf16.msra.mxu0 %v493
    %554 = vmatprep.subr.bf16.mxu0 0
    %555 = vmatpush1.bf16.msra.mxu0 %v494
    %556 = vmatprep.subr.bf16.mxu0 0
    %557 = vmatpush1.bf16.msra.mxu0 %v495
    %558 = vmatprep.subr.bf16.mxu0 0
    %559 = vmatpush1.bf16.msra.mxu0 %v496
    %560 = vmatprep.subr.bf16.mxu0 0
    %561 = vmatpush1.bf16.msra.mxu0 %v497
    %562 = vmatprep.mubr.bf16.mxu0 %v299
    %563 = vmatmul.mubr.bf16.gmra.mrb[0].mxu0 %v283
    %v564 = vpop.f32.mrb[0].mxu0
    %v565 = vadd.f32 %v384, %v564
    %v566 = vpop.f32.mrb[0].mxu0
    %v567 = vpop.f32.mrb[0].mxu0
    %v568 = vadd.f32 %v384, %v567
    %v569 = vpop.f32.mrb[0].mxu0
    %570 = vmatprep.mubr.bf16.mxu0 %v300
    %571 = vmatmul.mubr.bf16.gmra.mrb[0].mxu0 %v284
    %v572 = vpop.f32.mrb[0].mxu0
    %v573 = vadd.f32 %v384, %v572
    %v574 = vpop.f32.mrb[0].mxu0
    %v575 = vpop.f32.mrb[0].mxu0
    %v576 = vadd.f32 %v384, %v575
    %v577 = vpop.f32.mrb[0].mxu0
    %578 = vmatprep.mubr.bf16.mxu0 %v301
    %579 = vmatmul.mubr.bf16.gmra.mrb[0].mxu0 %v285
    %v580 = vpop.f32.mrb[0].mxu0
    %v581 = vadd.f32 %v384, %v580
    %v582 = vpop.f32.mrb[0].mxu0
    %v583 = vpop.f32.mrb[0].mxu0
    %v584 = vadd.f32 %v384, %v583
    %v585 = vpop.f32.mrb[0].mxu0
    %586 = vmatprep.mubr.bf16.mxu0 %v302
    %587 = vmatmul.mubr.bf16.gmra.mrb[0].mxu0 %v286
    %v588 = vpop.f32.mrb[0].mxu0
    %v589 = vadd.f32 %v384, %v588
    %v590 = vpop.f32.mrb[0].mxu0
    %v591 = vpop.f32.mrb[0].mxu0
    %v592 = vadd.f32 %v384, %v591
    %v593 = vpop.f32.mrb[0].mxu0
    %594 = vmatprep.mubr.bf16.mxu0 %v303
    %595 = vmatmul.mubr.bf16.gmra.mrb[0].mxu0 %v287
    %v596 = vpop.f32.mrb[0].mxu0
    %v597 = vadd.f32 %v384, %v596
    %v598 = vpop.f32.mrb[0].mxu0
    %v599 = vpop.f32.mrb[0].mxu0
    %v600 = vadd.f32 %v384, %v599
    %v601 = vpop.f32.mrb[0].mxu0
    %602 = vmatprep.mubr.bf16.mxu0 %v304
    %603 = vmatmul.mubr.bf16.gmra.mrb[0].mxu0 %v288
    %v604 = vpop.f32.mrb[0].mxu0
    %v605 = vadd.f32 %v384, %v604
    %v606 = vpop.f32.mrb[0].mxu0
    %v607 = vpop.f32.mrb[0].mxu0
    %v608 = vadd.f32 %v384, %v607
    %v609 = vpop.f32.mrb[0].mxu0
    %610 = vmatprep.mubr.bf16.mxu0 %v305
    %611 = vmatmul.mubr.bf16.gmra.mrb[0].mxu0 %v289
    %v612 = vpop.f32.mrb[0].mxu0
    %v613 = vadd.f32 %v384, %v612
    %v614 = vpop.f32.mrb[0].mxu0
    %v615 = vpop.f32.mrb[0].mxu0
    %v616 = vadd.f32 %v384, %v615
    %v617 = vpop.f32.mrb[0].mxu0
    %618 = vmatprep.mubr.bf16.mxu0 %v306
    %619 = vmatmul.mubr.bf16.gmra.mrb[0].mxu0 %v290
    %v620 = vpop.f32.mrb[0].mxu0
    %v621 = vadd.f32 %v384, %v620
    %v622 = vpop.f32.mrb[0].mxu0
    %v623 = vpop.f32.mrb[0].mxu0
    %v624 = vadd.f32 %v384, %v623
    %v625 = vpop.f32.mrb[0].mxu0
    %626 = vmatprep.mubr.bf16.mxu0 %v307
    %627 = vmatmul.mubr.bf16.gmra.mrb[0].mxu0 %v291
    %v628 = vpop.f32.mrb[0].mxu0
    %v629 = vadd.f32 %v384, %v628
    %v630 = vpop.f32.mrb[0].mxu0
    %v631 = vpop.f32.mrb[0].mxu0
    %v632 = vadd.f32 %v384, %v631
    %v633 = vpop.f32.mrb[0].mxu0
    %634 = vmatprep.mubr.bf16.mxu0 %v308
    %635 = vmatmul.mubr.bf16.gmra.mrb[0].mxu0 %v292
    %v636 = vpop.f32.mrb[0].mxu0
    %v637 = vadd.f32 %v384, %v636
    %v638 = vpop.f32.mrb[0].mxu0
    %v639 = vpop.f32.mrb[0].mxu0
    %v640 = vadd.f32 %v384, %v639
    %v641 = vpop.f32.mrb[0].mxu0
    %642 = vmatprep.mubr.bf16.mxu0 %v309
    %643 = vmatmul.mubr.bf16.gmra.mrb[0].mxu0 %v293
    %v644 = vpop.f32.mrb[0].mxu0
    %v645 = vadd.f32 %v384, %v644
    %v646 = vpop.f32.mrb[0].mxu0
    %v647 = vpop.f32.mrb[0].mxu0
    %v648 = vadd.f32 %v384, %v647
    %v649 = vpop.f32.mrb[0].mxu0
    %650 = vmatprep.mubr.bf16.mxu0 %v310
    %651 = vmatmul.mubr.bf16.gmra.mrb[0].mxu0 %v294
    %v652 = vpop.f32.mrb[0].mxu0
    %v653 = vadd.f32 %v384, %v652
    %v654 = vpop.f32.mrb[0].mxu0
    %v655 = vpop.f32.mrb[0].mxu0
    %v656 = vadd.f32 %v384, %v655
    %v657 = vpop.f32.mrb[0].mxu0
    %658 = vmatprep.mubr.bf16.mxu0 %v311
    %659 = vmatmul.mubr.bf16.gmra.mrb[0].mxu0 %v295
    %v660 = vpop.f32.mrb[0].mxu0
    %v661 = vadd.f32 %v384, %v660
    %v662 = vpop.f32.mrb[0].mxu0
    %v663 = vpop.f32.mrb[0].mxu0
    %v664 = vadd.f32 %v384, %v663
    %v665 = vpop.f32.mrb[0].mxu0
    %666 = vmatprep.mubr.bf16.mxu0 %v312
    %667 = vmatmul.mubr.bf16.gmra.mrb[0].mxu0 %v296
    %v668 = vpop.f32.mrb[0].mxu0
    %v669 = vadd.f32 %v384, %v668
    %v670 = vpop.f32.mrb[0].mxu0
    %v671 = vpop.f32.mrb[0].mxu0
    %v672 = vadd.f32 %v384, %v671
    %v673 = vpop.f32.mrb[0].mxu0
    %674 = vmatprep.mubr.bf16.mxu0 %v313
    %675 = vmatmul.mubr.bf16.gmra.mrb[0].mxu0 %v297
    %v676 = vpop.f32.mrb[0].mxu0
    %v677 = vadd.f32 %v384, %v676
    %v678 = vpop.f32.mrb[0].mxu0
    %v679 = vpop.f32.mrb[0].mxu0
    %v680 = vadd.f32 %v384, %v679
    %v681 = vpop.f32.mrb[0].mxu0
    %682 = vmatprep.mubr.bf16.mxu0 %v314
    %683 = vmatmul.mubr.bf16.gmra.mrb[0].mxu0 %v298
    %v684 = vpop.f32.mrb[0].mxu0
    %v685 = vadd.f32 %v384, %v684
    %v686 = vpop.f32.mrb[0].mxu0
    %v687 = vpop.f32.mrb[0].mxu0
    %v688 = vadd.f32 %v384, %v687
    %v689 = vpop.f32.mrb[0].mxu0
    %690 = vdwg.mxu0
    %691 = vmatprep.subr.bf16.mxu0 0
    %692 = vmatpush1.bf16.msra.mxu0 %v498
    %693 = vmatprep.subr.bf16.mxu0 0
    %694 = vmatpush1.bf16.msra.mxu0 %v499
    %695 = vmatprep.subr.bf16.mxu0 0
    %696 = vmatpush1.bf16.msra.mxu0 %v500
    %697 = vmatprep.subr.bf16.mxu0 0
    %698 = vmatpush1.bf16.msra.mxu0 %v501
    %699 = vmatprep.subr.bf16.mxu0 0
    %700 = vmatpush1.bf16.msra.mxu0 %v502
    %701 = vmatprep.subr.bf16.mxu0 0
    %702 = vmatpush1.bf16.msra.mxu0 %v503
    %703 = vmatprep.subr.bf16.mxu0 0
    %704 = vmatpush1.bf16.msra.mxu0 %v504
    %705 = vmatprep.subr.bf16.mxu0 0
    %706 = vmatpush1.bf16.msra.mxu0 %v505
    %707 = vmatprep.subr.bf16.mxu0 0
    %708 = vmatpush1.bf16.msra.mxu0 0
    %709 = vmatprep.subr.bf16.mxu0 0
    %710 = vmatpush1.bf16.msra.mxu0 0
    %711 = vmatprep.subr.bf16.mxu0 0
    %712 = vmatpush1.bf16.msra.mxu0 0
    %713 = vmatprep.subr.bf16.mxu0 0
    %714 = vmatpush1.bf16.msra.mxu0 0
    %715 = vmatprep.subr.bf16.mxu0 0
    %716 = vmatpush1.bf16.msra.mxu0 0
    %717 = vmatprep.subr.bf16.mxu0 0
    %718 = vmatpush1.bf16.msra.mxu0 0
    %719 = vmatprep.subr.bf16.mxu0 0
    %720 = vmatpush1.bf16.msra.mxu0 0
    %721 = vmatprep.subr.bf16.mxu0 0
    %722 = vmatpush1.bf16.msra.mxu0 0
    %723 = vmatprep.mubr.bf16.mxu0 0
    %724 = vmatmul.mubr.bf16.gmra.mrb[0].mxu0 %v315
    %v725 = vpop.f32.mrb[0].mxu0
    %v726 = vadd.f32 %v565, %v725
    %v727 = vpop.f32.mrb[0].mxu0
    %v728 = vpop.f32.mrb[0].mxu0
    %v729 = vadd.f32 %v568, %v728
    %v730 = vpop.f32.mrb[0].mxu0
    %731 = vmatprep.mubr.bf16.mxu0 0
    %732 = vmatmul.mubr.bf16.gmra.mrb[0].mxu0 %v316
    %v733 = vpop.f32.mrb[0].mxu0
    %v734 = vadd.f32 %v573, %v733
    %v735 = vpop.f32.mrb[0].mxu0
    %v736 = vpop.f32.mrb[0].mxu0
    %v737 = vadd.f32 %v576, %v736
    %v738 = vpop.f32.mrb[0].mxu0
    %739 = vmatprep.mubr.bf16.mxu0 0
    %740 = vmatmul.mubr.bf16.gmra.mrb[0].mxu0 %v317
    %v741 = vpop.f32.mrb[0].mxu0
    %v742 = vadd.f32 %v581, %v741
    %v743 = vpop.f32.mrb[0].mxu0
    %v744 = vpop.f32.mrb[0].mxu0
    %v745 = vadd.f32 %v584, %v744
    %v746 = vpop.f32.mrb[0].mxu0
    %747 = vmatprep.mubr.bf16.mxu0 0
    %748 = vmatmul.mubr.bf16.gmra.mrb[0].mxu0 %v318
    %v749 = vpop.f32.mrb[0].mxu0
    %v750 = vadd.f32 %v589, %v749
    %v751 = vpop.f32.mrb[0].mxu0
    %v752 = vpop.f32.mrb[0].mxu0
    %v753 = vadd.f32 %v592, %v752
    %v754 = vpop.f32.mrb[0].mxu0
    %755 = vmatprep.mubr.bf16.mxu0 0
    %756 = vmatmul.mubr.bf16.gmra.mrb[0].mxu0 %v319
    %v757 = vpop.f32.mrb[0].mxu0
    %v758 = vadd.f32 %v597, %v757
    %v759 = vpop.f32.mrb[0].mxu0
    %v760 = vpop.f32.mrb[0].mxu0
    %v761 = vadd.f32 %v600, %v760
    %v762 = vpop.f32.mrb[0].mxu0
    %763 = vmatprep.mubr.bf16.mxu0 0
    %764 = vmatmul.mubr.bf16.gmra.mrb[0].mxu0 %v320
    %v765 = vpop.f32.mrb[0].mxu0
    %v766 = vadd.f32 %v605, %v765
    %v767 = vpop.f32.mrb[0].mxu0
    %v768 = vpop.f32.mrb[0].mxu0
    %v769 = vadd.f32 %v608, %v768
    %v770 = vpop.f32.mrb[0].mxu0
    %771 = vmatprep.mubr.bf16.mxu0 0
    %772 = vmatmul.mubr.bf16.gmra.mrb[0].mxu0 %v321
    %v773 = vpop.f32.mrb[0].mxu0
    %v774 = vadd.f32 %v613, %v773
    %v775 = vpop.f32.mrb[0].mxu0
    %v776 = vpop.f32.mrb[0].mxu0
    %v777 = vadd.f32 %v616, %v776
    %v778 = vpop.f32.mrb[0].mxu0
    %779 = vmatprep.mubr.bf16.mxu0 0
    %780 = vmatmul.mubr.bf16.gmra.mrb[0].mxu0 %v322
    %v781 = vpop.f32.mrb[0].mxu0
    %v782 = vadd.f32 %v621, %v781
    %v783 = vpop.f32.mrb[0].mxu0
    %v784 = vpop.f32.mrb[0].mxu0
    %v785 = vadd.f32 %v624, %v784
    %v786 = vpop.f32.mrb[0].mxu0
    %787 = vmatprep.mubr.bf16.mxu0 0
    %788 = vmatmul.mubr.bf16.gmra.mrb[0].mxu0 %v323
    %v789 = vpop.f32.mrb[0].mxu0
    %v790 = vadd.f32 %v629, %v789
    %v791 = vpop.f32.mrb[0].mxu0
    %v792 = vpop.f32.mrb[0].mxu0
    %v793 = vadd.f32 %v632, %v792
    %v794 = vpop.f32.mrb[0].mxu0
    %795 = vmatprep.mubr.bf16.mxu0 0
    %796 = vmatmul.mubr.bf16.gmra.mrb[0].mxu0 %v324
    %v797 = vpop.f32.mrb[0].mxu0
    %v798 = vadd.f32 %v637, %v797
    %v799 = vpop.f32.mrb[0].mxu0
    %v800 = vpop.f32.mrb[0].mxu0
    %v801 = vadd.f32 %v640, %v800
    %v802 = vpop.f32.mrb[0].mxu0
    %803 = vmatprep.mubr.bf16.mxu0 0
    %804 = vmatmul.mubr.bf16.gmra.mrb[0].mxu0 %v325
    %v805 = vpop.f32.mrb[0].mxu0
    %v806 = vadd.f32 %v645, %v805
    %v807 = vpop.f32.mrb[0].mxu0
    %v808 = vpop.f32.mrb[0].mxu0
    %v809 = vadd.f32 %v648, %v808
    %v810 = vpop.f32.mrb[0].mxu0
    %811 = vmatprep.mubr.bf16.mxu0 0
    %812 = vmatmul.mubr.bf16.gmra.mrb[0].mxu0 %v326
    %v813 = vpop.f32.mrb[0].mxu0
    %v814 = vadd.f32 %v653, %v813
    %v815 = vpop.f32.mrb[0].mxu0
    %v816 = vpop.f32.mrb[0].mxu0
    %v817 = vadd.f32 %v656, %v816
    %v818 = vpop.f32.mrb[0].mxu0
    %819 = vmatprep.mubr.bf16.mxu0 0
    %820 = vmatmul.mubr.bf16.gmra.mrb[0].mxu0 %v327
    %v821 = vpop.f32.mrb[0].mxu0
    %v822 = vadd.f32 %v661, %v821
    %v823 = vpop.f32.mrb[0].mxu0
    %v824 = vpop.f32.mrb[0].mxu0
    %v825 = vadd.f32 %v664, %v824
    %v826 = vpop.f32.mrb[0].mxu0
    %827 = vmatprep.mubr.bf16.mxu0 0
    %828 = vmatmul.mubr.bf16.gmra.mrb[0].mxu0 %v328
    %v829 = vpop.f32.mrb[0].mxu0
    %v830 = vadd.f32 %v669, %v829
    %v831 = vpop.f32.mrb[0].mxu0
    %v832 = vpop.f32.mrb[0].mxu0
    %v833 = vadd.f32 %v672, %v832
    %v834 = vpop.f32.mrb[0].mxu0
    %835 = vmatprep.mubr.bf16.mxu0 0
    %836 = vmatmul.mubr.bf16.gmra.mrb[0].mxu0 %v329
    %v837 = vpop.f32.mrb[0].mxu0
    %v838 = vadd.f32 %v677, %v837
    %v839 = vpop.f32.mrb[0].mxu0
    %v840 = vpop.f32.mrb[0].mxu0
    %v841 = vadd.f32 %v680, %v840
    %v842 = vpop.f32.mrb[0].mxu0
    %843 = vmatprep.mubr.bf16.mxu0 0
    %844 = vmatmul.mubr.bf16.gmra.mrb[0].mxu0 %v330
    %v845 = vpop.f32.mrb[0].mxu0
    %v846 = vadd.f32 %v685, %v845
    %v847 = vpop.f32.mrb[0].mxu0
    %v848 = vpop.f32.mrb[0].mxu0
    %v849 = vadd.f32 %v688, %v848
    %v850 = vpop.f32.mrb[0].mxu0
    %851 = vdwg.mxu0
    %v852 = vmax.f32 %v726, 0.0
    %v853 = vmax.f32 %v729, 0.0
    %v854 = vmax.f32 %v734, 0.0
    %v855 = vmax.f32 %v737, 0.0
    %v856 = vmax.f32 %v742, 0.0
    %v857 = vmax.f32 %v745, 0.0
    %v858 = vmax.f32 %v750, 0.0
    %v859 = vmax.f32 %v753, 0.0
    %v860 = vmax.f32 %v758, 0.0
    %v861 = vmax.f32 %v761, 0.0
    %v862 = vmax.f32 %v766, 0.0
    %v863 = vmax.f32 %v769, 0.0
    %v864 = vmax.f32 %v774, 0.0
    %v865 = vmax.f32 %v777, 0.0
    %v866 = vmax.f32 %v782, 0.0
    %v867 = vmax.f32 %v785, 0.0
    %v868 = vmax.f32 %v790, 0.0
    %v869 = vmax.f32 %v793, 0.0
    %v870 = vmax.f32 %v798, 0.0
    %v871 = vmax.f32 %v801, 0.0
    %v872 = vmax.f32 %v806, 0.0
    %v873 = vmax.f32 %v809, 0.0
    %v874 = vmax.f32 %v814, 0.0
    %v875 = vmax.f32 %v817, 0.0
    %v876 = vmax.f32 %v822, 0.0
    %v877 = vmax.f32 %v825, 0.0
    %v878 = vmax.f32 %v830, 0.0
    %v879 = vmax.f32 %v833, 0.0
    %v880 = vmax.f32 %v838, 0.0
    %v881 = vmax.f32 %v841, 0.0
    %v882 = vmax.f32 %v846, 0.0
    %v883 = vmax.f32 %v849, 0.0
    %vm884 = vcmp.ge.s32.totalorder %v77, 2
    %vm885 = vcmp.ge.s32.totalorder %v78, 2
    %vm886 = vcmp.ge.s32.totalorder %v79, 2
    %vm887 = vcmp.ge.s32.totalorder %v80, 2
    %v888 = vrot.slane %v852, 6
    %v889 = vrot.slane %v856, 6
    %v890 = vrot.slane %v860, 6
    %v891 = vrot.slane %v864, 6
    %v892 = vrot.slane %v868, 6
    %v893 = vrot.slane %v872, 6
    %v894 = vrot.slane %v876, 6
    %v895 = vrot.slane %v880, 6
    %v896 = vrot.slane %v853, 6
    %v897 = vrot.slane %v857, 6
    %v898 = vrot.slane %v861, 6
    %v899 = vrot.slane %v865, 6
    %v900 = vrot.slane %v869, 6
    %v901 = vrot.slane %v873, 6
    %v902 = vrot.slane %v877, 6
    %v903 = vrot.slane %v881, 6
    %v904 = vrot.slane %v854, 6
    %v905 = vrot.slane %v858, 6
    %v906 = vrot.slane %v862, 6
    %v907 = vrot.slane %v866, 6
    %v908 = vrot.slane %v870, 6
    %v909 = vrot.slane %v874, 6
    %v910 = vrot.slane %v878, 6
    %v911 = vrot.slane %v882, 6
    %v912 = vrot.slane %v855, 6
    %v913 = vrot.slane %v859, 6
    %v914 = vrot.slane %v863, 6
    %v915 = vrot.slane %v867, 6
    %v916 = vrot.slane %v871, 6
    %v917 = vrot.slane %v875, 6
    %v918 = vrot.slane %v879, 6
    %v919 = vrot.slane %v883, 6
    %vm920 = vcmp.lt.s32.totalorder %v77, 2
    %v921 = vsel %vm920, %v904, %v912
    %v922 = vsel %vm920, %v905, %v913
    %v923 = vsel %vm920, %v906, %v914
    %v924 = vsel %vm920, %v907, %v915
    %v925 = vsel %vm920, %v908, %v916
    %v926 = vsel %vm920, %v909, %v917
    %v927 = vsel %vm920, %v910, %v918
    %v928 = vsel %vm920, %v911, %v919
    %v929 = vsel %vm920, %v896, %v904
    %v930 = vsel %vm920, %v897, %v905
    %v931 = vsel %vm920, %v898, %v906
    %v932 = vsel %vm920, %v899, %v907
    %v933 = vsel %vm920, %v900, %v908
    %v934 = vsel %vm920, %v901, %v909
    %v935 = vsel %vm920, %v902, %v910
    %v936 = vsel %vm920, %v903, %v911
    %v937 = vsel %vm920, %v888, %v896
    %v938 = vsel %vm920, %v889, %v897
    %v939 = vsel %vm920, %v890, %v898
    %v940 = vsel %vm920, %v891, %v899
    %v941 = vsel %vm920, %v892, %v900
    %v942 = vsel %vm920, %v893, %v901
    %v943 = vsel %vm920, %v894, %v902
    %v944 = vsel %vm920, %v895, %v903
    %v945 = vsel %vm920, %v912, %v888
    %v946 = vsel %vm920, %v913, %v889
    %v947 = vsel %vm920, %v914, %v890
    %v948 = vsel %vm920, %v915, %v891
    %v949 = vsel %vm920, %v916, %v892
    %v950 = vsel %vm920, %v917, %v893
    %v951 = vsel %vm920, %v918, %v894
    %v952 = vsel %vm920, %v919, %v895
    %v953 = vsel %vm884, %v945, 0.0
    %v954 = vsel %vm885, %v937, 0.0
    %v955 = vsel %vm886, %v929, 0.0
    %v956 = vsel %vm887, %v921, 0.0
    %v957 = vsel %vm884, %v946, 0.0
    %v958 = vsel %vm885, %v938, 0.0
    %v959 = vsel %vm886, %v930, 0.0
    %v960 = vsel %vm887, %v922, 0.0
    %v961 = vsel %vm884, %v947, 0.0
    %v962 = vsel %vm885, %v939, 0.0
    %v963 = vsel %vm886, %v931, 0.0
    %v964 = vsel %vm887, %v923, 0.0
    %v965 = vsel %vm884, %v948, 0.0
    %v966 = vsel %vm885, %v940, 0.0
    %v967 = vsel %vm886, %v932, 0.0
    %v968 = vsel %vm887, %v924, 0.0
    %v969 = vsel %vm884, %v949, 0.0
    %v970 = vsel %vm885, %v941, 0.0
    %v971 = vsel %vm886, %v933, 0.0
    %v972 = vsel %vm887, %v925, 0.0
    %v973 = vsel %vm884, %v950, 0.0
    %v974 = vsel %vm885, %v942, 0.0
    %v975 = vsel %vm886, %v934, 0.0
    %v976 = vsel %vm887, %v926, 0.0
    %v977 = vsel %vm884, %v951, 0.0
    %v978 = vsel %vm885, %v943, 0.0
    %v979 = vsel %vm886, %v935, 0.0
    %v980 = vsel %vm887, %v927, 0.0
    %v981 = vsel %vm884, %v952, 0.0
    %v982 = vsel %vm885, %v944, 0.0
    %v983 = vsel %vm886, %v936, 0.0
    %v984 = vsel %vm887, %v928, 0.0
    %vm985 = vcmp.lt.s32.totalorder %v77, 30
    %vm986 = vcmp.lt.s32.totalorder %v78, 30
    %vm987 = vcmp.lt.s32.totalorder %v79, 30
    %vm988 = vcmp.lt.s32.totalorder %v80, 30
    %v989 = vrot.slane %v852, 2
    %v990 = vrot.slane %v856, 2
    %v991 = vrot.slane %v860, 2
    %v992 = vrot.slane %v864, 2
    %v993 = vrot.slane %v868, 2
    %v994 = vrot.slane %v872, 2
    %v995 = vrot.slane %v876, 2
    %v996 = vrot.slane %v880, 2
    %v997 = vrot.slane %v853, 2
    %v998 = vrot.slane %v857, 2
    %v999 = vrot.slane %v861, 2
    %v1000 = vrot.slane %v865, 2
    %v1001 = vrot.slane %v869, 2
    %v1002 = vrot.slane %v873, 2
    %v1003 = vrot.slane %v877, 2
    %v1004 = vrot.slane %v881, 2
    %v1005 = vrot.slane %v854, 2
    %v1006 = vrot.slane %v858, 2
    %v1007 = vrot.slane %v862, 2
    %v1008 = vrot.slane %v866, 2
    %v1009 = vrot.slane %v870, 2
    %v1010 = vrot.slane %v874, 2
    %v1011 = vrot.slane %v878, 2
    %v1012 = vrot.slane %v882, 2
    %v1013 = vrot.slane %v855, 2
    %v1014 = vrot.slane %v859, 2
    %v1015 = vrot.slane %v863, 2
    %v1016 = vrot.slane %v867, 2
    %v1017 = vrot.slane %v871, 2
    %v1018 = vrot.slane %v875, 2
    %v1019 = vrot.slane %v879, 2
    %v1020 = vrot.slane %v883, 2
    %vm1021 = vcmp.lt.s32.totalorder %v77, 6
    %v1022 = vsel %vm1021, %v1005, %v1013
    %v1023 = vsel %vm1021, %v1006, %v1014
    %v1024 = vsel %vm1021, %v1007, %v1015
    %v1025 = vsel %vm1021, %v1008, %v1016
    %v1026 = vsel %vm1021, %v1009, %v1017
    %v1027 = vsel %vm1021, %v1010, %v1018
    %v1028 = vsel %vm1021, %v1011, %v1019
    %v1029 = vsel %vm1021, %v1012, %v1020
    %v1030 = vsel %vm1021, %v997, %v1005
    %v1031 = vsel %vm1021, %v998, %v1006
    %v1032 = vsel %vm1021, %v999, %v1007
    %v1033 = vsel %vm1021, %v1000, %v1008
    %v1034 = vsel %vm1021, %v1001, %v1009
    %v1035 = vsel %vm1021, %v1002, %v1010
    %v1036 = vsel %vm1021, %v1003, %v1011
    %v1037 = vsel %vm1021, %v1004, %v1012
    %v1038 = vsel %vm1021, %v989, %v997
    %v1039 = vsel %vm1021, %v990, %v998
    %v1040 = vsel %vm1021, %v991, %v999
    %v1041 = vsel %vm1021, %v992, %v1000
    %v1042 = vsel %vm1021, %v993, %v1001
    %v1043 = vsel %vm1021, %v994, %v1002
    %v1044 = vsel %vm1021, %v995, %v1003
    %v1045 = vsel %vm1021, %v996, %v1004
    %v1046 = vsel %vm1021, %v1013, %v989
    %v1047 = vsel %vm1021, %v1014, %v990
    %v1048 = vsel %vm1021, %v1015, %v991
    %v1049 = vsel %vm1021, %v1016, %v992
    %v1050 = vsel %vm1021, %v1017, %v993
    %v1051 = vsel %vm1021, %v1018, %v994
    %v1052 = vsel %vm1021, %v1019, %v995
    %v1053 = vsel %vm1021, %v1020, %v996
    %v1054 = vsel %vm985, %v1038, 0.0
    %v1055 = vsel %vm986, %v1030, 0.0
    %v1056 = vsel %vm987, %v1022, 0.0
    %v1057 = vsel %vm988, %v1046, 0.0
    %v1058 = vsel %vm985, %v1039, 0.0
    %v1059 = vsel %vm986, %v1031, 0.0
    %v1060 = vsel %vm987, %v1023, 0.0
    %v1061 = vsel %vm988, %v1047, 0.0
    %v1062 = vsel %vm985, %v1040, 0.0
    %v1063 = vsel %vm986, %v1032, 0.0
    %v1064 = vsel %vm987, %v1024, 0.0
    %v1065 = vsel %vm988, %v1048, 0.0
    %v1066 = vsel %vm985, %v1041, 0.0
    %v1067 = vsel %vm986, %v1033, 0.0
    %v1068 = vsel %vm987, %v1025, 0.0
    %v1069 = vsel %vm988, %v1049, 0.0
    %v1070 = vsel %vm985, %v1042, 0.0
    %v1071 = vsel %vm986, %v1034, 0.0
    %v1072 = vsel %vm987, %v1026, 0.0
    %v1073 = vsel %vm988, %v1050, 0.0
    %v1074 = vsel %vm985, %v1043, 0.0
    %v1075 = vsel %vm986, %v1035, 0.0
    %v1076 = vsel %vm987, %v1027, 0.0
    %v1077 = vsel %vm988, %v1051, 0.0
    %v1078 = vsel %vm985, %v1044, 0.0
    %v1079 = vsel %vm986, %v1036, 0.0
    %v1080 = vsel %vm987, %v1028, 0.0
    %v1081 = vsel %vm988, %v1052, 0.0
    %v1082 = vsel %vm985, %v1045, 0.0
    %v1083 = vsel %vm986, %v1037, 0.0
    %v1084 = vsel %vm987, %v1029, 0.0
    %v1085 = vsel %vm988, %v1053, 0.0
    %v1086 = vpack.c.bf16 %v954, %v953
    %v1087 = vpack.c.bf16 %v956, %v955
    %v1088 = vpack.c.bf16 %v958, %v957
    %v1089 = vpack.c.bf16 %v960, %v959
    %v1090 = vpack.c.bf16 %v962, %v961
    %v1091 = vpack.c.bf16 %v964, %v963
    %v1092 = vpack.c.bf16 %v966, %v965
    %v1093 = vpack.c.bf16 %v968, %v967
    %v1094 = vpack.c.bf16 %v970, %v969
    %v1095 = vpack.c.bf16 %v972, %v971
    %v1096 = vpack.c.bf16 %v974, %v973
    %v1097 = vpack.c.bf16 %v976, %v975
    %v1098 = vpack.c.bf16 %v978, %v977
    %v1099 = vpack.c.bf16 %v980, %v979
    %v1100 = vpack.c.bf16 %v982, %v981
    %v1101 = vpack.c.bf16 %v984, %v983
    %v1102 = vpack.c.bf16 %v853, %v852
    %v1103 = vpack.c.bf16 %v855, %v854
    %v1104 = vpack.c.bf16 %v857, %v856
    %v1105 = vpack.c.bf16 %v859, %v858
    %v1106 = vpack.c.bf16 %v861, %v860
    %v1107 = vpack.c.bf16 %v863, %v862
    %v1108 = vpack.c.bf16 %v865, %v864
    %v1109 = vpack.c.bf16 %v867, %v866
    %v1110 = vpack.c.bf16 %v869, %v868
    %v1111 = vpack.c.bf16 %v871, %v870
    %v1112 = vpack.c.bf16 %v873, %v872
    %v1113 = vpack.c.bf16 %v875, %v874
    %v1114 = vpack.c.bf16 %v877, %v876
    %v1115 = vpack.c.bf16 %v879, %v878
    %v1116 = vpack.c.bf16 %v881, %v880
    %v1117 = vpack.c.bf16 %v883, %v882
    %v1118 = vpack.c.bf16 %v1055, %v1054
    %v1119 = vpack.c.bf16 %v1057, %v1056
    %v1120 = vpack.c.bf16 %v1059, %v1058
    %v1121 = vpack.c.bf16 %v1061, %v1060
    %v1122 = vpack.c.bf16 %v1063, %v1062
    %v1123 = vpack.c.bf16 %v1065, %v1064
    %v1124 = vpack.c.bf16 %v1067, %v1066
    %v1125 = vpack.c.bf16 %v1069, %v1068
    %v1126 = vpack.c.bf16 %v1071, %v1070
    %v1127 = vpack.c.bf16 %v1073, %v1072
    %v1128 = vpack.c.bf16 %v1075, %v1074
    %v1129 = vpack.c.bf16 %v1077, %v1076
    %v1130 = vpack.c.bf16 %v1079, %v1078
    %v1131 = vpack.c.bf16 %v1081, %v1080
    %v1132 = vpack.c.bf16 %v1083, %v1082
    %v1133 = vpack.c.bf16 %v1085, %v1084
    %s1134 = scalar_lea.vmem [#allocation5], 192
    %v1135 = vld [vmem:[%s1134] sm:$0xf]
    %v1136 = vld [vmem:[%s1134 + $0x4] sm:$0xf]
    %v1137 = vld [vmem:[%s1134 + $0x8] sm:$0xf]
    %v1138 = vld [vmem:[%s1134 + $0xc] sm:$0xf]
    %v1139 = vld [vmem:[%s1134 + $0x10] sm:$0xf]
    %v1140 = vld [vmem:[%s1134 + $0x14] sm:$0xf]
    %v1141 = vld [vmem:[%s1134 + $0x18] sm:$0xf]
    %v1142 = vld [vmem:[%s1134 + $0x1c] sm:$0xf]
    %v1143 = vld [vmem:[%s1134 + $0x20] sm:$0xf]
    %v1144 = vld [vmem:[%s1134 + $0x24] sm:$0xf]
    %v1145 = vld [vmem:[%s1134 + $0x28] sm:$0xf]
    %v1146 = vld [vmem:[%s1134 + $0x2c] sm:$0xf]
    %v1147 = vld [vmem:[%s1134 + $0x30] sm:$0xf]
    %v1148 = vld [vmem:[%s1134 + $0x34] sm:$0xf]
    %v1149 = vld [vmem:[%s1134 + $0x38] sm:$0xf]
    %v1150 = vld [vmem:[%s1134 + $0x3c] sm:$0xf]
    %v1151 = vld [vmem:[%s1134 + $0x40] sm:$0xf]
    %v1152 = vld [vmem:[%s1134 + $0x44] sm:$0xf]
    %v1153 = vld [vmem:[%s1134 + $0x48] sm:$0xf]
    %v1154 = vld [vmem:[%s1134 + $0x4c] sm:$0xf]
    %v1155 = vld [vmem:[%s1134 + $0x50] sm:$0xf]
    %v1156 = vld [vmem:[%s1134 + $0x54] sm:$0xf]
    %v1157 = vld [vmem:[%s1134 + $0x58] sm:$0xf]
    %v1158 = vld [vmem:[%s1134 + $0x5c] sm:$0xf]
    %v1159 = vld [vmem:[%s1134 + $0x60] sm:$0xf]
    %v1160 = vld [vmem:[%s1134 + $0x64] sm:$0xf]
    %v1161 = vld [vmem:[%s1134 + $0x68] sm:$0xf]
    %v1162 = vld [vmem:[%s1134 + $0x6c] sm:$0xf]
    %v1163 = vld [vmem:[%s1134 + $0x70] sm:$0xf]
    %v1164 = vld [vmem:[%s1134 + $0x74] sm:$0xf]
    %v1165 = vld [vmem:[%s1134 + $0x78] sm:$0xf]
    %v1166 = vld [vmem:[%s1134 + $0x7c] sm:$0xf]
    %v1167 = vld [vmem:[%s1134 + $0x80] sm:$0xf]
    %v1168 = vld [vmem:[%s1134 + $0x84] sm:$0xf]
    %v1169 = vld [vmem:[%s1134 + $0x88] sm:$0xf]
    %v1170 = vld [vmem:[%s1134 + $0x8c] sm:$0xf]
    %v1171 = vld [vmem:[%s1134 + $0x90] sm:$0xf]
    %v1172 = vld [vmem:[%s1134 + $0x94] sm:$0xf]
    %v1173 = vld [vmem:[%s1134 + $0x98] sm:$0xf]
    %v1174 = vld [vmem:[%s1134 + $0x9c] sm:$0xf]
    %v1175 = vld [vmem:[%s1134 + $0xa0] sm:$0xf]
    %v1176 = vld [vmem:[%s1134 + $0xa4] sm:$0xf]
    %v1177 = vld [vmem:[%s1134 + $0xa8] sm:$0xf]
    %v1178 = vld [vmem:[%s1134 + $0xac] sm:$0xf]
    %v1179 = vld [vmem:[%s1134 + $0xb0] sm:$0xf]
    %v1180 = vld [vmem:[%s1134 + $0xb4] sm:$0xf]
    %v1181 = vld [vmem:[%s1134 + $0xb8] sm:$0xf]
    %v1182 = vld [vmem:[%s1134 + $0xbc] sm:$0xf]
    %s1183 = scalar_lea.vmem %s2, 1
    %v1184 = vld [vmem:[%s1183] sm:$0x1]
    %v1186 = vlaneseq
    %v1187 = vshrl.u32 %v1186, 7
    %v1188 = vsub.s32 0, %v1187
    %v1189 = vrot.slane %v1184, %v1188
    %v1239 = vunpack.c.l.b16 %v1135
    %v1240 = vunpack.c.l.b16 %v1136
    %v1241 = vunpack.c.l.b16 %v1137
    %v1242 = vunpack.c.l.b16 %v1138
    %v1243 = vunpack.c.l.b16 %v1139
    %v1244 = vunpack.c.l.b16 %v1140
    %v1245 = vunpack.c.l.b16 %v1141
    %v1246 = vunpack.c.l.b16 %v1142
    %v1247 = vunpack.c.l.b16 %v1143
    %v1248 = vunpack.c.l.b16 %v1144
    %v1249 = vunpack.c.l.b16 %v1145
    %v1250 = vunpack.c.l.b16 %v1146
    %v1251 = vunpack.c.l.b16 %v1147
    %v1252 = vunpack.c.l.b16 %v1148
    %v1253 = vunpack.c.l.b16 %v1149
    %v1254 = vunpack.c.l.b16 %v1150
    %v1255 = vunpack.c.l.b16 %v1151
    %v1256 = vunpack.c.l.b16 %v1152
    %v1257 = vunpack.c.l.b16 %v1153
    %v1258 = vunpack.c.l.b16 %v1154
    %v1259 = vunpack.c.l.b16 %v1155
    %v1260 = vunpack.c.l.b16 %v1156
    %v1261 = vunpack.c.l.b16 %v1157
    %v1262 = vunpack.c.l.b16 %v1158
    %v1263 = vunpack.c.l.b16 %v1159
    %v1264 = vunpack.c.l.b16 %v1160
    %v1265 = vunpack.c.l.b16 %v1161
    %v1266 = vunpack.c.l.b16 %v1162
    %v1267 = vunpack.c.l.b16 %v1163
    %v1268 = vunpack.c.l.b16 %v1164
    %v1269 = vunpack.c.l.b16 %v1165
    %v1270 = vunpack.c.l.b16 %v1166
    %v1271 = vunpack.c.l.b16 %v1167
    %v1272 = vunpack.c.l.b16 %v1168
    %v1273 = vunpack.c.l.b16 %v1169
    %v1274 = vunpack.c.l.b16 %v1170
    %v1275 = vunpack.c.l.b16 %v1171
    %v1276 = vunpack.c.l.b16 %v1172
    %v1277 = vunpack.c.l.b16 %v1173
    %v1278 = vunpack.c.l.b16 %v1174
    %v1279 = vunpack.c.l.b16 %v1175
    %v1280 = vunpack.c.l.b16 %v1176
    %v1281 = vunpack.c.l.b16 %v1177
    %v1282 = vunpack.c.l.b16 %v1178
    %v1283 = vunpack.c.l.b16 %v1179
    %v1284 = vunpack.c.l.b16 %v1180
    %v1285 = vunpack.c.l.b16 %v1181
    %v1286 = vunpack.c.l.b16 %v1182
    %v1287 = vpack.c.b16 %v1240, %v1239
    %v1288 = vpack.c.b16 %v1242, %v1241
    %v1289 = vpack.c.b16 %v1244, %v1243
    %v1290 = vpack.c.b16 %v1246, %v1245
    %v1291 = vpack.c.b16 %v1248, %v1247
    %v1292 = vpack.c.b16 %v1250, %v1249
    %v1293 = vpack.c.b16 %v1252, %v1251
    %v1294 = vpack.c.b16 %v1254, %v1253
    %v1295 = vpack.c.b16 %v1256, %v1255
    %v1296 = vpack.c.b16 %v1258, %v1257
    %v1297 = vpack.c.b16 %v1260, %v1259
    %v1298 = vpack.c.b16 %v1262, %v1261
    %v1299 = vpack.c.b16 %v1264, %v1263
    %v1300 = vpack.c.b16 %v1266, %v1265
    %v1301 = vpack.c.b16 %v1268, %v1267
    %v1302 = vpack.c.b16 %v1270, %v1269
    %v1303 = vpack.c.b16 %v1272, %v1271
    %v1304 = vpack.c.b16 %v1274, %v1273
    %v1305 = vpack.c.b16 %v1276, %v1275
    %v1306 = vpack.c.b16 %v1278, %v1277
    %v1307 = vpack.c.b16 %v1280, %v1279
    %v1308 = vpack.c.b16 %v1282, %v1281
    %v1309 = vpack.c.b16 %v1284, %v1283
    %v1310 = vpack.c.b16 %v1286, %v1285
    %1335 = vmatprep.subr.bf16.mxu0 0
    %1336 = vmatpush1.bf16.msra.mxu0 %v1287
    %1337 = vmatprep.subr.bf16.mxu0 0
    %1338 = vmatpush1.bf16.msra.mxu0 %v1288
    %1339 = vmatprep.subr.bf16.mxu0 0
    %1340 = vmatpush1.bf16.msra.mxu0 %v1289
    %1341 = vmatprep.subr.bf16.mxu0 0
    %1342 = vmatpush1.bf16.msra.mxu0 %v1290
    %1343 = vmatprep.subr.bf16.mxu0 0
    %1344 = vmatpush1.bf16.msra.mxu0 %v1291
    %1345 = vmatprep.subr.bf16.mxu0 0
    %1346 = vmatpush1.bf16.msra.mxu0 %v1292
    %1347 = vmatprep.subr.bf16.mxu0 0
    %1348 = vmatpush1.bf16.msra.mxu0 %v1293
    %1349 = vmatprep.subr.bf16.mxu0 0
    %1350 = vmatpush1.bf16.msra.mxu0 %v1294
    %1351 = vmatprep.subr.bf16.mxu0 0
    %1352 = vmatpush1.bf16.msra.mxu0 %v1295
    %1353 = vmatprep.subr.bf16.mxu0 0
    %1354 = vmatpush1.bf16.msra.mxu0 %v1296
    %1355 = vmatprep.subr.bf16.mxu0 0
    %1356 = vmatpush1.bf16.msra.mxu0 %v1297
    %1357 = vmatprep.subr.bf16.mxu0 0
    %1358 = vmatpush1.bf16.msra.mxu0 %v1298
    %1359 = vmatprep.subr.bf16.mxu0 0
    %1360 = vmatpush1.bf16.msra.mxu0 %v1299
    %1361 = vmatprep.subr.bf16.mxu0 0
    %1362 = vmatpush1.bf16.msra.mxu0 %v1300
    %1363 = vmatprep.subr.bf16.mxu0 0
    %1364 = vmatpush1.bf16.msra.mxu0 %v1301
    %1365 = vmatprep.subr.bf16.mxu0 0
    %1366 = vmatpush1.bf16.msra.mxu0 %v1302
    %1367 = vmatprep.mubr.bf16.mxu0 %v1102
    %1368 = vmatmul.mubr.bf16.gmra.mrb[0].mxu0 %v1086
    %v1369 = vpop.f32.mrb[0].mxu0
    %v1370 = vadd.f32 %v1189, %v1369
    %v1371 = vpop.f32.mrb[0].mxu0
    %v1372 = vpop.f32.mrb[0].mxu0
    %v1373 = vadd.f32 %v1189, %v1372
    %v1374 = vpop.f32.mrb[0].mxu0
    %1375 = vmatprep.mubr.bf16.mxu0 %v1103
    %1376 = vmatmul.mubr.bf16.gmra.mrb[0].mxu0 %v1087
    %v1377 = vpop.f32.mrb[0].mxu0
    %v1378 = vadd.f32 %v1189, %v1377
    %v1379 = vpop.f32.mrb[0].mxu0
    %v1380 = vpop.f32.mrb[0].mxu0
    %v1381 = vadd.f32 %v1189, %v1380
    %v1382 = vpop.f32.mrb[0].mxu0
    %1383 = vmatprep.mubr.bf16.mxu0 %v1104
    %1384 = vmatmul.mubr.bf16.gmra.mrb[0].mxu0 %v1088
    %v1385 = vpop.f32.mrb[0].mxu0
    %v1386 = vadd.f32 %v1189, %v1385
    %v1387 = vpop.f32.mrb[0].mxu0
    %v1388 = vpop.f32.mrb[0].mxu0
    %v1389 = vadd.f32 %v1189, %v1388
    %v1390 = vpop.f32.mrb[0].mxu0
    %1391 = vmatprep.mubr.bf16.mxu0 %v1105
    %1392 = vmatmul.mubr.bf16.gmra.mrb[0].mxu0 %v1089
    %v1393 = vpop.f32.mrb[0].mxu0
    %v1394 = vadd.f32 %v1189, %v1393
    %v1395 = vpop.f32.mrb[0].mxu0
    %v1396 = vpop.f32.mrb[0].mxu0
    %v1397 = vadd.f32 %v1189, %v1396
    %v1398 = vpop.f32.mrb[0].mxu0
    %1399 = vmatprep.mubr.bf16.mxu0 %v1106
    %1400 = vmatmul.mubr.bf16.gmra.mrb[0].mxu0 %v1090
    %v1401 = vpop.f32.mrb[0].mxu0
    %v1402 = vadd.f32 %v1189, %v1401
    %v1403 = vpop.f32.mrb[0].mxu0
    %v1404 = vpop.f32.mrb[0].mxu0
    %v1405 = vadd.f32 %v1189, %v1404
    %v1406 = vpop.f32.mrb[0].mxu0
    %1407 = vmatprep.mubr.bf16.mxu0 %v1107
    %1408 = vmatmul.mubr.bf16.gmra.mrb[0].mxu0 %v1091
    %v1409 = vpop.f32.mrb[0].mxu0
    %v1410 = vadd.f32 %v1189, %v1409
    %v1411 = vpop.f32.mrb[0].mxu0
    %v1412 = vpop.f32.mrb[0].mxu0
    %v1413 = vadd.f32 %v1189, %v1412
    %v1414 = vpop.f32.mrb[0].mxu0
    %1415 = vmatprep.mubr.bf16.mxu0 %v1108
    %1416 = vmatmul.mubr.bf16.gmra.mrb[0].mxu0 %v1092
    %v1417 = vpop.f32.mrb[0].mxu0
    %v1418 = vadd.f32 %v1189, %v1417
    %v1419 = vpop.f32.mrb[0].mxu0
    %v1420 = vpop.f32.mrb[0].mxu0
    %v1421 = vadd.f32 %v1189, %v1420
    %v1422 = vpop.f32.mrb[0].mxu0
    %1423 = vmatprep.mubr.bf16.mxu0 %v1109
    %1424 = vmatmul.mubr.bf16.gmra.mrb[0].mxu0 %v1093
    %v1425 = vpop.f32.mrb[0].mxu0
    %v1426 = vadd.f32 %v1189, %v1425
    %v1427 = vpop.f32.mrb[0].mxu0
    %v1428 = vpop.f32.mrb[0].mxu0
    %v1429 = vadd.f32 %v1189, %v1428
    %v1430 = vpop.f32.mrb[0].mxu0
    %1431 = vmatprep.mubr.bf16.mxu0 %v1110
    %1432 = vmatmul.mubr.bf16.gmra.mrb[0].mxu0 %v1094
    %v1433 = vpop.f32.mrb[0].mxu0
    %v1434 = vadd.f32 %v1189, %v1433
    %v1435 = vpop.f32.mrb[0].mxu0
    %v1436 = vpop.f32.mrb[0].mxu0
    %v1437 = vadd.f32 %v1189, %v1436
    %v1438 = vpop.f32.mrb[0].mxu0
    %1439 = vmatprep.mubr.bf16.mxu0 %v1111
    %1440 = vmatmul.mubr.bf16.gmra.mrb[0].mxu0 %v1095
    %v1441 = vpop.f32.mrb[0].mxu0
    %v1442 = vadd.f32 %v1189, %v1441
    %v1443 = vpop.f32.mrb[0].mxu0
    %v1444 = vpop.f32.mrb[0].mxu0
    %v1445 = vadd.f32 %v1189, %v1444
    %v1446 = vpop.f32.mrb[0].mxu0
    %1447 = vmatprep.mubr.bf16.mxu0 %v1112
    %1448 = vmatmul.mubr.bf16.gmra.mrb[0].mxu0 %v1096
    %v1449 = vpop.f32.mrb[0].mxu0
    %v1450 = vadd.f32 %v1189, %v1449
    %v1451 = vpop.f32.mrb[0].mxu0
    %v1452 = vpop.f32.mrb[0].mxu0
    %v1453 = vadd.f32 %v1189, %v1452
    %v1454 = vpop.f32.mrb[0].mxu0
    %1455 = vmatprep.mubr.bf16.mxu0 %v1113
    %1456 = vmatmul.mubr.bf16.gmra.mrb[0].mxu0 %v1097
    %v1457 = vpop.f32.mrb[0].mxu0
    %v1458 = vadd.f32 %v1189, %v1457
    %v1459 = vpop.f32.mrb[0].mxu0
    %v1460 = vpop.f32.mrb[0].mxu0
    %v1461 = vadd.f32 %v1189, %v1460
    %v1462 = vpop.f32.mrb[0].mxu0
    %1463 = vmatprep.mubr.bf16.mxu0 %v1114
    %1464 = vmatmul.mubr.bf16.gmra.mrb[0].mxu0 %v1098
    %v1465 = vpop.f32.mrb[0].mxu0
    %v1466 = vadd.f32 %v1189, %v1465
    %v1467 = vpop.f32.mrb[0].mxu0
    %v1468 = vpop.f32.mrb[0].mxu0
    %v1469 = vadd.f32 %v1189, %v1468
    %v1470 = vpop.f32.mrb[0].mxu0
    %1471 = vmatprep.mubr.bf16.mxu0 %v1115
    %1472 = vmatmul.mubr.bf16.gmra.mrb[0].mxu0 %v1099
    %v1473 = vpop.f32.mrb[0].mxu0
    %v1474 = vadd.f32 %v1189, %v1473
    %v1475 = vpop.f32.mrb[0].mxu0
    %v1476 = vpop.f32.mrb[0].mxu0
    %v1477 = vadd.f32 %v1189, %v1476
    %v1478 = vpop.f32.mrb[0].mxu0
    %1479 = vmatprep.mubr.bf16.mxu0 %v1116
    %1480 = vmatmul.mubr.bf16.gmra.mrb[0].mxu0 %v1100
    %v1481 = vpop.f32.mrb[0].mxu0
    %v1482 = vadd.f32 %v1189, %v1481
    %v1483 = vpop.f32.mrb[0].mxu0
    %v1484 = vpop.f32.mrb[0].mxu0
    %v1485 = vadd.f32 %v1189, %v1484
    %v1486 = vpop.f32.mrb[0].mxu0
    %1487 = vmatprep.mubr.bf16.mxu0 %v1117
    %1488 = vmatmul.mubr.bf16.gmra.mrb[0].mxu0 %v1101
    %v1489 = vpop.f32.mrb[0].mxu0
    %v1490 = vadd.f32 %v1189, %v1489
    %v1491 = vpop.f32.mrb[0].mxu0
    %v1492 = vpop.f32.mrb[0].mxu0
    %v1493 = vadd.f32 %v1189, %v1492
    %v1494 = vpop.f32.mrb[0].mxu0
    %1495 = vdwg.mxu0
    %1496 = vmatprep.subr.bf16.mxu0 0
    %1497 = vmatpush1.bf16.msra.mxu0 %v1303
    %1498 = vmatprep.subr.bf16.mxu0 0
    %1499 = vmatpush1.bf16.msra.mxu0 %v1304
    %1500 = vmatprep.subr.bf16.mxu0 0
    %1501 = vmatpush1.bf16.msra.mxu0 %v1305
    %1502 = vmatprep.subr.bf16.mxu0 0
    %1503 = vmatpush1.bf16.msra.mxu0 %v1306
    %1504 = vmatprep.subr.bf16.mxu0 0
    %1505 = vmatpush1.bf16.msra.mxu0 %v1307
    %1506 = vmatprep.subr.bf16.mxu0 0
    %1507 = vmatpush1.bf16.msra.mxu0 %v1308
    %1508 = vmatprep.subr.bf16.mxu0 0
    %1509 = vmatpush1.bf16.msra.mxu0 %v1309
    %1510 = vmatprep.subr.bf16.mxu0 0
    %1511 = vmatpush1.bf16.msra.mxu0 %v1310
    %1512 = vmatprep.subr.bf16.mxu0 0
    %1513 = vmatpush1.bf16.msra.mxu0 0
    %1514 = vmatprep.subr.bf16.mxu0 0
    %1515 = vmatpush1.bf16.msra.mxu0 0
    %1516 = vmatprep.subr.bf16.mxu0 0
    %1517 = vmatpush1.bf16.msra.mxu0 0
    %1518 = vmatprep.subr.bf16.mxu0 0
    %1519 = vmatpush1.bf16.msra.mxu0 0
    %1520 = vmatprep.subr.bf16.mxu0 0
    %1521 = vmatpush1.bf16.msra.mxu0 0
    %1522 = vmatprep.subr.bf16.mxu0 0
    %1523 = vmatpush1.bf16.msra.mxu0 0
    %1524 = vmatprep.subr.bf16.mxu0 0
    %1525 = vmatpush1.bf16.msra.mxu0 0
    %1526 = vmatprep.subr.bf16.mxu0 0
    %1527 = vmatpush1.bf16.msra.mxu0 0
    %1528 = vmatprep.mubr.bf16.mxu0 0
    %1529 = vmatmul.mubr.bf16.gmra.mrb[0].mxu0 %v1118
    %v1530 = vpop.f32.mrb[0].mxu0
    %v1531 = vadd.f32 %v1370, %v1530
    %v1532 = vpop.f32.mrb[0].mxu0
    %v1533 = vpop.f32.mrb[0].mxu0
    %v1534 = vadd.f32 %v1373, %v1533
    %v1535 = vpop.f32.mrb[0].mxu0
    %1536 = vmatprep.mubr.bf16.mxu0 0
    %1537 = vmatmul.mubr.bf16.gmra.mrb[0].mxu0 %v1119
    %v1538 = vpop.f32.mrb[0].mxu0
    %v1539 = vadd.f32 %v1378, %v1538
    %v1540 = vpop.f32.mrb[0].mxu0
    %v1541 = vpop.f32.mrb[0].mxu0
    %v1542 = vadd.f32 %v1381, %v1541
    %v1543 = vpop.f32.mrb[0].mxu0
    %1544 = vmatprep.mubr.bf16.mxu0 0
    %1545 = vmatmul.mubr.bf16.gmra.mrb[0].mxu0 %v1120
    %v1546 = vpop.f32.mrb[0].mxu0
    %v1547 = vadd.f32 %v1386, %v1546
    %v1548 = vpop.f32.mrb[0].mxu0
    %v1549 = vpop.f32.mrb[0].mxu0
    %v1550 = vadd.f32 %v1389, %v1549
    %v1551 = vpop.f32.mrb[0].mxu0
    %1552 = vmatprep.mubr.bf16.mxu0 0
    %1553 = vmatmul.mubr.bf16.gmra.mrb[0].mxu0 %v1121
    %v1554 = vpop.f32.mrb[0].mxu0
    %v1555 = vadd.f32 %v1394, %v1554
    %v1556 = vpop.f32.mrb[0].mxu0
    %v1557 = vpop.f32.mrb[0].mxu0
    %v1558 = vadd.f32 %v1397, %v1557
    %v1559 = vpop.f32.mrb[0].mxu0
    %1560 = vmatprep.mubr.bf16.mxu0 0
    %1561 = vmatmul.mubr.bf16.gmra.mrb[0].mxu0 %v1122
    %v1562 = vpop.f32.mrb[0].mxu0
    %v1563 = vadd.f32 %v1402, %v1562
    %v1564 = vpop.f32.mrb[0].mxu0
    %v1565 = vpop.f32.mrb[0].mxu0
    %v1566 = vadd.f32 %v1405, %v1565
    %v1567 = vpop.f32.mrb[0].mxu0
    %1568 = vmatprep.mubr.bf16.mxu0 0
    %1569 = vmatmul.mubr.bf16.gmra.mrb[0].mxu0 %v1123
    %v1570 = vpop.f32.mrb[0].mxu0
    %v1571 = vadd.f32 %v1410, %v1570
    %v1572 = vpop.f32.mrb[0].mxu0
    %v1573 = vpop.f32.mrb[0].mxu0
    %v1574 = vadd.f32 %v1413, %v1573
    %v1575 = vpop.f32.mrb[0].mxu0
    %1576 = vmatprep.mubr.bf16.mxu0 0
    %1577 = vmatmul.mubr.bf16.gmra.mrb[0].mxu0 %v1124
    %v1578 = vpop.f32.mrb[0].mxu0
    %v1579 = vadd.f32 %v1418, %v1578
    %v1580 = vpop.f32.mrb[0].mxu0
    %v1581 = vpop.f32.mrb[0].mxu0
    %v1582 = vadd.f32 %v1421, %v1581
    %v1583 = vpop.f32.mrb[0].mxu0
    %1584 = vmatprep.mubr.bf16.mxu0 0
    %1585 = vmatmul.mubr.bf16.gmra.mrb[0].mxu0 %v1125
    %v1586 = vpop.f32.mrb[0].mxu0
    %v1587 = vadd.f32 %v1426, %v1586
    %v1588 = vpop.f32.mrb[0].mxu0
    %v1589 = vpop.f32.mrb[0].mxu0
    %v1590 = vadd.f32 %v1429, %v1589
    %v1591 = vpop.f32.mrb[0].mxu0
    %1592 = vmatprep.mubr.bf16.mxu0 0
    %1593 = vmatmul.mubr.bf16.gmra.mrb[0].mxu0 %v1126
    %v1594 = vpop.f32.mrb[0].mxu0
    %v1595 = vadd.f32 %v1434, %v1594
    %v1596 = vpop.f32.mrb[0].mxu0
    %v1597 = vpop.f32.mrb[0].mxu0
    %v1598 = vadd.f32 %v1437, %v1597
    %v1599 = vpop.f32.mrb[0].mxu0
    %1600 = vmatprep.mubr.bf16.mxu0 0
    %1601 = vmatmul.mubr.bf16.gmra.mrb[0].mxu0 %v1127
    %v1602 = vpop.f32.mrb[0].mxu0
    %v1603 = vadd.f32 %v1442, %v1602
    %v1604 = vpop.f32.mrb[0].mxu0
    %v1605 = vpop.f32.mrb[0].mxu0
    %v1606 = vadd.f32 %v1445, %v1605
    %v1607 = vpop.f32.mrb[0].mxu0
    %1608 = vmatprep.mubr.bf16.mxu0 0
    %1609 = vmatmul.mubr.bf16.gmra.mrb[0].mxu0 %v1128
    %v1610 = vpop.f32.mrb[0].mxu0
    %v1611 = vadd.f32 %v1450, %v1610
    %v1612 = vpop.f32.mrb[0].mxu0
    %v1613 = vpop.f32.mrb[0].mxu0
    %v1614 = vadd.f32 %v1453, %v1613
    %v1615 = vpop.f32.mrb[0].mxu0
    %1616 = vmatprep.mubr.bf16.mxu0 0
    %1617 = vmatmul.mubr.bf16.gmra.mrb[0].mxu0 %v1129
    %v1618 = vpop.f32.mrb[0].mxu0
    %v1619 = vadd.f32 %v1458, %v1618
    %v1620 = vpop.f32.mrb[0].mxu0
    %v1621 = vpop.f32.mrb[0].mxu0
    %v1622 = vadd.f32 %v1461, %v1621
    %v1623 = vpop.f32.mrb[0].mxu0
    %1624 = vmatprep.mubr.bf16.mxu0 0
    %1625 = vmatmul.mubr.bf16.gmra.mrb[0].mxu0 %v1130
    %v1626 = vpop.f32.mrb[0].mxu0
    %v1627 = vadd.f32 %v1466, %v1626
    %v1628 = vpop.f32.mrb[0].mxu0
    %v1629 = vpop.f32.mrb[0].mxu0
    %v1630 = vadd.f32 %v1469, %v1629
    %v1631 = vpop.f32.mrb[0].mxu0
    %1632 = vmatprep.mubr.bf16.mxu0 0
    %1633 = vmatmul.mubr.bf16.gmra.mrb[0].mxu0 %v1131
    %v1634 = vpop.f32.mrb[0].mxu0
    %v1635 = vadd.f32 %v1474, %v1634
    %v1636 = vpop.f32.mrb[0].mxu0
    %v1637 = vpop.f32.mrb[0].mxu0
    %v1638 = vadd.f32 %v1477, %v1637
    %v1639 = vpop.f32.mrb[0].mxu0
    %1640 = vmatprep.mubr.bf16.mxu0 0
    %1641 = vmatmul.mubr.bf16.gmra.mrb[0].mxu0 %v1132
    %v1642 = vpop.f32.mrb[0].mxu0
    %v1643 = vadd.f32 %v1482, %v1642
    %v1644 = vpop.f32.mrb[0].mxu0
    %v1645 = vpop.f32.mrb[0].mxu0
    %v1646 = vadd.f32 %v1485, %v1645
    %v1647 = vpop.f32.mrb[0].mxu0
    %1648 = vmatprep.mubr.bf16.mxu0 0
    %1649 = vmatmul.mubr.bf16.gmra.mrb[0].mxu0 %v1133
    %v1650 = vpop.f32.mrb[0].mxu0
    %v1651 = vadd.f32 %v1490, %v1650
    %v1652 = vpop.f32.mrb[0].mxu0
    %v1653 = vpop.f32.mrb[0].mxu0
    %v1654 = vadd.f32 %v1493, %v1653
    %v1655 = vpop.f32.mrb[0].mxu0
    %1656 = vdwg.mxu0
    %v1657 = vmax.f32 %v1531, 0.0
    %v1658 = vmax.f32 %v1534, 0.0
    %v1659 = vmax.f32 %v1539, 0.0
    %v1660 = vmax.f32 %v1542, 0.0
    %v1661 = vmax.f32 %v1547, 0.0
    %v1662 = vmax.f32 %v1550, 0.0
    %v1663 = vmax.f32 %v1555, 0.0
    %v1664 = vmax.f32 %v1558, 0.0
    %v1665 = vmax.f32 %v1563, 0.0
    %v1666 = vmax.f32 %v1566, 0.0
    %v1667 = vmax.f32 %v1571, 0.0
    %v1668 = vmax.f32 %v1574, 0.0
    %v1669 = vmax.f32 %v1579, 0.0
    %v1670 = vmax.f32 %v1582, 0.0
    %v1671 = vmax.f32 %v1587, 0.0
    %v1672 = vmax.f32 %v1590, 0.0
    %v1673 = vmax.f32 %v1595, 0.0
    %v1674 = vmax.f32 %v1598, 0.0
    %v1675 = vmax.f32 %v1603, 0.0
    %v1676 = vmax.f32 %v1606, 0.0
    %v1677 = vmax.f32 %v1611, 0.0
    %v1678 = vmax.f32 %v1614, 0.0
    %v1679 = vmax.f32 %v1619, 0.0
    %v1680 = vmax.f32 %v1622, 0.0
    %v1681 = vmax.f32 %v1627, 0.0
    %v1682 = vmax.f32 %v1630, 0.0
    %v1683 = vmax.f32 %v1635, 0.0
    %v1684 = vmax.f32 %v1638, 0.0
    %v1685 = vmax.f32 %v1643, 0.0
    %v1686 = vmax.f32 %v1646, 0.0
    %v1687 = vmax.f32 %v1651, 0.0
    %v1688 = vmax.f32 %v1654, 0.0
    %vm1689 = vcmp.ge.s32.totalorder %v77, 4
    %vm1690 = vcmp.ge.s32.totalorder %v78, 4
    %vm1691 = vcmp.ge.s32.totalorder %v79, 4
    %vm1692 = vcmp.ge.s32.totalorder %v80, 4
    %v1693 = vrot.slane %v1657, 4
    %v1694 = vrot.slane %v1661, 4
    %v1695 = vrot.slane %v1665, 4
    %v1696 = vrot.slane %v1669, 4
    %v1697 = vrot.slane %v1673, 4
    %v1698 = vrot.slane %v1677, 4
    %v1699 = vrot.slane %v1681, 4
    %v1700 = vrot.slane %v1685, 4
    %v1701 = vrot.slane %v1658, 4
    %v1702 = vrot.slane %v1662, 4
    %v1703 = vrot.slane %v1666, 4
    %v1704 = vrot.slane %v1670, 4
    %v1705 = vrot.slane %v1674, 4
    %v1706 = vrot.slane %v1678, 4
    %v1707 = vrot.slane %v1682, 4
    %v1708 = vrot.slane %v1686, 4
    %v1709 = vrot.slane %v1659, 4
    %v1710 = vrot.slane %v1663, 4
    %v1711 = vrot.slane %v1667, 4
    %v1712 = vrot.slane %v1671, 4
    %v1713 = vrot.slane %v1675, 4
    %v1714 = vrot.slane %v1679, 4
    %v1715 = vrot.slane %v1683, 4
    %v1716 = vrot.slane %v1687, 4
    %v1717 = vrot.slane %v1660, 4
    %v1718 = vrot.slane %v1664, 4
    %v1719 = vrot.slane %v1668, 4
    %v1720 = vrot.slane %v1672, 4
    %v1721 = vrot.slane %v1676, 4
    %v1722 = vrot.slane %v1680, 4
    %v1723 = vrot.slane %v1684, 4
    %v1724 = vrot.slane %v1688, 4
    %vm1725 = vcmp.lt.s32.totalorder %v77, 4
    %v1726 = vsel %vm1725, %v1709, %v1717
    %v1727 = vsel %vm1725, %v1710, %v1718
    %v1728 = vsel %vm1725, %v1711, %v1719
    %v1729 = vsel %vm1725, %v1712, %v1720
    %v1730 = vsel %vm1725, %v1713, %v1721
    %v1731 = vsel %vm1725, %v1714, %v1722
    %v1732 = vsel %vm1725, %v1715, %v1723
    %v1733 = vsel %vm1725, %v1716, %v1724
    %v1734 = vsel %vm1725, %v1701, %v1709
    %v1735 = vsel %vm1725, %v1702, %v1710
    %v1736 = vsel %vm1725, %v1703, %v1711
    %v1737 = vsel %vm1725, %v1704, %v1712
    %v1738 = vsel %vm1725, %v1705, %v1713
    %v1739 = vsel %vm1725, %v1706, %v1714
    %v1740 = vsel %vm1725, %v1707, %v1715
    %v1741 = vsel %vm1725, %v1708, %v1716
    %v1742 = vsel %vm1725, %v1693, %v1701
    %v1743 = vsel %vm1725, %v1694, %v1702
    %v1744 = vsel %vm1725, %v1695, %v1703
    %v1745 = vsel %vm1725, %v1696, %v1704
    %v1746 = vsel %vm1725, %v1697, %v1705
    %v1747 = vsel %vm1725, %v1698, %v1706
    %v1748 = vsel %vm1725, %v1699, %v1707
    %v1749 = vsel %vm1725, %v1700, %v1708
    %v1750 = vsel %vm1725, %v1717, %v1693
    %v1751 = vsel %vm1725, %v1718, %v1694
    %v1752 = vsel %vm1725, %v1719, %v1695
    %v1753 = vsel %vm1725, %v1720, %v1696
    %v1754 = vsel %vm1725, %v1721, %v1697
    %v1755 = vsel %vm1725, %v1722, %v1698
    %v1756 = vsel %vm1725, %v1723, %v1699
    %v1757 = vsel %vm1725, %v1724, %v1700
    %v1758 = vsel %vm1689, %v1750, 0.0
    %v1759 = vsel %vm1690, %v1742, 0.0
    %v1760 = vsel %vm1691, %v1734, 0.0
    %v1761 = vsel %vm1692, %v1726, 0.0
    %v1762 = vsel %vm1689, %v1751, 0.0
    %v1763 = vsel %vm1690, %v1743, 0.0
    %v1764 = vsel %vm1691, %v1735, 0.0
    %v1765 = vsel %vm1692, %v1727, 0.0
    %v1766 = vsel %vm1689, %v1752, 0.0
    %v1767 = vsel %vm1690, %v1744, 0.0
    %v1768 = vsel %vm1691, %v1736, 0.0
    %v1769 = vsel %vm1692, %v1728, 0.0
    %v1770 = vsel %vm1689, %v1753, 0.0
    %v1771 = vsel %vm1690, %v1745, 0.0
    %v1772 = vsel %vm1691, %v1737, 0.0
    %v1773 = vsel %vm1692, %v1729, 0.0
    %v1774 = vsel %vm1689, %v1754, 0.0
    %v1775 = vsel %vm1690, %v1746, 0.0
    %v1776 = vsel %vm1691, %v1738, 0.0
    %v1777 = vsel %vm1692, %v1730, 0.0
    %v1778 = vsel %vm1689, %v1755, 0.0
    %v1779 = vsel %vm1690, %v1747, 0.0
    %v1780 = vsel %vm1691, %v1739, 0.0
    %v1781 = vsel %vm1692, %v1731, 0.0
    %v1782 = vsel %vm1689, %v1756, 0.0
    %v1783 = vsel %vm1690, %v1748, 0.0
    %v1784 = vsel %vm1691, %v1740, 0.0
    %v1785 = vsel %vm1692, %v1732, 0.0
    %v1786 = vsel %vm1689, %v1757, 0.0
    %v1787 = vsel %vm1690, %v1749, 0.0
    %v1788 = vsel %vm1691, %v1741, 0.0
    %v1789 = vsel %vm1692, %v1733, 0.0
    %vm1790 = vcmp.lt.s32.totalorder %v77, 28
    %vm1791 = vcmp.lt.s32.totalorder %v78, 28
    %vm1792 = vcmp.lt.s32.totalorder %v79, 28
    %vm1793 = vcmp.lt.s32.totalorder %v80, 28
    %v1794 = vsel %vm1790, %v1742, 0.0
    %v1795 = vsel %vm1791, %v1734, 0.0
    %v1796 = vsel %vm1792, %v1726, 0.0
    %v1797 = vsel %vm1793, %v1750, 0.0
    %v1798 = vsel %vm1790, %v1743, 0.0
    %v1799 = vsel %vm1791, %v1735, 0.0
    %v1800 = vsel %vm1792, %v1727, 0.0
    %v1801 = vsel %vm1793, %v1751, 0.0
    %v1802 = vsel %vm1790, %v1744, 0.0
    %v1803 = vsel %vm1791, %v1736, 0.0
    %v1804 = vsel %vm1792, %v1728, 0.0
    %v1805 = vsel %vm1793, %v1752, 0.0
    %v1806 = vsel %vm1790, %v1745, 0.0
    %v1807 = vsel %vm1791, %v1737, 0.0
    %v1808 = vsel %vm1792, %v1729, 0.0
    %v1809 = vsel %vm1793, %v1753, 0.0
    %v1810 = vsel %vm1790, %v1746, 0.0
    %v1811 = vsel %vm1791, %v1738, 0.0
    %v1812 = vsel %vm1792, %v1730, 0.0
    %v1813 = vsel %vm1793, %v1754, 0.0
    %v1814 = vsel %vm1790, %v1747, 0.0
    %v1815 = vsel %vm1791, %v1739, 0.0
    %v1816 = vsel %vm1792, %v1731, 0.0
    %v1817 = vsel %vm1793, %v1755, 0.0
    %v1818 = vsel %vm1790, %v1748, 0.0
    %v1819 = vsel %vm1791, %v1740, 0.0
    %v1820 = vsel %vm1792, %v1732, 0.0
    %v1821 = vsel %vm1793, %v1756, 0.0
    %v1822 = vsel %vm1790, %v1749, 0.0
    %v1823 = vsel %vm1791, %v1741, 0.0
    %v1824 = vsel %vm1792, %v1733, 0.0
    %v1825 = vsel %vm1793, %v1757, 0.0
    %v1826 = vpack.c.bf16 %v1759, %v1758
    %v1827 = vpack.c.bf16 %v1761, %v1760
    %v1828 = vpack.c.bf16 %v1763, %v1762
    %v1829 = vpack.c.bf16 %v1765, %v1764
    %v1830 = vpack.c.bf16 %v1767, %v1766
    %v1831 = vpack.c.bf16 %v1769, %v1768
    %v1832 = vpack.c.bf16 %v1771, %v1770
    %v1833 = vpack.c.bf16 %v1773, %v1772
    %v1834 = vpack.c.bf16 %v1775, %v1774
    %v1835 = vpack.c.bf16 %v1777, %v1776
    %v1836 = vpack.c.bf16 %v1779, %v1778
    %v1837 = vpack.c.bf16 %v1781, %v1780
    %v1838 = vpack.c.bf16 %v1783, %v1782
    %v1839 = vpack.c.bf16 %v1785, %v1784
    %v1840 = vpack.c.bf16 %v1787, %v1786
    %v1841 = vpack.c.bf16 %v1789, %v1788
    %v1842 = vpack.c.bf16 %v1658, %v1657
    %v1843 = vpack.c.bf16 %v1660, %v1659
    %v1844 = vpack.c.bf16 %v1662, %v1661
    %v1845 = vpack.c.bf16 %v1664, %v1663
    %v1846 = vpack.c.bf16 %v1666, %v1665
    %v1847 = vpack.c.bf16 %v1668, %v1667
    %v1848 = vpack.c.bf16 %v1670, %v1669
    %v1849 = vpack.c.bf16 %v1672, %v1671
    %v1850 = vpack.c.bf16 %v1674, %v1673
    %v1851 = vpack.c.bf16 %v1676, %v1675
    %v1852 = vpack.c.bf16 %v1678, %v1677
    %v1853 = vpack.c.bf16 %v1680, %v1679
    %v1854 = vpack.c.bf16 %v1682, %v1681
    %v1855 = vpack.c.bf16 %v1684, %v1683
    %v1856 = vpack.c.bf16 %v1686, %v1685
    %v1857 = vpack.c.bf16 %v1688, %v1687
    %v1858 = vpack.c.bf16 %v1795, %v1794
    %v1859 = vpack.c.bf16 %v1797, %v1796
    %v1860 = vpack.c.bf16 %v1799, %v1798
    %v1861 = vpack.c.bf16 %v1801, %v1800
    %v1862 = vpack.c.bf16 %v1803, %v1802
    %v1863 = vpack.c.bf16 %v1805, %v1804
    %v1864 = vpack.c.bf16 %v1807, %v1806
    %v1865 = vpack.c.bf16 %v1809, %v1808
    %v1866 = vpack.c.bf16 %v1811, %v1810
    %v1867 = vpack.c.bf16 %v1813, %v1812
    %v1868 = vpack.c.bf16 %v1815, %v1814
    %v1869 = vpack.c.bf16 %v1817, %v1816
    %v1870 = vpack.c.bf16 %v1819, %v1818
    %v1871 = vpack.c.bf16 %v1821, %v1820
    %v1872 = vpack.c.bf16 %v1823, %v1822
    %v1873 = vpack.c.bf16 %v1825, %v1824
    %s1874 = scalar_lea.vmem [#allocation5], 384
    %v1875 = vld [vmem:[%s1874] sm:$0xf]
    %v1876 = vld [vmem:[%s1874 + $0x4] sm:$0xf]
    %v1877 = vld [vmem:[%s1874 + $0x8] sm:$0xf]
    %v1878 = vld [vmem:[%s1874 + $0xc] sm:$0xf]
    %v1879 = vld [vmem:[%s1874 + $0x10] sm:$0xf]
    %v1880 = vld [vmem:[%s1874 + $0x14] sm:$0xf]
    %v1881 = vld [vmem:[%s1874 + $0x18] sm:$0xf]
    %v1882 = vld [vmem:[%s1874 + $0x1c] sm:$0xf]
    %v1883 = vld [vmem:[%s1874 + $0x20] sm:$0xf]
    %v1884 = vld [vmem:[%s1874 + $0x24] sm:$0xf]
    %v1885 = vld [vmem:[%s1874 + $0x28] sm:$0xf]
    %v1886 = vld [vmem:[%s1874 + $0x2c] sm:$0xf]
    %v1887 = vld [vmem:[%s1874 + $0x30] sm:$0xf]
    %v1888 = vld [vmem:[%s1874 + $0x34] sm:$0xf]
    %v1889 = vld [vmem:[%s1874 + $0x38] sm:$0xf]
    %v1890 = vld [vmem:[%s1874 + $0x3c] sm:$0xf]
    %v1891 = vld [vmem:[%s1874 + $0x40] sm:$0xf]
    %v1892 = vld [vmem:[%s1874 + $0x44] sm:$0xf]
    %v1893 = vld [vmem:[%s1874 + $0x48] sm:$0xf]
    %v1894 = vld [vmem:[%s1874 + $0x4c] sm:$0xf]
    %v1895 = vld [vmem:[%s1874 + $0x50] sm:$0xf]
    %v1896 = vld [vmem:[%s1874 + $0x54] sm:$0xf]
    %v1897 = vld [vmem:[%s1874 + $0x58] sm:$0xf]
    %v1898 = vld [vmem:[%s1874 + $0x5c] sm:$0xf]
    %v1899 = vld [vmem:[%s1874 + $0x60] sm:$0xf]
    %v1900 = vld [vmem:[%s1874 + $0x64] sm:$0xf]
    %v1901 = vld [vmem:[%s1874 + $0x68] sm:$0xf]
    %v1902 = vld [vmem:[%s1874 + $0x6c] sm:$0xf]
    %v1903 = vld [vmem:[%s1874 + $0x70] sm:$0xf]
    %v1904 = vld [vmem:[%s1874 + $0x74] sm:$0xf]
    %v1905 = vld [vmem:[%s1874 + $0x78] sm:$0xf]
    %v1906 = vld [vmem:[%s1874 + $0x7c] sm:$0xf]
    %v1907 = vld [vmem:[%s1874 + $0x80] sm:$0xf]
    %v1908 = vld [vmem:[%s1874 + $0x84] sm:$0xf]
    %v1909 = vld [vmem:[%s1874 + $0x88] sm:$0xf]
    %v1910 = vld [vmem:[%s1874 + $0x8c] sm:$0xf]
    %v1911 = vld [vmem:[%s1874 + $0x90] sm:$0xf]
    %v1912 = vld [vmem:[%s1874 + $0x94] sm:$0xf]
    %v1913 = vld [vmem:[%s1874 + $0x98] sm:$0xf]
    %v1914 = vld [vmem:[%s1874 + $0x9c] sm:$0xf]
    %v1915 = vld [vmem:[%s1874 + $0xa0] sm:$0xf]
    %v1916 = vld [vmem:[%s1874 + $0xa4] sm:$0xf]
    %v1917 = vld [vmem:[%s1874 + $0xa8] sm:$0xf]
    %v1918 = vld [vmem:[%s1874 + $0xac] sm:$0xf]
    %v1919 = vld [vmem:[%s1874 + $0xb0] sm:$0xf]
    %v1920 = vld [vmem:[%s1874 + $0xb4] sm:$0xf]
    %v1921 = vld [vmem:[%s1874 + $0xb8] sm:$0xf]
    %v1922 = vld [vmem:[%s1874 + $0xbc] sm:$0xf]
    %s1923 = scalar_lea.vmem %s2, 2
    %v1924 = vld [vmem:[%s1923] sm:$0x1]
    %v1926 = vlaneseq
    %v1927 = vshrl.u32 %v1926, 7
    %v1928 = vsub.s32 0, %v1927
    %v1929 = vrot.slane %v1924, %v1928
    %v1979 = vunpack.c.l.b16 %v1875
    %v1980 = vunpack.c.l.b16 %v1876
    %v1981 = vunpack.c.l.b16 %v1877
    %v1982 = vunpack.c.l.b16 %v1878
    %v1983 = vunpack.c.l.b16 %v1879
    %v1984 = vunpack.c.l.b16 %v1880
    %v1985 = vunpack.c.l.b16 %v1881
    %v1986 = vunpack.c.l.b16 %v1882
    %v1987 = vunpack.c.l.b16 %v1883
    %v1988 = vunpack.c.l.b16 %v1884
    %v1989 = vunpack.c.l.b16 %v1885
    %v1990 = vunpack.c.l.b16 %v1886
    %v1991 = vunpack.c.l.b16 %v1887
    %v1992 = vunpack.c.l.b16 %v1888
    %v1993 = vunpack.c.l.b16 %v1889
    %v1994 = vunpack.c.l.b16 %v1890
    %v1995 = vunpack.c.l.b16 %v1891
    %v1996 = vunpack.c.l.b16 %v1892
    %v1997 = vunpack.c.l.b16 %v1893
    %v1998 = vunpack.c.l.b16 %v1894
    %v1999 = vunpack.c.l.b16 %v1895
    %v2000 = vunpack.c.l.b16 %v1896
    %v2001 = vunpack.c.l.b16 %v1897
    %v2002 = vunpack.c.l.b16 %v1898
    %v2003 = vunpack.c.l.b16 %v1899
    %v2004 = vunpack.c.l.b16 %v1900
    %v2005 = vunpack.c.l.b16 %v1901
    %v2006 = vunpack.c.l.b16 %v1902
    %v2007 = vunpack.c.l.b16 %v1903
    %v2008 = vunpack.c.l.b16 %v1904
    %v2009 = vunpack.c.l.b16 %v1905
    %v2010 = vunpack.c.l.b16 %v1906
    %v2011 = vunpack.c.l.b16 %v1907
    %v2012 = vunpack.c.l.b16 %v1908
    %v2013 = vunpack.c.l.b16 %v1909
    %v2014 = vunpack.c.l.b16 %v1910
    %v2015 = vunpack.c.l.b16 %v1911
    %v2016 = vunpack.c.l.b16 %v1912
    %v2017 = vunpack.c.l.b16 %v1913
    %v2018 = vunpack.c.l.b16 %v1914
    %v2019 = vunpack.c.l.b16 %v1915
    %v2020 = vunpack.c.l.b16 %v1916
    %v2021 = vunpack.c.l.b16 %v1917
    %v2022 = vunpack.c.l.b16 %v1918
    %v2023 = vunpack.c.l.b16 %v1919
    %v2024 = vunpack.c.l.b16 %v1920
    %v2025 = vunpack.c.l.b16 %v1921
    %v2026 = vunpack.c.l.b16 %v1922
    %v2027 = vpack.c.b16 %v1980, %v1979
    %v2028 = vpack.c.b16 %v1982, %v1981
    %v2029 = vpack.c.b16 %v1984, %v1983
    %v2030 = vpack.c.b16 %v1986, %v1985
    %v2031 = vpack.c.b16 %v1988, %v1987
    %v2032 = vpack.c.b16 %v1990, %v1989
    %v2033 = vpack.c.b16 %v1992, %v1991
    %v2034 = vpack.c.b16 %v1994, %v1993
    %v2035 = vpack.c.b16 %v1996, %v1995
    %v2036 = vpack.c.b16 %v1998, %v1997
    %v2037 = vpack.c.b16 %v2000, %v1999
    %v2038 = vpack.c.b16 %v2002, %v2001
    %v2039 = vpack.c.b16 %v2004, %v2003
    %v2040 = vpack.c.b16 %v2006, %v2005
    %v2041 = vpack.c.b16 %v2008, %v2007
    %v2042 = vpack.c.b16 %v2010, %v2009
    %v2043 = vpack.c.b16 %v2012, %v2011
    %v2044 = vpack.c.b16 %v2014, %v2013
    %v2045 = vpack.c.b16 %v2016, %v2015
    %v2046 = vpack.c.b16 %v2018, %v2017
    %v2047 = vpack.c.b16 %v2020, %v2019
    %v2048 = vpack.c.b16 %v2022, %v2021
    %v2049 = vpack.c.b16 %v2024, %v2023
    %v2050 = vpack.c.b16 %v2026, %v2025
    %2075 = vmatprep.subr.bf16.mxu0 0
    %2076 = vmatpush1.bf16.msra.mxu0 %v2027
    %2077 = vmatprep.subr.bf16.mxu0 0
    %2078 = vmatpush1.bf16.msra.mxu0 %v2028
    %2079 = vmatprep.subr.bf16.mxu0 0
    %2080 = vmatpush1.bf16.msra.mxu0 %v2029
    %2081 = vmatprep.subr.bf16.mxu0 0
    %2082 = vmatpush1.bf16.msra.mxu0 %v2030
    %2083 = vmatprep.subr.bf16.mxu0 0
    %2084 = vmatpush1.bf16.msra.mxu0 %v2031
    %2085 = vmatprep.subr.bf16.mxu0 0
    %2086 = vmatpush1.bf16.msra.mxu0 %v2032
    %2087 = vmatprep.subr.bf16.mxu0 0
    %2088 = vmatpush1.bf16.msra.mxu0 %v2033
    %2089 = vmatprep.subr.bf16.mxu0 0
    %2090 = vmatpush1.bf16.msra.mxu0 %v2034
    %2091 = vmatprep.subr.bf16.mxu0 0
    %2092 = vmatpush1.bf16.msra.mxu0 %v2035
    %2093 = vmatprep.subr.bf16.mxu0 0
    %2094 = vmatpush1.bf16.msra.mxu0 %v2036
    %2095 = vmatprep.subr.bf16.mxu0 0
    %2096 = vmatpush1.bf16.msra.mxu0 %v2037
    %2097 = vmatprep.subr.bf16.mxu0 0
    %2098 = vmatpush1.bf16.msra.mxu0 %v2038
    %2099 = vmatprep.subr.bf16.mxu0 0
    %2100 = vmatpush1.bf16.msra.mxu0 %v2039
    %2101 = vmatprep.subr.bf16.mxu0 0
    %2102 = vmatpush1.bf16.msra.mxu0 %v2040
    %2103 = vmatprep.subr.bf16.mxu0 0
    %2104 = vmatpush1.bf16.msra.mxu0 %v2041
    %2105 = vmatprep.subr.bf16.mxu0 0
    %2106 = vmatpush1.bf16.msra.mxu0 %v2042
    %2107 = vmatprep.mubr.bf16.mxu0 %v1842
    %2108 = vmatmul.mubr.bf16.gmra.mrb[0].mxu0 %v1826
    %v2109 = vpop.f32.mrb[0].mxu0
    %v2110 = vadd.f32 %v1929, %v2109
    %v2111 = vpop.f32.mrb[0].mxu0
    %v2112 = vpop.f32.mrb[0].mxu0
    %v2113 = vadd.f32 %v1929, %v2112
    %v2114 = vpop.f32.mrb[0].mxu0
    %2115 = vmatprep.mubr.bf16.mxu0 %v1843
    %2116 = vmatmul.mubr.bf16.gmra.mrb[0].mxu0 %v1827
    %v2117 = vpop.f32.mrb[0].mxu0
    %v2118 = vadd.f32 %v1929, %v2117
    %v2119 = vpop.f32.mrb[0].mxu0
    %v2120 = vpop.f32.mrb[0].mxu0
    %v2121 = vadd.f32 %v1929, %v2120
    %v2122 = vpop.f32.mrb[0].mxu0
    %2123 = vmatprep.mubr.bf16.mxu0 %v1844
    %2124 = vmatmul.mubr.bf16.gmra.mrb[0].mxu0 %v1828
    %v2125 = vpop.f32.mrb[0].mxu0
    %v2126 = vadd.f32 %v1929, %v2125
    %v2127 = vpop.f32.mrb[0].mxu0
    %v2128 = vpop.f32.mrb[0].mxu0
    %v2129 = vadd.f32 %v1929, %v2128
    %v2130 = vpop.f32.mrb[0].mxu0
    %2131 = vmatprep.mubr.bf16.mxu0 %v1845
    %2132 = vmatmul.mubr.bf16.gmra.mrb[0].mxu0 %v1829
    %v2133 = vpop.f32.mrb[0].mxu0
    %v2134 = vadd.f32 %v1929, %v2133
    %v2135 = vpop.f32.mrb[0].mxu0
    %v2136 = vpop.f32.mrb[0].mxu0
    %v2137 = vadd.f32 %v1929, %v2136
    %v2138 = vpop.f32.mrb[0].mxu0
    %2139 = vmatprep.mubr.bf16.mxu0 %v1846
    %2140 = vmatmul.mubr.bf16.gmra.mrb[0].mxu0 %v1830
    %v2141 = vpop.f32.mrb[0].mxu0
    %v2142 = vadd.f32 %v1929, %v2141
    %v2143 = vpop.f32.mrb[0].mxu0
    %v2144 = vpop.f32.mrb[0].mxu0
    %v2145 = vadd.f32 %v1929, %v2144
    %v2146 = vpop.f32.mrb[0].mxu0
    %2147 = vmatprep.mubr.bf16.mxu0 %v1847
    %2148 = vmatmul.mubr.bf16.gmra.mrb[0].mxu0 %v1831
    %v2149 = vpop.f32.mrb[0].mxu0
    %v2150 = vadd.f32 %v1929, %v2149
    %v2151 = vpop.f32.mrb[0].mxu0
    %v2152 = vpop.f32.mrb[0].mxu0
    %v2153 = vadd.f32 %v1929, %v2152
    %v2154 = vpop.f32.mrb[0].mxu0
    %2155 = vmatprep.mubr.bf16.mxu0 %v1848
    %2156 = vmatmul.mubr.bf16.gmra.mrb[0].mxu0 %v1832
    %v2157 = vpop.f32.mrb[0].mxu0
    %v2158 = vadd.f32 %v1929, %v2157
    %v2159 = vpop.f32.mrb[0].mxu0
    %v2160 = vpop.f32.mrb[0].mxu0
    %v2161 = vadd.f32 %v1929, %v2160
    %v2162 = vpop.f32.mrb[0].mxu0
    %2163 = vmatprep.mubr.bf16.mxu0 %v1849
    %2164 = vmatmul.mubr.bf16.gmra.mrb[0].mxu0 %v1833
    %v2165 = vpop.f32.mrb[0].mxu0
    %v2166 = vadd.f32 %v1929, %v2165
    %v2167 = vpop.f32.mrb[0].mxu0
    %v2168 = vpop.f32.mrb[0].mxu0
    %v2169 = vadd.f32 %v1929, %v2168
    %v2170 = vpop.f32.mrb[0].mxu0
    %2171 = vmatprep.mubr.bf16.mxu0 %v1850
    %2172 = vmatmul.mubr.bf16.gmra.mrb[0].mxu0 %v1834
    %v2173 = vpop.f32.mrb[0].mxu0
    %v2174 = vadd.f32 %v1929, %v2173
    %v2175 = vpop.f32.mrb[0].mxu0
    %v2176 = vpop.f32.mrb[0].mxu0
    %v2177 = vadd.f32 %v1929, %v2176
    %v2178 = vpop.f32.mrb[0].mxu0
    %2179 = vmatprep.mubr.bf16.mxu0 %v1851
    %2180 = vmatmul.mubr.bf16.gmra.mrb[0].mxu0 %v1835
    %v2181 = vpop.f32.mrb[0].mxu0
    %v2182 = vadd.f32 %v1929, %v2181
    %v2183 = vpop.f32.mrb[0].mxu0
    %v2184 = vpop.f32.mrb[0].mxu0
    %v2185 = vadd.f32 %v1929, %v2184
    %v2186 = vpop.f32.mrb[0].mxu0
    %2187 = vmatprep.mubr.bf16.mxu0 %v1852
    %2188 = vmatmul.mubr.bf16.gmra.mrb[0].mxu0 %v1836
    %v2189 = vpop.f32.mrb[0].mxu0
    %v2190 = vadd.f32 %v1929, %v2189
    %v2191 = vpop.f32.mrb[0].mxu0
    %v2192 = vpop.f32.mrb[0].mxu0
    %v2193 = vadd.f32 %v1929, %v2192
    %v2194 = vpop.f32.mrb[0].mxu0
    %2195 = vmatprep.mubr.bf16.mxu0 %v1853
    %2196 = vmatmul.mubr.bf16.gmra.mrb[0].mxu0 %v1837
    %v2197 = vpop.f32.mrb[0].mxu0
    %v2198 = vadd.f32 %v1929, %v2197
    %v2199 = vpop.f32.mrb[0].mxu0
    %v2200 = vpop.f32.mrb[0].mxu0
    %v2201 = vadd.f32 %v1929, %v2200
    %v2202 = vpop.f32.mrb[0].mxu0
    %2203 = vmatprep.mubr.bf16.mxu0 %v1854
    %2204 = vmatmul.mubr.bf16.gmra.mrb[0].mxu0 %v1838
    %v2205 = vpop.f32.mrb[0].mxu0
    %v2206 = vadd.f32 %v1929, %v2205
    %v2207 = vpop.f32.mrb[0].mxu0
    %v2208 = vpop.f32.mrb[0].mxu0
    %v2209 = vadd.f32 %v1929, %v2208
    %v2210 = vpop.f32.mrb[0].mxu0
    %2211 = vmatprep.mubr.bf16.mxu0 %v1855
    %2212 = vmatmul.mubr.bf16.gmra.mrb[0].mxu0 %v1839
    %v2213 = vpop.f32.mrb[0].mxu0
    %v2214 = vadd.f32 %v1929, %v2213
    %v2215 = vpop.f32.mrb[0].mxu0
    %v2216 = vpop.f32.mrb[0].mxu0
    %v2217 = vadd.f32 %v1929, %v2216
    %v2218 = vpop.f32.mrb[0].mxu0
    %2219 = vmatprep.mubr.bf16.mxu0 %v1856
    %2220 = vmatmul.mubr.bf16.gmra.mrb[0].mxu0 %v1840
    %v2221 = vpop.f32.mrb[0].mxu0
    %v2222 = vadd.f32 %v1929, %v2221
    %v2223 = vpop.f32.mrb[0].mxu0
    %v2224 = vpop.f32.mrb[0].mxu0
    %v2225 = vadd.f32 %v1929, %v2224
    %v2226 = vpop.f32.mrb[0].mxu0
    %2227 = vmatprep.mubr.bf16.mxu0 %v1857
    %2228 = vmatmul.mubr.bf16.gmra.mrb[0].mxu0 %v1841
    %v2229 = vpop.f32.mrb[0].mxu0
    %v2230 = vadd.f32 %v1929, %v2229
    %v2231 = vpop.f32.mrb[0].mxu0
    %v2232 = vpop.f32.mrb[0].mxu0
    %v2233 = vadd.f32 %v1929, %v2232
    %v2234 = vpop.f32.mrb[0].mxu0
    %2235 = vdwg.mxu0
    %2236 = vmatprep.subr.bf16.mxu0 0
    %2237 = vmatpush1.bf16.msra.mxu0 %v2043
    %2238 = vmatprep.subr.bf16.mxu0 0
    %2239 = vmatpush1.bf16.msra.mxu0 %v2044
    %2240 = vmatprep.subr.bf16.mxu0 0
    %2241 = vmatpush1.bf16.msra.mxu0 %v2045
    %2242 = vmatprep.subr.bf16.mxu0 0
    %2243 = vmatpush1.bf16.msra.mxu0 %v2046
    %2244 = vmatprep.subr.bf16.mxu0 0
    %2245 = vmatpush1.bf16.msra.mxu0 %v2047
    %2246 = vmatprep.subr.bf16.mxu0 0
    %2247 = vmatpush1.bf16.msra.mxu0 %v2048
    %2248 = vmatprep.subr.bf16.mxu0 0
    %2249 = vmatpush1.bf16.msra.mxu0 %v2049
    %2250 = vmatprep.subr.bf16.mxu0 0
    %2251 = vmatpush1.bf16.msra.mxu0 %v2050
    %2252 = vmatprep.subr.bf16.mxu0 0
    %2253 = vmatpush1.bf16.msra.mxu0 0
    %2254 = vmatprep.subr.bf16.mxu0 0
    %2255 = vmatpush1.bf16.msra.mxu0 0
    %2256 = vmatprep.subr.bf16.mxu0 0
    %2257 = vmatpush1.bf16.msra.mxu0 0
    %2258 = vmatprep.subr.bf16.mxu0 0
    %2259 = vmatpush1.bf16.msra.mxu0 0
    %2260 = vmatprep.subr.bf16.mxu0 0
    %2261 = vmatpush1.bf16.msra.mxu0 0
    %2262 = vmatprep.subr.bf16.mxu0 0
    %2263 = vmatpush1.bf16.msra.mxu0 0
    %2264 = vmatprep.subr.bf16.mxu0 0
    %2265 = vmatpush1.bf16.msra.mxu0 0
    %2266 = vmatprep.subr.bf16.mxu0 0
    %2267 = vmatpush1.bf16.msra.mxu0 0
    %2268 = vmatprep.mubr.bf16.mxu0 0
    %2269 = vmatmul.mubr.bf16.gmra.mrb[0].mxu0 %v1858
    %v2270 = vpop.f32.mrb[0].mxu0
    %v2271 = vadd.f32 %v2110, %v2270
    %v2272 = vpop.f32.mrb[0].mxu0
    %v2273 = vpop.f32.mrb[0].mxu0
    %v2274 = vadd.f32 %v2113, %v2273
    %v2275 = vpop.f32.mrb[0].mxu0
    %2276 = vmatprep.mubr.bf16.mxu0 0
    %2277 = vmatmul.mubr.bf16.gmra.mrb[0].mxu0 %v1859
    %v2278 = vpop.f32.mrb[0].mxu0
    %v2279 = vadd.f32 %v2118, %v2278
    %v2280 = vpop.f32.mrb[0].mxu0
    %v2281 = vpop.f32.mrb[0].mxu0
    %v2282 = vadd.f32 %v2121, %v2281
    %v2283 = vpop.f32.mrb[0].mxu0
    %2284 = vmatprep.mubr.bf16.mxu0 0
    %2285 = vmatmul.mubr.bf16.gmra.mrb[0].mxu0 %v1860
    %v2286 = vpop.f32.mrb[0].mxu0
    %v2287 = vadd.f32 %v2126, %v2286
    %v2288 = vpop.f32.mrb[0].mxu0
    %v2289 = vpop.f32.mrb[0].mxu0
    %v2290 = vadd.f32 %v2129, %v2289
    %v2291 = vpop.f32.mrb[0].mxu0
    %2292 = vmatprep.mubr.bf16.mxu0 0
    %2293 = vmatmul.mubr.bf16.gmra.mrb[0].mxu0 %v1861
    %v2294 = vpop.f32.mrb[0].mxu0
    %v2295 = vadd.f32 %v2134, %v2294
    %v2296 = vpop.f32.mrb[0].mxu0
    %v2297 = vpop.f32.mrb[0].mxu0
    %v2298 = vadd.f32 %v2137, %v2297
    %v2299 = vpop.f32.mrb[0].mxu0
    %2300 = vmatprep.mubr.bf16.mxu0 0
    %2301 = vmatmul.mubr.bf16.gmra.mrb[0].mxu0 %v1862
    %v2302 = vpop.f32.mrb[0].mxu0
    %v2303 = vadd.f32 %v2142, %v2302
    %v2304 = vpop.f32.mrb[0].mxu0
    %v2305 = vpop.f32.mrb[0].mxu0
    %v2306 = vadd.f32 %v2145, %v2305
    %v2307 = vpop.f32.mrb[0].mxu0
    %2308 = vmatprep.mubr.bf16.mxu0 0
    %2309 = vmatmul.mubr.bf16.gmra.mrb[0].mxu0 %v1863
    %v2310 = vpop.f32.mrb[0].mxu0
    %v2311 = vadd.f32 %v2150, %v2310
    %v2312 = vpop.f32.mrb[0].mxu0
    %v2313 = vpop.f32.mrb[0].mxu0
    %v2314 = vadd.f32 %v2153, %v2313
    %v2315 = vpop.f32.mrb[0].mxu0
    %2316 = vmatprep.mubr.bf16.mxu0 0
    %2317 = vmatmul.mubr.bf16.gmra.mrb[0].mxu0 %v1864
    %v2318 = vpop.f32.mrb[0].mxu0
    %v2319 = vadd.f32 %v2158, %v2318
    %v2320 = vpop.f32.mrb[0].mxu0
    %v2321 = vpop.f32.mrb[0].mxu0
    %v2322 = vadd.f32 %v2161, %v2321
    %v2323 = vpop.f32.mrb[0].mxu0
    %2324 = vmatprep.mubr.bf16.mxu0 0
    %2325 = vmatmul.mubr.bf16.gmra.mrb[0].mxu0 %v1865
    %v2326 = vpop.f32.mrb[0].mxu0
    %v2327 = vadd.f32 %v2166, %v2326
    %v2328 = vpop.f32.mrb[0].mxu0
    %v2329 = vpop.f32.mrb[0].mxu0
    %v2330 = vadd.f32 %v2169, %v2329
    %v2331 = vpop.f32.mrb[0].mxu0
    %2332 = vmatprep.mubr.bf16.mxu0 0
    %2333 = vmatmul.mubr.bf16.gmra.mrb[0].mxu0 %v1866
    %v2334 = vpop.f32.mrb[0].mxu0
    %v2335 = vadd.f32 %v2174, %v2334
    %v2336 = vpop.f32.mrb[0].mxu0
    %v2337 = vpop.f32.mrb[0].mxu0
    %v2338 = vadd.f32 %v2177, %v2337
    %v2339 = vpop.f32.mrb[0].mxu0
    %2340 = vmatprep.mubr.bf16.mxu0 0
    %2341 = vmatmul.mubr.bf16.gmra.mrb[0].mxu0 %v1867
    %v2342 = vpop.f32.mrb[0].mxu0
    %v2343 = vadd.f32 %v2182, %v2342
    %v2344 = vpop.f32.mrb[0].mxu0
    %v2345 = vpop.f32.mrb[0].mxu0
    %v2346 = vadd.f32 %v2185, %v2345
    %v2347 = vpop.f32.mrb[0].mxu0
    %2348 = vmatprep.mubr.bf16.mxu0 0
    %2349 = vmatmul.mubr.bf16.gmra.mrb[0].mxu0 %v1868
    %v2350 = vpop.f32.mrb[0].mxu0
    %v2351 = vadd.f32 %v2190, %v2350
    %v2352 = vpop.f32.mrb[0].mxu0
    %v2353 = vpop.f32.mrb[0].mxu0
    %v2354 = vadd.f32 %v2193, %v2353
    %v2355 = vpop.f32.mrb[0].mxu0
    %2356 = vmatprep.mubr.bf16.mxu0 0
    %2357 = vmatmul.mubr.bf16.gmra.mrb[0].mxu0 %v1869
    %v2358 = vpop.f32.mrb[0].mxu0
    %v2359 = vadd.f32 %v2198, %v2358
    %v2360 = vpop.f32.mrb[0].mxu0
    %v2361 = vpop.f32.mrb[0].mxu0
    %v2362 = vadd.f32 %v2201, %v2361
    %v2363 = vpop.f32.mrb[0].mxu0
    %2364 = vmatprep.mubr.bf16.mxu0 0
    %2365 = vmatmul.mubr.bf16.gmra.mrb[0].mxu0 %v1870
    %v2366 = vpop.f32.mrb[0].mxu0
    %v2367 = vadd.f32 %v2206, %v2366
    %v2368 = vpop.f32.mrb[0].mxu0
    %v2369 = vpop.f32.mrb[0].mxu0
    %v2370 = vadd.f32 %v2209, %v2369
    %v2371 = vpop.f32.mrb[0].mxu0
    %2372 = vmatprep.mubr.bf16.mxu0 0
    %2373 = vmatmul.mubr.bf16.gmra.mrb[0].mxu0 %v1871
    %v2374 = vpop.f32.mrb[0].mxu0
    %v2375 = vadd.f32 %v2214, %v2374
    %v2376 = vpop.f32.mrb[0].mxu0
    %v2377 = vpop.f32.mrb[0].mxu0
    %v2378 = vadd.f32 %v2217, %v2377
    %v2379 = vpop.f32.mrb[0].mxu0
    %2380 = vmatprep.mubr.bf16.mxu0 0
    %2381 = vmatmul.mubr.bf16.gmra.mrb[0].mxu0 %v1872
    %v2382 = vpop.f32.mrb[0].mxu0
    %v2383 = vadd.f32 %v2222, %v2382
    %v2384 = vpop.f32.mrb[0].mxu0
    %v2385 = vpop.f32.mrb[0].mxu0
    %v2386 = vadd.f32 %v2225, %v2385
    %v2387 = vpop.f32.mrb[0].mxu0
    %2388 = vmatprep.mubr.bf16.mxu0 0
    %2389 = vmatmul.mubr.bf16.gmra.mrb[0].mxu0 %v1873
    %v2390 = vpop.f32.mrb[0].mxu0
    %v2391 = vadd.f32 %v2230, %v2390
    %v2392 = vpop.f32.mrb[0].mxu0
    %v2393 = vpop.f32.mrb[0].mxu0
    %v2394 = vadd.f32 %v2233, %v2393
    %v2395 = vpop.f32.mrb[0].mxu0
    %2396 = vdwg.mxu0
    %v2397 = vmax.f32 %v2271, 0.0
    %v2398 = vmax.f32 %v2274, 0.0
    %v2399 = vmax.f32 %v2279, 0.0
    %v2400 = vmax.f32 %v2282, 0.0
    %v2401 = vmax.f32 %v2287, 0.0
    %v2402 = vmax.f32 %v2290, 0.0
    %v2403 = vmax.f32 %v2295, 0.0
    %v2404 = vmax.f32 %v2298, 0.0
    %v2405 = vmax.f32 %v2303, 0.0
    %v2406 = vmax.f32 %v2306, 0.0
    %v2407 = vmax.f32 %v2311, 0.0
    %v2408 = vmax.f32 %v2314, 0.0
    %v2409 = vmax.f32 %v2319, 0.0
    %v2410 = vmax.f32 %v2322, 0.0
    %v2411 = vmax.f32 %v2327, 0.0
    %v2412 = vmax.f32 %v2330, 0.0
    %v2413 = vmax.f32 %v2335, 0.0
    %v2414 = vmax.f32 %v2338, 0.0
    %v2415 = vmax.f32 %v2343, 0.0
    %v2416 = vmax.f32 %v2346, 0.0
    %v2417 = vmax.f32 %v2351, 0.0
    %v2418 = vmax.f32 %v2354, 0.0
    %v2419 = vmax.f32 %v2359, 0.0
    %v2420 = vmax.f32 %v2362, 0.0
    %v2421 = vmax.f32 %v2367, 0.0
    %v2422 = vmax.f32 %v2370, 0.0
    %v2423 = vmax.f32 %v2375, 0.0
    %v2424 = vmax.f32 %v2378, 0.0
    %v2425 = vmax.f32 %v2383, 0.0
    %v2426 = vmax.f32 %v2386, 0.0
    %v2427 = vmax.f32 %v2391, 0.0
    %v2428 = vmax.f32 %v2394, 0.0
    %vm2429 = vcmp.ge.s32.totalorder %v77, 8
    %vm2430 = vcmp.ge.s32.totalorder %v78, 8
    %vm2431 = vcmp.ge.s32.totalorder %v79, 8
    %vm2432 = vcmp.ge.s32.totalorder %v80, 8
    %v2433 = vsel %vm2429, %v2400, 0.0
    %v2434 = vsel %vm2430, %v2397, 0.0
    %v2435 = vsel %vm2431, %v2398, 0.0
    %v2436 = vsel %vm2432, %v2399, 0.0
    %v2437 = vsel %vm2429, %v2404, 0.0
    %v2438 = vsel %vm2430, %v2401, 0.0
    %v2439 = vsel %vm2431, %v2402, 0.0
    %v2440 = vsel %vm2432, %v2403, 0.0
    %v2441 = vsel %vm2429, %v2408, 0.0
    %v2442 = vsel %vm2430, %v2405, 0.0
    %v2443 = vsel %vm2431, %v2406, 0.0
    %v2444 = vsel %vm2432, %v2407, 0.0
    %v2445 = vsel %vm2429, %v2412, 0.0
    %v2446 = vsel %vm2430, %v2409, 0.0
    %v2447 = vsel %vm2431, %v2410, 0.0
    %v2448 = vsel %vm2432, %v2411, 0.0
    %v2449 = vsel %vm2429, %v2416, 0.0
    %v2450 = vsel %vm2430, %v2413, 0.0
    %v2451 = vsel %vm2431, %v2414, 0.0
    %v2452 = vsel %vm2432, %v2415, 0.0
    %v2453 = vsel %vm2429, %v2420, 0.0
    %v2454 = vsel %vm2430, %v2417, 0.0
    %v2455 = vsel %vm2431, %v2418, 0.0
    %v2456 = vsel %vm2432, %v2419, 0.0
    %v2457 = vsel %vm2429, %v2424, 0.0
    %v2458 = vsel %vm2430, %v2421, 0.0
    %v2459 = vsel %vm2431, %v2422, 0.0
    %v2460 = vsel %vm2432, %v2423, 0.0
    %v2461 = vsel %vm2429, %v2428, 0.0
    %v2462 = vsel %vm2430, %v2425, 0.0
    %v2463 = vsel %vm2431, %v2426, 0.0
    %v2464 = vsel %vm2432, %v2427, 0.0
    %vm2465 = vcmp.lt.s32.totalorder %v77, 24
    %vm2466 = vcmp.lt.s32.totalorder %v78, 24
    %vm2467 = vcmp.lt.s32.totalorder %v79, 24
    %vm2468 = vcmp.lt.s32.totalorder %v80, 24
    %v2469 = vsel %vm2465, %v2398, 0.0
    %v2470 = vsel %vm2466, %v2399, 0.0
    %v2471 = vsel %vm2467, %v2400, 0.0
    %v2472 = vsel %vm2468, %v2397, 0.0
    %v2473 = vsel %vm2465, %v2402, 0.0
    %v2474 = vsel %vm2466, %v2403, 0.0
    %v2475 = vsel %vm2467, %v2404, 0.0
    %v2476 = vsel %vm2468, %v2401, 0.0
    %v2477 = vsel %vm2465, %v2406, 0.0
    %v2478 = vsel %vm2466, %v2407, 0.0
    %v2479 = vsel %vm2467, %v2408, 0.0
    %v2480 = vsel %vm2468, %v2405, 0.0
    %v2481 = vsel %vm2465, %v2410, 0.0
    %v2482 = vsel %vm2466, %v2411, 0.0
    %v2483 = vsel %vm2467, %v2412, 0.0
    %v2484 = vsel %vm2468, %v2409, 0.0
    %v2485 = vsel %vm2465, %v2414, 0.0
    %v2486 = vsel %vm2466, %v2415, 0.0
    %v2487 = vsel %vm2467, %v2416, 0.0
    %v2488 = vsel %vm2468, %v2413, 0.0
    %v2489 = vsel %vm2465, %v2418, 0.0
    %v2490 = vsel %vm2466, %v2419, 0.0
    %v2491 = vsel %vm2467, %v2420, 0.0
    %v2492 = vsel %vm2468, %v2417, 0.0
    %v2493 = vsel %vm2465, %v2422, 0.0
    %v2494 = vsel %vm2466, %v2423, 0.0
    %v2495 = vsel %vm2467, %v2424, 0.0
    %v2496 = vsel %vm2468, %v2421, 0.0
    %v2497 = vsel %vm2465, %v2426, 0.0
    %v2498 = vsel %vm2466, %v2427, 0.0
    %v2499 = vsel %vm2467, %v2428, 0.0
    %v2500 = vsel %vm2468, %v2425, 0.0
    %v2501 = vpack.c.bf16 %v2434, %v2433
    %v2502 = vpack.c.bf16 %v2436, %v2435
    %v2503 = vpack.c.bf16 %v2438, %v2437
    %v2504 = vpack.c.bf16 %v2440, %v2439
    %v2505 = vpack.c.bf16 %v2442, %v2441
    %v2506 = vpack.c.bf16 %v2444, %v2443
    %v2507 = vpack.c.bf16 %v2446, %v2445
    %v2508 = vpack.c.bf16 %v2448, %v2447
    %v2509 = vpack.c.bf16 %v2450, %v2449
    %v2510 = vpack.c.bf16 %v2452, %v2451
    %v2511 = vpack.c.bf16 %v2454, %v2453
    %v2512 = vpack.c.bf16 %v2456, %v2455
    %v2513 = vpack.c.bf16 %v2458, %v2457
    %v2514 = vpack.c.bf16 %v2460, %v2459
    %v2515 = vpack.c.bf16 %v2462, %v2461
    %v2516 = vpack.c.bf16 %v2464, %v2463
    %v2517 = vpack.c.bf16 %v2398, %v2397
    %v2518 = vpack.c.bf16 %v2400, %v2399
    %v2519 = vpack.c.bf16 %v2402, %v2401
    %v2520 = vpack.c.bf16 %v2404, %v2403
    %v2521 = vpack.c.bf16 %v2406, %v2405
    %v2522 = vpack.c.bf16 %v2408, %v2407
    %v2523 = vpack.c.bf16 %v2410, %v2409
    %v2524 = vpack.c.bf16 %v2412, %v2411
    %v2525 = vpack.c.bf16 %v2414, %v2413
    %v2526 = vpack.c.bf16 %v2416, %v2415
    %v2527 = vpack.c.bf16 %v2418, %v2417
    %v2528 = vpack.c.bf16 %v2420, %v2419
    %v2529 = vpack.c.bf16 %v2422, %v2421
    %v2530 = vpack.c.bf16 %v2424, %v2423
    %v2531 = vpack.c.bf16 %v2426, %v2425
    %v2532 = vpack.c.bf16 %v2428, %v2427
    %v2533 = vpack.c.bf16 %v2470, %v2469
    %v2534 = vpack.c.bf16 %v2472, %v2471
    %v2535 = vpack.c.bf16 %v2474, %v2473
    %v2536 = vpack.c.bf16 %v2476, %v2475
    %v2537 = vpack.c.bf16 %v2478, %v2477
    %v2538 = vpack.c.bf16 %v2480, %v2479
    %v2539 = vpack.c.bf16 %v2482, %v2481
    %v2540 = vpack.c.bf16 %v2484, %v2483
    %v2541 = vpack.c.bf16 %v2486, %v2485
    %v2542 = vpack.c.bf16 %v2488, %v2487
    %v2543 = vpack.c.bf16 %v2490, %v2489
    %v2544 = vpack.c.bf16 %v2492, %v2491
    %v2545 = vpack.c.bf16 %v2494, %v2493
    %v2546 = vpack.c.bf16 %v2496, %v2495
    %v2547 = vpack.c.bf16 %v2498, %v2497
    %v2548 = vpack.c.bf16 %v2500, %v2499
    %s2549 = scalar_lea.vmem [#allocation5], 576
    %v2550 = vld [vmem:[%s2549] sm:$0xf]
    %v2551 = vld [vmem:[%s2549 + $0x4] sm:$0xf]
    %v2552 = vld [vmem:[%s2549 + $0x8] sm:$0xf]
    %v2553 = vld [vmem:[%s2549 + $0xc] sm:$0xf]
    %v2554 = vld [vmem:[%s2549 + $0x10] sm:$0xf]
    %v2555 = vld [vmem:[%s2549 + $0x14] sm:$0xf]
    %v2556 = vld [vmem:[%s2549 + $0x18] sm:$0xf]
    %v2557 = vld [vmem:[%s2549 + $0x1c] sm:$0xf]
    %v2558 = vld [vmem:[%s2549 + $0x20] sm:$0xf]
    %v2559 = vld [vmem:[%s2549 + $0x24] sm:$0xf]
    %v2560 = vld [vmem:[%s2549 + $0x28] sm:$0xf]
    %v2561 = vld [vmem:[%s2549 + $0x2c] sm:$0xf]
    %v2562 = vld [vmem:[%s2549 + $0x30] sm:$0xf]
    %v2563 = vld [vmem:[%s2549 + $0x34] sm:$0xf]
    %v2564 = vld [vmem:[%s2549 + $0x38] sm:$0xf]
    %v2565 = vld [vmem:[%s2549 + $0x3c] sm:$0xf]
    %v2566 = vld [vmem:[%s2549 + $0x40] sm:$0xf]
    %v2567 = vld [vmem:[%s2549 + $0x44] sm:$0xf]
    %v2568 = vld [vmem:[%s2549 + $0x48] sm:$0xf]
    %v2569 = vld [vmem:[%s2549 + $0x4c] sm:$0xf]
    %v2570 = vld [vmem:[%s2549 + $0x50] sm:$0xf]
    %v2571 = vld [vmem:[%s2549 + $0x54] sm:$0xf]
    %v2572 = vld [vmem:[%s2549 + $0x58] sm:$0xf]
    %v2573 = vld [vmem:[%s2549 + $0x5c] sm:$0xf]
    %v2574 = vld [vmem:[%s2549 + $0x60] sm:$0xf]
    %v2575 = vld [vmem:[%s2549 + $0x64] sm:$0xf]
    %v2576 = vld [vmem:[%s2549 + $0x68] sm:$0xf]
    %v2577 = vld [vmem:[%s2549 + $0x6c] sm:$0xf]
    %v2578 = vld [vmem:[%s2549 + $0x70] sm:$0xf]
    %v2579 = vld [vmem:[%s2549 + $0x74] sm:$0xf]
    %v2580 = vld [vmem:[%s2549 + $0x78] sm:$0xf]
    %v2581 = vld [vmem:[%s2549 + $0x7c] sm:$0xf]
    %v2582 = vld [vmem:[%s2549 + $0x80] sm:$0xf]
    %v2583 = vld [vmem:[%s2549 + $0x84] sm:$0xf]
    %v2584 = vld [vmem:[%s2549 + $0x88] sm:$0xf]
    %v2585 = vld [vmem:[%s2549 + $0x8c] sm:$0xf]
    %v2586 = vld [vmem:[%s2549 + $0x90] sm:$0xf]
    %v2587 = vld [vmem:[%s2549 + $0x94] sm:$0xf]
    %v2588 = vld [vmem:[%s2549 + $0x98] sm:$0xf]
    %v2589 = vld [vmem:[%s2549 + $0x9c] sm:$0xf]
    %v2590 = vld [vmem:[%s2549 + $0xa0] sm:$0xf]
    %v2591 = vld [vmem:[%s2549 + $0xa4] sm:$0xf]
    %v2592 = vld [vmem:[%s2549 + $0xa8] sm:$0xf]
    %v2593 = vld [vmem:[%s2549 + $0xac] sm:$0xf]
    %v2594 = vld [vmem:[%s2549 + $0xb0] sm:$0xf]
    %v2595 = vld [vmem:[%s2549 + $0xb4] sm:$0xf]
    %v2596 = vld [vmem:[%s2549 + $0xb8] sm:$0xf]
    %v2597 = vld [vmem:[%s2549 + $0xbc] sm:$0xf]
    %s2598 = scalar_lea.vmem %s2, 3
    %v2599 = vld [vmem:[%s2598] sm:$0x1]
    %v2601 = vlaneseq
    %v2602 = vshrl.u32 %v2601, 7
    %v2603 = vsub.s32 0, %v2602
    %v2604 = vrot.slane %v2599, %v2603
    %v2654 = vunpack.c.l.b16 %v2550
    %v2655 = vunpack.c.l.b16 %v2551
    %v2656 = vunpack.c.l.b16 %v2552
    %v2657 = vunpack.c.l.b16 %v2553
    %v2658 = vunpack.c.l.b16 %v2554
    %v2659 = vunpack.c.l.b16 %v2555
    %v2660 = vunpack.c.l.b16 %v2556
    %v2661 = vunpack.c.l.b16 %v2557
    %v2662 = vunpack.c.l.b16 %v2558
    %v2663 = vunpack.c.l.b16 %v2559
    %v2664 = vunpack.c.l.b16 %v2560
    %v2665 = vunpack.c.l.b16 %v2561
    %v2666 = vunpack.c.l.b16 %v2562
    %v2667 = vunpack.c.l.b16 %v2563
    %v2668 = vunpack.c.l.b16 %v2564
    %v2669 = vunpack.c.l.b16 %v2565
    %v2670 = vunpack.c.l.b16 %v2566
    %v2671 = vunpack.c.l.b16 %v2567
    %v2672 = vunpack.c.l.b16 %v2568
    %v2673 = vunpack.c.l.b16 %v2569
    %v2674 = vunpack.c.l.b16 %v2570
    %v2675 = vunpack.c.l.b16 %v2571
    %v2676 = vunpack.c.l.b16 %v2572
    %v2677 = vunpack.c.l.b16 %v2573
    %v2678 = vunpack.c.l.b16 %v2574
    %v2679 = vunpack.c.l.b16 %v2575
    %v2680 = vunpack.c.l.b16 %v2576
    %v2681 = vunpack.c.l.b16 %v2577
    %v2682 = vunpack.c.l.b16 %v2578
    %v2683 = vunpack.c.l.b16 %v2579
    %v2684 = vunpack.c.l.b16 %v2580
    %v2685 = vunpack.c.l.b16 %v2581
    %v2686 = vunpack.c.l.b16 %v2582
    %v2687 = vunpack.c.l.b16 %v2583
    %v2688 = vunpack.c.l.b16 %v2584
    %v2689 = vunpack.c.l.b16 %v2585
    %v2690 = vunpack.c.l.b16 %v2586
    %v2691 = vunpack.c.l.b16 %v2587
    %v2692 = vunpack.c.l.b16 %v2588
    %v2693 = vunpack.c.l.b16 %v2589
    %v2694 = vunpack.c.l.b16 %v2590
    %v2695 = vunpack.c.l.b16 %v2591
    %v2696 = vunpack.c.l.b16 %v2592
    %v2697 = vunpack.c.l.b16 %v2593
    %v2698 = vunpack.c.l.b16 %v2594
    %v2699 = vunpack.c.l.b16 %v2595
    %v2700 = vunpack.c.l.b16 %v2596
    %v2701 = vunpack.c.l.b16 %v2597
    %v2702 = vpack.c.b16 %v2655, %v2654
    %v2703 = vpack.c.b16 %v2657, %v2656
    %v2704 = vpack.c.b16 %v2659, %v2658
    %v2705 = vpack.c.b16 %v2661, %v2660
    %v2706 = vpack.c.b16 %v2663, %v2662
    %v2707 = vpack.c.b16 %v2665, %v2664
    %v2708 = vpack.c.b16 %v2667, %v2666
    %v2709 = vpack.c.b16 %v2669, %v2668
    %v2710 = vpack.c.b16 %v2671, %v2670
    %v2711 = vpack.c.b16 %v2673, %v2672
    %v2712 = vpack.c.b16 %v2675, %v2674
    %v2713 = vpack.c.b16 %v2677, %v2676
    %v2714 = vpack.c.b16 %v2679, %v2678
    %v2715 = vpack.c.b16 %v2681, %v2680
    %v2716 = vpack.c.b16 %v2683, %v2682
    %v2717 = vpack.c.b16 %v2685, %v2684
    %v2718 = vpack.c.b16 %v2687, %v2686
    %v2719 = vpack.c.b16 %v2689, %v2688
    %v2720 = vpack.c.b16 %v2691, %v2690
    %v2721 = vpack.c.b16 %v2693, %v2692
    %v2722 = vpack.c.b16 %v2695, %v2694
    %v2723 = vpack.c.b16 %v2697, %v2696
    %v2724 = vpack.c.b16 %v2699, %v2698
    %v2725 = vpack.c.b16 %v2701, %v2700
    %2750 = vmatprep.subr.bf16.mxu0 0
    %2751 = vmatpush1.bf16.msra.mxu0 %v2702
    %2752 = vmatprep.subr.bf16.mxu0 0
    %2753 = vmatpush1.bf16.msra.mxu0 %v2703
    %2754 = vmatprep.subr.bf16.mxu0 0
    %2755 = vmatpush1.bf16.msra.mxu0 %v2704
    %2756 = vmatprep.subr.bf16.mxu0 0
    %2757 = vmatpush1.bf16.msra.mxu0 %v2705
    %2758 = vmatprep.subr.bf16.mxu0 0
    %2759 = vmatpush1.bf16.msra.mxu0 %v2706
    %2760 = vmatprep.subr.bf16.mxu0 0
    %2761 = vmatpush1.bf16.msra.mxu0 %v2707
    %2762 = vmatprep.subr.bf16.mxu0 0
    %2763 = vmatpush1.bf16.msra.mxu0 %v2708
    %2764 = vmatprep.subr.bf16.mxu0 0
    %2765 = vmatpush1.bf16.msra.mxu0 %v2709
    %2766 = vmatprep.subr.bf16.mxu0 0
    %2767 = vmatpush1.bf16.msra.mxu0 %v2710
    %2768 = vmatprep.subr.bf16.mxu0 0
    %2769 = vmatpush1.bf16.msra.mxu0 %v2711
    %2770 = vmatprep.subr.bf16.mxu0 0
    %2771 = vmatpush1.bf16.msra.mxu0 %v2712
    %2772 = vmatprep.subr.bf16.mxu0 0
    %2773 = vmatpush1.bf16.msra.mxu0 %v2713
    %2774 = vmatprep.subr.bf16.mxu0 0
    %2775 = vmatpush1.bf16.msra.mxu0 %v2714
    %2776 = vmatprep.subr.bf16.mxu0 0
    %2777 = vmatpush1.bf16.msra.mxu0 %v2715
    %2778 = vmatprep.subr.bf16.mxu0 0
    %2779 = vmatpush1.bf16.msra.mxu0 %v2716
    %2780 = vmatprep.subr.bf16.mxu0 0
    %2781 = vmatpush1.bf16.msra.mxu0 %v2717
    %2782 = vmatprep.mubr.bf16.mxu0 %v2517
    %2783 = vmatmul.mubr.bf16.gmra.mrb[0].mxu0 %v2501
    %v2784 = vpop.f32.mrb[0].mxu0
    %v2785 = vadd.f32 %v2604, %v2784
    %v2786 = vpop.f32.mrb[0].mxu0
    %v2787 = vpop.f32.mrb[0].mxu0
    %v2788 = vadd.f32 %v2604, %v2787
    %v2789 = vpop.f32.mrb[0].mxu0
    %2790 = vmatprep.mubr.bf16.mxu0 %v2518
    %2791 = vmatmul.mubr.bf16.gmra.mrb[0].mxu0 %v2502
    %v2792 = vpop.f32.mrb[0].mxu0
    %v2793 = vadd.f32 %v2604, %v2792
    %v2794 = vpop.f32.mrb[0].mxu0
    %v2795 = vpop.f32.mrb[0].mxu0
    %v2796 = vadd.f32 %v2604, %v2795
    %v2797 = vpop.f32.mrb[0].mxu0
    %2798 = vmatprep.mubr.bf16.mxu0 %v2519
    %2799 = vmatmul.mubr.bf16.gmra.mrb[0].mxu0 %v2503
    %v2800 = vpop.f32.mrb[0].mxu0
    %v2801 = vadd.f32 %v2604, %v2800
    %v2802 = vpop.f32.mrb[0].mxu0
    %v2803 = vpop.f32.mrb[0].mxu0
    %v2804 = vadd.f32 %v2604, %v2803
    %v2805 = vpop.f32.mrb[0].mxu0
    %2806 = vmatprep.mubr.bf16.mxu0 %v2520
    %2807 = vmatmul.mubr.bf16.gmra.mrb[0].mxu0 %v2504
    %v2808 = vpop.f32.mrb[0].mxu0
    %v2809 = vadd.f32 %v2604, %v2808
    %v2810 = vpop.f32.mrb[0].mxu0
    %v2811 = vpop.f32.mrb[0].mxu0
    %v2812 = vadd.f32 %v2604, %v2811
    %v2813 = vpop.f32.mrb[0].mxu0
    %2814 = vmatprep.mubr.bf16.mxu0 %v2521
    %2815 = vmatmul.mubr.bf16.gmra.mrb[0].mxu0 %v2505
    %v2816 = vpop.f32.mrb[0].mxu0
    %v2817 = vadd.f32 %v2604, %v2816
    %v2818 = vpop.f32.mrb[0].mxu0
    %v2819 = vpop.f32.mrb[0].mxu0
    %v2820 = vadd.f32 %v2604, %v2819
    %v2821 = vpop.f32.mrb[0].mxu0
    %2822 = vmatprep.mubr.bf16.mxu0 %v2522
    %2823 = vmatmul.mubr.bf16.gmra.mrb[0].mxu0 %v2506
    %v2824 = vpop.f32.mrb[0].mxu0
    %v2825 = vadd.f32 %v2604, %v2824
    %v2826 = vpop.f32.mrb[0].mxu0
    %v2827 = vpop.f32.mrb[0].mxu0
    %v2828 = vadd.f32 %v2604, %v2827
    %v2829 = vpop.f32.mrb[0].mxu0
    %2830 = vmatprep.mubr.bf16.mxu0 %v2523
    %2831 = vmatmul.mubr.bf16.gmra.mrb[0].mxu0 %v2507
    %v2832 = vpop.f32.mrb[0].mxu0
    %v2833 = vadd.f32 %v2604, %v2832
    %v2834 = vpop.f32.mrb[0].mxu0
    %v2835 = vpop.f32.mrb[0].mxu0
    %v2836 = vadd.f32 %v2604, %v2835
    %v2837 = vpop.f32.mrb[0].mxu0
    %2838 = vmatprep.mubr.bf16.mxu0 %v2524
    %2839 = vmatmul.mubr.bf16.gmra.mrb[0].mxu0 %v2508
    %v2840 = vpop.f32.mrb[0].mxu0
    %v2841 = vadd.f32 %v2604, %v2840
    %v2842 = vpop.f32.mrb[0].mxu0
    %v2843 = vpop.f32.mrb[0].mxu0
    %v2844 = vadd.f32 %v2604, %v2843
    %v2845 = vpop.f32.mrb[0].mxu0
    %2846 = vmatprep.mubr.bf16.mxu0 %v2525
    %2847 = vmatmul.mubr.bf16.gmra.mrb[0].mxu0 %v2509
    %v2848 = vpop.f32.mrb[0].mxu0
    %v2849 = vadd.f32 %v2604, %v2848
    %v2850 = vpop.f32.mrb[0].mxu0
    %v2851 = vpop.f32.mrb[0].mxu0
    %v2852 = vadd.f32 %v2604, %v2851
    %v2853 = vpop.f32.mrb[0].mxu0
    %2854 = vmatprep.mubr.bf16.mxu0 %v2526
    %2855 = vmatmul.mubr.bf16.gmra.mrb[0].mxu0 %v2510
    %v2856 = vpop.f32.mrb[0].mxu0
    %v2857 = vadd.f32 %v2604, %v2856
    %v2858 = vpop.f32.mrb[0].mxu0
    %v2859 = vpop.f32.mrb[0].mxu0
    %v2860 = vadd.f32 %v2604, %v2859
    %v2861 = vpop.f32.mrb[0].mxu0
    %2862 = vmatprep.mubr.bf16.mxu0 %v2527
    %2863 = vmatmul.mubr.bf16.gmra.mrb[0].mxu0 %v2511
    %v2864 = vpop.f32.mrb[0].mxu0
    %v2865 = vadd.f32 %v2604, %v2864
    %v2866 = vpop.f32.mrb[0].mxu0
    %v2867 = vpop.f32.mrb[0].mxu0
    %v2868 = vadd.f32 %v2604, %v2867
    %v2869 = vpop.f32.mrb[0].mxu0
    %2870 = vmatprep.mubr.bf16.mxu0 %v2528
    %2871 = vmatmul.mubr.bf16.gmra.mrb[0].mxu0 %v2512
    %v2872 = vpop.f32.mrb[0].mxu0
    %v2873 = vadd.f32 %v2604, %v2872
    %v2874 = vpop.f32.mrb[0].mxu0
    %v2875 = vpop.f32.mrb[0].mxu0
    %v2876 = vadd.f32 %v2604, %v2875
    %v2877 = vpop.f32.mrb[0].mxu0
    %2878 = vmatprep.mubr.bf16.mxu0 %v2529
    %2879 = vmatmul.mubr.bf16.gmra.mrb[0].mxu0 %v2513
    %v2880 = vpop.f32.mrb[0].mxu0
    %v2881 = vadd.f32 %v2604, %v2880
    %v2882 = vpop.f32.mrb[0].mxu0
    %v2883 = vpop.f32.mrb[0].mxu0
    %v2884 = vadd.f32 %v2604, %v2883
    %v2885 = vpop.f32.mrb[0].mxu0
    %2886 = vmatprep.mubr.bf16.mxu0 %v2530
    %2887 = vmatmul.mubr.bf16.gmra.mrb[0].mxu0 %v2514
    %v2888 = vpop.f32.mrb[0].mxu0
    %v2889 = vadd.f32 %v2604, %v2888
    %v2890 = vpop.f32.mrb[0].mxu0
    %v2891 = vpop.f32.mrb[0].mxu0
    %v2892 = vadd.f32 %v2604, %v2891
    %v2893 = vpop.f32.mrb[0].mxu0
    %2894 = vmatprep.mubr.bf16.mxu0 %v2531
    %2895 = vmatmul.mubr.bf16.gmra.mrb[0].mxu0 %v2515
    %v2896 = vpop.f32.mrb[0].mxu0
    %v2897 = vadd.f32 %v2604, %v2896
    %v2898 = vpop.f32.mrb[0].mxu0
    %v2899 = vpop.f32.mrb[0].mxu0
    %v2900 = vadd.f32 %v2604, %v2899
    %v2901 = vpop.f32.mrb[0].mxu0
    %2902 = vmatprep.mubr.bf16.mxu0 %v2532
    %2903 = vmatmul.mubr.bf16.gmra.mrb[0].mxu0 %v2516
    %v2904 = vpop.f32.mrb[0].mxu0
    %v2905 = vadd.f32 %v2604, %v2904
    %v2906 = vpop.f32.mrb[0].mxu0
    %v2907 = vpop.f32.mrb[0].mxu0
    %v2908 = vadd.f32 %v2604, %v2907
    %v2909 = vpop.f32.mrb[0].mxu0
    %2910 = vdwg.mxu0
    %2911 = vmatprep.subr.bf16.mxu0 0
    %2912 = vmatpush1.bf16.msra.mxu0 %v2718
    %2913 = vmatprep.subr.bf16.mxu0 0
    %2914 = vmatpush1.bf16.msra.mxu0 %v2719
    %2915 = vmatprep.subr.bf16.mxu0 0
    %2916 = vmatpush1.bf16.msra.mxu0 %v2720
    %2917 = vmatprep.subr.bf16.mxu0 0
    %2918 = vmatpush1.bf16.msra.mxu0 %v2721
    %2919 = vmatprep.subr.bf16.mxu0 0
    %2920 = vmatpush1.bf16.msra.mxu0 %v2722
    %2921 = vmatprep.subr.bf16.mxu0 0
    %2922 = vmatpush1.bf16.msra.mxu0 %v2723
    %2923 = vmatprep.subr.bf16.mxu0 0
    %2924 = vmatpush1.bf16.msra.mxu0 %v2724
    %2925 = vmatprep.subr.bf16.mxu0 0
    %2926 = vmatpush1.bf16.msra.mxu0 %v2725
    %2927 = vmatprep.subr.bf16.mxu0 0
    %2928 = vmatpush1.bf16.msra.mxu0 0
    %2929 = vmatprep.subr.bf16.mxu0 0
    %2930 = vmatpush1.bf16.msra.mxu0 0
    %2931 = vmatprep.subr.bf16.mxu0 0
    %2932 = vmatpush1.bf16.msra.mxu0 0
    %2933 = vmatprep.subr.bf16.mxu0 0
    %2934 = vmatpush1.bf16.msra.mxu0 0
    %2935 = vmatprep.subr.bf16.mxu0 0
    %2936 = vmatpush1.bf16.msra.mxu0 0
    %2937 = vmatprep.subr.bf16.mxu0 0
    %2938 = vmatpush1.bf16.msra.mxu0 0
    %2939 = vmatprep.subr.bf16.mxu0 0
    %2940 = vmatpush1.bf16.msra.mxu0 0
    %2941 = vmatprep.subr.bf16.mxu0 0
    %2942 = vmatpush1.bf16.msra.mxu0 0
    %2943 = vmatprep.mubr.bf16.mxu0 0
    %2944 = vmatmul.mubr.bf16.gmra.mrb[0].mxu0 %v2533
    %v2945 = vpop.f32.mrb[0].mxu0
    %v2946 = vadd.f32 %v2785, %v2945
    %v2947 = vpop.f32.mrb[0].mxu0
    %v2948 = vpop.f32.mrb[0].mxu0
    %v2949 = vadd.f32 %v2788, %v2948
    %v2950 = vpop.f32.mrb[0].mxu0
    %2951 = vmatprep.mubr.bf16.mxu0 0
    %2952 = vmatmul.mubr.bf16.gmra.mrb[0].mxu0 %v2534
    %v2953 = vpop.f32.mrb[0].mxu0
    %v2954 = vadd.f32 %v2793, %v2953
    %v2955 = vpop.f32.mrb[0].mxu0
    %v2956 = vpop.f32.mrb[0].mxu0
    %v2957 = vadd.f32 %v2796, %v2956
    %v2958 = vpop.f32.mrb[0].mxu0
    %2959 = vmatprep.mubr.bf16.mxu0 0
    %2960 = vmatmul.mubr.bf16.gmra.mrb[0].mxu0 %v2535
    %v2961 = vpop.f32.mrb[0].mxu0
    %v2962 = vadd.f32 %v2801, %v2961
    %v2963 = vpop.f32.mrb[0].mxu0
    %v2964 = vpop.f32.mrb[0].mxu0
    %v2965 = vadd.f32 %v2804, %v2964
    %v2966 = vpop.f32.mrb[0].mxu0
    %2967 = vmatprep.mubr.bf16.mxu0 0
    %2968 = vmatmul.mubr.bf16.gmra.mrb[0].mxu0 %v2536
    %v2969 = vpop.f32.mrb[0].mxu0
    %v2970 = vadd.f32 %v2809, %v2969
    %v2971 = vpop.f32.mrb[0].mxu0
    %v2972 = vpop.f32.mrb[0].mxu0
    %v2973 = vadd.f32 %v2812, %v2972
    %v2974 = vpop.f32.mrb[0].mxu0
    %2975 = vmatprep.mubr.bf16.mxu0 0
    %2976 = vmatmul.mubr.bf16.gmra.mrb[0].mxu0 %v2537
    %v2977 = vpop.f32.mrb[0].mxu0
    %v2978 = vadd.f32 %v2817, %v2977
    %v2979 = vpop.f32.mrb[0].mxu0
    %v2980 = vpop.f32.mrb[0].mxu0
    %v2981 = vadd.f32 %v2820, %v2980
    %v2982 = vpop.f32.mrb[0].mxu0
    %2983 = vmatprep.mubr.bf16.mxu0 0
    %2984 = vmatmul.mubr.bf16.gmra.mrb[0].mxu0 %v2538
    %v2985 = vpop.f32.mrb[0].mxu0
    %v2986 = vadd.f32 %v2825, %v2985
    %v2987 = vpop.f32.mrb[0].mxu0
    %v2988 = vpop.f32.mrb[0].mxu0
    %v2989 = vadd.f32 %v2828, %v2988
    %v2990 = vpop.f32.mrb[0].mxu0
    %2991 = vmatprep.mubr.bf16.mxu0 0
    %2992 = vmatmul.mubr.bf16.gmra.mrb[0].mxu0 %v2539
    %v2993 = vpop.f32.mrb[0].mxu0
    %v2994 = vadd.f32 %v2833, %v2993
    %v2995 = vpop.f32.mrb[0].mxu0
    %v2996 = vpop.f32.mrb[0].mxu0
    %v2997 = vadd.f32 %v2836, %v2996
    %v2998 = vpop.f32.mrb[0].mxu0
    %2999 = vmatprep.mubr.bf16.mxu0 0
    %3000 = vmatmul.mubr.bf16.gmra.mrb[0].mxu0 %v2540
    %v3001 = vpop.f32.mrb[0].mxu0
    %v3002 = vadd.f32 %v2841, %v3001
    %v3003 = vpop.f32.mrb[0].mxu0
    %v3004 = vpop.f32.mrb[0].mxu0
    %v3005 = vadd.f32 %v2844, %v3004
    %v3006 = vpop.f32.mrb[0].mxu0
    %3007 = vmatprep.mubr.bf16.mxu0 0
    %3008 = vmatmul.mubr.bf16.gmra.mrb[0].mxu0 %v2541
    %v3009 = vpop.f32.mrb[0].mxu0
    %v3010 = vadd.f32 %v2849, %v3009
    %v3011 = vpop.f32.mrb[0].mxu0
    %v3012 = vpop.f32.mrb[0].mxu0
    %v3013 = vadd.f32 %v2852, %v3012
    %v3014 = vpop.f32.mrb[0].mxu0
    %3015 = vmatprep.mubr.bf16.mxu0 0
    %3016 = vmatmul.mubr.bf16.gmra.mrb[0].mxu0 %v2542
    %v3017 = vpop.f32.mrb[0].mxu0
    %v3018 = vadd.f32 %v2857, %v3017
    %v3019 = vpop.f32.mrb[0].mxu0
    %v3020 = vpop.f32.mrb[0].mxu0
    %v3021 = vadd.f32 %v2860, %v3020
    %v3022 = vpop.f32.mrb[0].mxu0
    %3023 = vmatprep.mubr.bf16.mxu0 0
    %3024 = vmatmul.mubr.bf16.gmra.mrb[0].mxu0 %v2543
    %v3025 = vpop.f32.mrb[0].mxu0
    %v3026 = vadd.f32 %v2865, %v3025
    %v3027 = vpop.f32.mrb[0].mxu0
    %v3028 = vpop.f32.mrb[0].mxu0
    %v3029 = vadd.f32 %v2868, %v3028
    %v3030 = vpop.f32.mrb[0].mxu0
    %3031 = vmatprep.mubr.bf16.mxu0 0
    %3032 = vmatmul.mubr.bf16.gmra.mrb[0].mxu0 %v2544
    %v3033 = vpop.f32.mrb[0].mxu0
    %v3034 = vadd.f32 %v2873, %v3033
    %v3035 = vpop.f32.mrb[0].mxu0
    %v3036 = vpop.f32.mrb[0].mxu0
    %v3037 = vadd.f32 %v2876, %v3036
    %v3038 = vpop.f32.mrb[0].mxu0
    %3039 = vmatprep.mubr.bf16.mxu0 0
    %3040 = vmatmul.mubr.bf16.gmra.mrb[0].mxu0 %v2545
    %v3041 = vpop.f32.mrb[0].mxu0
    %v3042 = vadd.f32 %v2881, %v3041
    %v3043 = vpop.f32.mrb[0].mxu0
    %v3044 = vpop.f32.mrb[0].mxu0
    %v3045 = vadd.f32 %v2884, %v3044
    %v3046 = vpop.f32.mrb[0].mxu0
    %3047 = vmatprep.mubr.bf16.mxu0 0
    %3048 = vmatmul.mubr.bf16.gmra.mrb[0].mxu0 %v2546
    %v3049 = vpop.f32.mrb[0].mxu0
    %v3050 = vadd.f32 %v2889, %v3049
    %v3051 = vpop.f32.mrb[0].mxu0
    %v3052 = vpop.f32.mrb[0].mxu0
    %v3053 = vadd.f32 %v2892, %v3052
    %v3054 = vpop.f32.mrb[0].mxu0
    %3055 = vmatprep.mubr.bf16.mxu0 0
    %3056 = vmatmul.mubr.bf16.gmra.mrb[0].mxu0 %v2547
    %v3057 = vpop.f32.mrb[0].mxu0
    %v3058 = vadd.f32 %v2897, %v3057
    %v3059 = vpop.f32.mrb[0].mxu0
    %v3060 = vpop.f32.mrb[0].mxu0
    %v3061 = vadd.f32 %v2900, %v3060
    %v3062 = vpop.f32.mrb[0].mxu0
    %3063 = vmatprep.mubr.bf16.mxu0 0
    %3064 = vmatmul.mubr.bf16.gmra.mrb[0].mxu0 %v2548
    %v3065 = vpop.f32.mrb[0].mxu0
    %v3066 = vadd.f32 %v2905, %v3065
    %v3067 = vpop.f32.mrb[0].mxu0
    %v3068 = vpop.f32.mrb[0].mxu0
    %v3069 = vadd.f32 %v2908, %v3068
    %v3070 = vpop.f32.mrb[0].mxu0
    %3071 = vdwg.mxu0
    %v3072 = vmax.f32 %v2946, 0.0
    %v3073 = vmax.f32 %v2949, 0.0
    %v3074 = vmax.f32 %v2954, 0.0
    %v3075 = vmax.f32 %v2957, 0.0
    %v3076 = vmax.f32 %v2962, 0.0
    %v3077 = vmax.f32 %v2965, 0.0
    %v3078 = vmax.f32 %v2970, 0.0
    %v3079 = vmax.f32 %v2973, 0.0
    %v3080 = vmax.f32 %v2978, 0.0
    %v3081 = vmax.f32 %v2981, 0.0
    %v3082 = vmax.f32 %v2986, 0.0
    %v3083 = vmax.f32 %v2989, 0.0
    %v3084 = vmax.f32 %v2994, 0.0
    %v3085 = vmax.f32 %v2997, 0.0
    %v3086 = vmax.f32 %v3002, 0.0
    %v3087 = vmax.f32 %v3005, 0.0
    %v3088 = vmax.f32 %v3010, 0.0
    %v3089 = vmax.f32 %v3013, 0.0
    %v3090 = vmax.f32 %v3018, 0.0
    %v3091 = vmax.f32 %v3021, 0.0
    %v3092 = vmax.f32 %v3026, 0.0
    %v3093 = vmax.f32 %v3029, 0.0
    %v3094 = vmax.f32 %v3034, 0.0
    %v3095 = vmax.f32 %v3037, 0.0
    %v3096 = vmax.f32 %v3042, 0.0
    %v3097 = vmax.f32 %v3045, 0.0
    %v3098 = vmax.f32 %v3050, 0.0
    %v3099 = vmax.f32 %v3053, 0.0
    %v3100 = vmax.f32 %v3058, 0.0
    %v3101 = vmax.f32 %v3061, 0.0
    %v3102 = vmax.f32 %v3066, 0.0
    %v3103 = vmax.f32 %v3069, 0.0
    %vm3104 = vcmp.ge.s32.totalorder %v77, 16
    %vm3105 = vcmp.ge.s32.totalorder %v78, 16
    %vm3106 = vcmp.ge.s32.totalorder %v79, 16
    %vm3107 = vcmp.ge.s32.totalorder %v80, 16
    %v3108 = vsel %vm3104, %v3074, 0.0
    %v3109 = vsel %vm3105, %v3075, 0.0
    %v3110 = vsel %vm3106, %v3072, 0.0
    %v3111 = vsel %vm3107, %v3073, 0.0
    %v3112 = vsel %vm3104, %v3078, 0.0
    %v3113 = vsel %vm3105, %v3079, 0.0
    %v3114 = vsel %vm3106, %v3076, 0.0
    %v3115 = vsel %vm3107, %v3077, 0.0
    %v3116 = vsel %vm3104, %v3082, 0.0
    %v3117 = vsel %vm3105, %v3083, 0.0
    %v3118 = vsel %vm3106, %v3080, 0.0
    %v3119 = vsel %vm3107, %v3081, 0.0
    %v3120 = vsel %vm3104, %v3086, 0.0
    %v3121 = vsel %vm3105, %v3087, 0.0
    %v3122 = vsel %vm3106, %v3084, 0.0
    %v3123 = vsel %vm3107, %v3085, 0.0
    %v3124 = vsel %vm3104, %v3090, 0.0
    %v3125 = vsel %vm3105, %v3091, 0.0
    %v3126 = vsel %vm3106, %v3088, 0.0
    %v3127 = vsel %vm3107, %v3089, 0.0
    %v3128 = vsel %vm3104, %v3094, 0.0
    %v3129 = vsel %vm3105, %v3095, 0.0
    %v3130 = vsel %vm3106, %v3092, 0.0
    %v3131 = vsel %vm3107, %v3093, 0.0
    %v3132 = vsel %vm3104, %v3098, 0.0
    %v3133 = vsel %vm3105, %v3099, 0.0
    %v3134 = vsel %vm3106, %v3096, 0.0
    %v3135 = vsel %vm3107, %v3097, 0.0
    %v3136 = vsel %vm3104, %v3102, 0.0
    %v3137 = vsel %vm3105, %v3103, 0.0
    %v3138 = vsel %vm3106, %v3100, 0.0
    %v3139 = vsel %vm3107, %v3101, 0.0
    %vm3140 = vcmp.lt.s32.totalorder %v77, 16
    %vm3141 = vcmp.lt.s32.totalorder %v78, 16
    %vm3142 = vcmp.lt.s32.totalorder %v79, 16
    %vm3143 = vcmp.lt.s32.totalorder %v80, 16
    %v3144 = vsel %vm3140, %v3074, 0.0
    %v3145 = vsel %vm3141, %v3075, 0.0
    %v3146 = vsel %vm3142, %v3072, 0.0
    %v3147 = vsel %vm3143, %v3073, 0.0
    %v3148 = vsel %vm3140, %v3078, 0.0
    %v3149 = vsel %vm3141, %v3079, 0.0
    %v3150 = vsel %vm3142, %v3076, 0.0
    %v3151 = vsel %vm3143, %v3077, 0.0
    %v3152 = vsel %vm3140, %v3082, 0.0
    %v3153 = vsel %vm3141, %v3083, 0.0
    %v3154 = vsel %vm3142, %v3080, 0.0
    %v3155 = vsel %vm3143, %v3081, 0.0
    %v3156 = vsel %vm3140, %v3086, 0.0
    %v3157 = vsel %vm3141, %v3087, 0.0
    %v3158 = vsel %vm3142, %v3084, 0.0
    %v3159 = vsel %vm3143, %v3085, 0.0
    %v3160 = vsel %vm3140, %v3090, 0.0
    %v3161 = vsel %vm3141, %v3091, 0.0
    %v3162 = vsel %vm3142, %v3088, 0.0
    %v3163 = vsel %vm3143, %v3089, 0.0
    %v3164 = vsel %vm3140, %v3094, 0.0
    %v3165 = vsel %vm3141, %v3095, 0.0
    %v3166 = vsel %vm3142, %v3092, 0.0
    %v3167 = vsel %vm3143, %v3093, 0.0
    %v3168 = vsel %vm3140, %v3098, 0.0
    %v3169 = vsel %vm3141, %v3099, 0.0
    %v3170 = vsel %vm3142, %v3096, 0.0
    %v3171 = vsel %vm3143, %v3097, 0.0
    %v3172 = vsel %vm3140, %v3102, 0.0
    %v3173 = vsel %vm3141, %v3103, 0.0
    %v3174 = vsel %vm3142, %v3100, 0.0
    %v3175 = vsel %vm3143, %v3101, 0.0
    %v3176 = vpack.c.bf16 %v3109, %v3108
    %v3177 = vpack.c.bf16 %v3111, %v3110
    %v3178 = vpack.c.bf16 %v3113, %v3112
    %v3179 = vpack.c.bf16 %v3115, %v3114
    %v3180 = vpack.c.bf16 %v3117, %v3116
    %v3181 = vpack.c.bf16 %v3119, %v3118
    %v3182 = vpack.c.bf16 %v3121, %v3120
    %v3183 = vpack.c.bf16 %v3123, %v3122
    %v3184 = vpack.c.bf16 %v3125, %v3124
    %v3185 = vpack.c.bf16 %v3127, %v3126
    %v3186 = vpack.c.bf16 %v3129, %v3128
    %v3187 = vpack.c.bf16 %v3131, %v3130
    %v3188 = vpack.c.bf16 %v3133, %v3132
    %v3189 = vpack.c.bf16 %v3135, %v3134
    %v3190 = vpack.c.bf16 %v3137, %v3136
    %v3191 = vpack.c.bf16 %v3139, %v3138
    %v3192 = vpack.c.bf16 %v3073, %v3072
    %v3193 = vpack.c.bf16 %v3075, %v3074
    %v3194 = vpack.c.bf16 %v3077, %v3076
    %v3195 = vpack.c.bf16 %v3079, %v3078
    %v3196 = vpack.c.bf16 %v3081, %v3080
    %v3197 = vpack.c.bf16 %v3083, %v3082
    %v3198 = vpack.c.bf16 %v3085, %v3084
    %v3199 = vpack.c.bf16 %v3087, %v3086
    %v3200 = vpack.c.bf16 %v3089, %v3088
    %v3201 = vpack.c.bf16 %v3091, %v3090
    %v3202 = vpack.c.bf16 %v3093, %v3092
    %v3203 = vpack.c.bf16 %v3095, %v3094
    %v3204 = vpack.c.bf16 %v3097, %v3096
    %v3205 = vpack.c.bf16 %v3099, %v3098
    %v3206 = vpack.c.bf16 %v3101, %v3100
    %v3207 = vpack.c.bf16 %v3103, %v3102
    %v3208 = vpack.c.bf16 %v3145, %v3144
    %v3209 = vpack.c.bf16 %v3147, %v3146
    %v3210 = vpack.c.bf16 %v3149, %v3148
    %v3211 = vpack.c.bf16 %v3151, %v3150
    %v3212 = vpack.c.bf16 %v3153, %v3152
    %v3213 = vpack.c.bf16 %v3155, %v3154
    %v3214 = vpack.c.bf16 %v3157, %v3156
    %v3215 = vpack.c.bf16 %v3159, %v3158
    %v3216 = vpack.c.bf16 %v3161, %v3160
    %v3217 = vpack.c.bf16 %v3163, %v3162
    %v3218 = vpack.c.bf16 %v3165, %v3164
    %v3219 = vpack.c.bf16 %v3167, %v3166
    %v3220 = vpack.c.bf16 %v3169, %v3168
    %v3221 = vpack.c.bf16 %v3171, %v3170
    %v3222 = vpack.c.bf16 %v3173, %v3172
    %v3223 = vpack.c.bf16 %v3175, %v3174
    %s3224 = scalar_lea.vmem [#allocation5], 768
    %v3225 = vld [vmem:[%s3224] sm:$0xf]
    %v3226 = vld [vmem:[%s3224 + $0x4] sm:$0xf]
    %v3227 = vld [vmem:[%s3224 + $0x8] sm:$0xf]
    %v3228 = vld [vmem:[%s3224 + $0xc] sm:$0xf]
    %v3229 = vld [vmem:[%s3224 + $0x10] sm:$0xf]
    %v3230 = vld [vmem:[%s3224 + $0x14] sm:$0xf]
    %v3231 = vld [vmem:[%s3224 + $0x18] sm:$0xf]
    %v3232 = vld [vmem:[%s3224 + $0x1c] sm:$0xf]
    %v3233 = vld [vmem:[%s3224 + $0x20] sm:$0xf]
    %v3234 = vld [vmem:[%s3224 + $0x24] sm:$0xf]
    %v3235 = vld [vmem:[%s3224 + $0x28] sm:$0xf]
    %v3236 = vld [vmem:[%s3224 + $0x2c] sm:$0xf]
    %v3237 = vld [vmem:[%s3224 + $0x30] sm:$0xf]
    %v3238 = vld [vmem:[%s3224 + $0x34] sm:$0xf]
    %v3239 = vld [vmem:[%s3224 + $0x38] sm:$0xf]
    %v3240 = vld [vmem:[%s3224 + $0x3c] sm:$0xf]
    %v3241 = vld [vmem:[%s3224 + $0x40] sm:$0xf]
    %v3242 = vld [vmem:[%s3224 + $0x44] sm:$0xf]
    %v3243 = vld [vmem:[%s3224 + $0x48] sm:$0xf]
    %v3244 = vld [vmem:[%s3224 + $0x4c] sm:$0xf]
    %v3245 = vld [vmem:[%s3224 + $0x50] sm:$0xf]
    %v3246 = vld [vmem:[%s3224 + $0x54] sm:$0xf]
    %v3247 = vld [vmem:[%s3224 + $0x58] sm:$0xf]
    %v3248 = vld [vmem:[%s3224 + $0x5c] sm:$0xf]
    %v3249 = vld [vmem:[%s3224 + $0x60] sm:$0xf]
    %v3250 = vld [vmem:[%s3224 + $0x64] sm:$0xf]
    %v3251 = vld [vmem:[%s3224 + $0x68] sm:$0xf]
    %v3252 = vld [vmem:[%s3224 + $0x6c] sm:$0xf]
    %v3253 = vld [vmem:[%s3224 + $0x70] sm:$0xf]
    %v3254 = vld [vmem:[%s3224 + $0x74] sm:$0xf]
    %v3255 = vld [vmem:[%s3224 + $0x78] sm:$0xf]
    %v3256 = vld [vmem:[%s3224 + $0x7c] sm:$0xf]
    %v3257 = vld [vmem:[%s3224 + $0x80] sm:$0xf]
    %v3258 = vld [vmem:[%s3224 + $0x84] sm:$0xf]
    %v3259 = vld [vmem:[%s3224 + $0x88] sm:$0xf]
    %v3260 = vld [vmem:[%s3224 + $0x8c] sm:$0xf]
    %v3261 = vld [vmem:[%s3224 + $0x90] sm:$0xf]
    %v3262 = vld [vmem:[%s3224 + $0x94] sm:$0xf]
    %v3263 = vld [vmem:[%s3224 + $0x98] sm:$0xf]
    %v3264 = vld [vmem:[%s3224 + $0x9c] sm:$0xf]
    %v3265 = vld [vmem:[%s3224 + $0xa0] sm:$0xf]
    %v3266 = vld [vmem:[%s3224 + $0xa4] sm:$0xf]
    %v3267 = vld [vmem:[%s3224 + $0xa8] sm:$0xf]
    %v3268 = vld [vmem:[%s3224 + $0xac] sm:$0xf]
    %v3269 = vld [vmem:[%s3224 + $0xb0] sm:$0xf]
    %v3270 = vld [vmem:[%s3224 + $0xb4] sm:$0xf]
    %v3271 = vld [vmem:[%s3224 + $0xb8] sm:$0xf]
    %v3272 = vld [vmem:[%s3224 + $0xbc] sm:$0xf]
    %s3273 = scalar_lea.vmem %s2, 4
    %v3274 = vld [vmem:[%s3273] sm:$0x1]
    %v3276 = vlaneseq
    %v3277 = vshrl.u32 %v3276, 7
    %v3278 = vsub.s32 0, %v3277
    %v3279 = vrot.slane %v3274, %v3278
    %v3329 = vunpack.c.l.b16 %v3225
    %v3330 = vunpack.c.l.b16 %v3226
    %v3331 = vunpack.c.l.b16 %v3227
    %v3332 = vunpack.c.l.b16 %v3228
    %v3333 = vunpack.c.l.b16 %v3229
    %v3334 = vunpack.c.l.b16 %v3230
    %v3335 = vunpack.c.l.b16 %v3231
    %v3336 = vunpack.c.l.b16 %v3232
    %v3337 = vunpack.c.l.b16 %v3233
    %v3338 = vunpack.c.l.b16 %v3234
    %v3339 = vunpack.c.l.b16 %v3235
    %v3340 = vunpack.c.l.b16 %v3236
    %v3341 = vunpack.c.l.b16 %v3237
    %v3342 = vunpack.c.l.b16 %v3238
    %v3343 = vunpack.c.l.b16 %v3239
    %v3344 = vunpack.c.l.b16 %v3240
    %v3345 = vunpack.c.l.b16 %v3241
    %v3346 = vunpack.c.l.b16 %v3242
    %v3347 = vunpack.c.l.b16 %v3243
    %v3348 = vunpack.c.l.b16 %v3244
    %v3349 = vunpack.c.l.b16 %v3245
    %v3350 = vunpack.c.l.b16 %v3246
    %v3351 = vunpack.c.l.b16 %v3247
    %v3352 = vunpack.c.l.b16 %v3248
    %v3353 = vunpack.c.l.b16 %v3249
    %v3354 = vunpack.c.l.b16 %v3250
    %v3355 = vunpack.c.l.b16 %v3251
    %v3356 = vunpack.c.l.b16 %v3252
    %v3357 = vunpack.c.l.b16 %v3253
    %v3358 = vunpack.c.l.b16 %v3254
    %v3359 = vunpack.c.l.b16 %v3255
    %v3360 = vunpack.c.l.b16 %v3256
    %v3361 = vunpack.c.l.b16 %v3257
    %v3362 = vunpack.c.l.b16 %v3258
    %v3363 = vunpack.c.l.b16 %v3259
    %v3364 = vunpack.c.l.b16 %v3260
    %v3365 = vunpack.c.l.b16 %v3261
    %v3366 = vunpack.c.l.b16 %v3262
    %v3367 = vunpack.c.l.b16 %v3263
    %v3368 = vunpack.c.l.b16 %v3264
    %v3369 = vunpack.c.l.b16 %v3265
    %v3370 = vunpack.c.l.b16 %v3266
    %v3371 = vunpack.c.l.b16 %v3267
    %v3372 = vunpack.c.l.b16 %v3268
    %v3373 = vunpack.c.l.b16 %v3269
    %v3374 = vunpack.c.l.b16 %v3270
    %v3375 = vunpack.c.l.b16 %v3271
    %v3376 = vunpack.c.l.b16 %v3272
    %v3377 = vpack.c.b16 %v3330, %v3329
    %v3378 = vpack.c.b16 %v3332, %v3331
    %v3379 = vpack.c.b16 %v3334, %v3333
    %v3380 = vpack.c.b16 %v3336, %v3335
    %v3381 = vpack.c.b16 %v3338, %v3337
    %v3382 = vpack.c.b16 %v3340, %v3339
    %v3383 = vpack.c.b16 %v3342, %v3341
    %v3384 = vpack.c.b16 %v3344, %v3343
    %v3385 = vpack.c.b16 %v3346, %v3345
    %v3386 = vpack.c.b16 %v3348, %v3347
    %v3387 = vpack.c.b16 %v3350, %v3349
    %v3388 = vpack.c.b16 %v3352, %v3351
    %v3389 = vpack.c.b16 %v3354, %v3353
    %v3390 = vpack.c.b16 %v3356, %v3355
    %v3391 = vpack.c.b16 %v3358, %v3357
    %v3392 = vpack.c.b16 %v3360, %v3359
    %v3393 = vpack.c.b16 %v3362, %v3361
    %v3394 = vpack.c.b16 %v3364, %v3363
    %v3395 = vpack.c.b16 %v3366, %v3365
    %v3396 = vpack.c.b16 %v3368, %v3367
    %v3397 = vpack.c.b16 %v3370, %v3369
    %v3398 = vpack.c.b16 %v3372, %v3371
    %v3399 = vpack.c.b16 %v3374, %v3373
    %v3400 = vpack.c.b16 %v3376, %v3375
    %3425 = vmatprep.subr.bf16.mxu0 0
    %3426 = vmatpush1.bf16.msra.mxu0 %v3377
    %3427 = vmatprep.subr.bf16.mxu0 0
    %3428 = vmatpush1.bf16.msra.mxu0 %v3378
    %3429 = vmatprep.subr.bf16.mxu0 0
    %3430 = vmatpush1.bf16.msra.mxu0 %v3379
    %3431 = vmatprep.subr.bf16.mxu0 0
    %3432 = vmatpush1.bf16.msra.mxu0 %v3380
    %3433 = vmatprep.subr.bf16.mxu0 0
    %3434 = vmatpush1.bf16.msra.mxu0 %v3381
    %3435 = vmatprep.subr.bf16.mxu0 0
    %3436 = vmatpush1.bf16.msra.mxu0 %v3382
    %3437 = vmatprep.subr.bf16.mxu0 0
    %3438 = vmatpush1.bf16.msra.mxu0 %v3383
    %3439 = vmatprep.subr.bf16.mxu0 0
    %3440 = vmatpush1.bf16.msra.mxu0 %v3384
    %3441 = vmatprep.subr.bf16.mxu0 0
    %3442 = vmatpush1.bf16.msra.mxu0 %v3385
    %3443 = vmatprep.subr.bf16.mxu0 0
    %3444 = vmatpush1.bf16.msra.mxu0 %v3386
    %3445 = vmatprep.subr.bf16.mxu0 0
    %3446 = vmatpush1.bf16.msra.mxu0 %v3387
    %3447 = vmatprep.subr.bf16.mxu0 0
    %3448 = vmatpush1.bf16.msra.mxu0 %v3388
    %3449 = vmatprep.subr.bf16.mxu0 0
    %3450 = vmatpush1.bf16.msra.mxu0 %v3389
    %3451 = vmatprep.subr.bf16.mxu0 0
    %3452 = vmatpush1.bf16.msra.mxu0 %v3390
    %3453 = vmatprep.subr.bf16.mxu0 0
    %3454 = vmatpush1.bf16.msra.mxu0 %v3391
    %3455 = vmatprep.subr.bf16.mxu0 0
    %3456 = vmatpush1.bf16.msra.mxu0 %v3392
    %3457 = vmatprep.mubr.bf16.mxu0 %v3192
    %3458 = vmatmul.mubr.bf16.gmra.mrb[0].mxu0 %v3176
    %v3459 = vpop.f32.mrb[0].mxu0
    %v3460 = vadd.f32 %v3279, %v3459
    %v3461 = vpop.f32.mrb[0].mxu0
    %v3462 = vpop.f32.mrb[0].mxu0
    %v3463 = vadd.f32 %v3279, %v3462
    %v3464 = vpop.f32.mrb[0].mxu0
    %3465 = vmatprep.mubr.bf16.mxu0 %v3193
    %3466 = vmatmul.mubr.bf16.gmra.mrb[0].mxu0 %v3177
    %v3467 = vpop.f32.mrb[0].mxu0
    %v3468 = vadd.f32 %v3279, %v3467
    %v3469 = vpop.f32.mrb[0].mxu0
    %v3470 = vpop.f32.mrb[0].mxu0
    %v3471 = vadd.f32 %v3279, %v3470
    %v3472 = vpop.f32.mrb[0].mxu0
    %3473 = vmatprep.mubr.bf16.mxu0 %v3194
    %3474 = vmatmul.mubr.bf16.gmra.mrb[0].mxu0 %v3178
    %v3475 = vpop.f32.mrb[0].mxu0
    %v3476 = vadd.f32 %v3279, %v3475
    %v3477 = vpop.f32.mrb[0].mxu0
    %v3478 = vpop.f32.mrb[0].mxu0
    %v3479 = vadd.f32 %v3279, %v3478
    %v3480 = vpop.f32.mrb[0].mxu0
    %3481 = vmatprep.mubr.bf16.mxu0 %v3195
    %3482 = vmatmul.mubr.bf16.gmra.mrb[0].mxu0 %v3179
    %v3483 = vpop.f32.mrb[0].mxu0
    %v3484 = vadd.f32 %v3279, %v3483
    %v3485 = vpop.f32.mrb[0].mxu0
    %v3486 = vpop.f32.mrb[0].mxu0
    %v3487 = vadd.f32 %v3279, %v3486
    %v3488 = vpop.f32.mrb[0].mxu0
    %3489 = vmatprep.mubr.bf16.mxu0 %v3196
    %3490 = vmatmul.mubr.bf16.gmra.mrb[0].mxu0 %v3180
    %v3491 = vpop.f32.mrb[0].mxu0
    %v3492 = vadd.f32 %v3279, %v3491
    %v3493 = vpop.f32.mrb[0].mxu0
    %v3494 = vpop.f32.mrb[0].mxu0
    %v3495 = vadd.f32 %v3279, %v3494
    %v3496 = vpop.f32.mrb[0].mxu0
    %3497 = vmatprep.mubr.bf16.mxu0 %v3197
    %3498 = vmatmul.mubr.bf16.gmra.mrb[0].mxu0 %v3181
    %v3499 = vpop.f32.mrb[0].mxu0
    %v3500 = vadd.f32 %v3279, %v3499
    %v3501 = vpop.f32.mrb[0].mxu0
    %v3502 = vpop.f32.mrb[0].mxu0
    %v3503 = vadd.f32 %v3279, %v3502
    %v3504 = vpop.f32.mrb[0].mxu0
    %3505 = vmatprep.mubr.bf16.mxu0 %v3198
    %3506 = vmatmul.mubr.bf16.gmra.mrb[0].mxu0 %v3182
    %v3507 = vpop.f32.mrb[0].mxu0
    %v3508 = vadd.f32 %v3279, %v3507
    %v3509 = vpop.f32.mrb[0].mxu0
    %v3510 = vpop.f32.mrb[0].mxu0
    %v3511 = vadd.f32 %v3279, %v3510
    %v3512 = vpop.f32.mrb[0].mxu0
    %3513 = vmatprep.mubr.bf16.mxu0 %v3199
    %3514 = vmatmul.mubr.bf16.gmra.mrb[0].mxu0 %v3183
    %v3515 = vpop.f32.mrb[0].mxu0
    %v3516 = vadd.f32 %v3279, %v3515
    %v3517 = vpop.f32.mrb[0].mxu0
    %v3518 = vpop.f32.mrb[0].mxu0
    %v3519 = vadd.f32 %v3279, %v3518
    %v3520 = vpop.f32.mrb[0].mxu0
    %3521 = vmatprep.mubr.bf16.mxu0 %v3200
    %3522 = vmatmul.mubr.bf16.gmra.mrb[0].mxu0 %v3184
    %v3523 = vpop.f32.mrb[0].mxu0
    %v3524 = vadd.f32 %v3279, %v3523
    %v3525 = vpop.f32.mrb[0].mxu0
    %v3526 = vpop.f32.mrb[0].mxu0
    %v3527 = vadd.f32 %v3279, %v3526
    %v3528 = vpop.f32.mrb[0].mxu0
    %3529 = vmatprep.mubr.bf16.mxu0 %v3201
    %3530 = vmatmul.mubr.bf16.gmra.mrb[0].mxu0 %v3185
    %v3531 = vpop.f32.mrb[0].mxu0
    %v3532 = vadd.f32 %v3279, %v3531
    %v3533 = vpop.f32.mrb[0].mxu0
    %v3534 = vpop.f32.mrb[0].mxu0
    %v3535 = vadd.f32 %v3279, %v3534
    %v3536 = vpop.f32.mrb[0].mxu0
    %3537 = vmatprep.mubr.bf16.mxu0 %v3202
    %3538 = vmatmul.mubr.bf16.gmra.mrb[0].mxu0 %v3186
    %v3539 = vpop.f32.mrb[0].mxu0
    %v3540 = vadd.f32 %v3279, %v3539
    %v3541 = vpop.f32.mrb[0].mxu0
    %v3542 = vpop.f32.mrb[0].mxu0
    %v3543 = vadd.f32 %v3279, %v3542
    %v3544 = vpop.f32.mrb[0].mxu0
    %3545 = vmatprep.mubr.bf16.mxu0 %v3203
    %3546 = vmatmul.mubr.bf16.gmra.mrb[0].mxu0 %v3187
    %v3547 = vpop.f32.mrb[0].mxu0
    %v3548 = vadd.f32 %v3279, %v3547
    %v3549 = vpop.f32.mrb[0].mxu0
    %v3550 = vpop.f32.mrb[0].mxu0
    %v3551 = vadd.f32 %v3279, %v3550
    %v3552 = vpop.f32.mrb[0].mxu0
    %3553 = vmatprep.mubr.bf16.mxu0 %v3204
    %3554 = vmatmul.mubr.bf16.gmra.mrb[0].mxu0 %v3188
    %v3555 = vpop.f32.mrb[0].mxu0
    %v3556 = vadd.f32 %v3279, %v3555
    %v3557 = vpop.f32.mrb[0].mxu0
    %v3558 = vpop.f32.mrb[0].mxu0
    %v3559 = vadd.f32 %v3279, %v3558
    %v3560 = vpop.f32.mrb[0].mxu0
    %3561 = vmatprep.mubr.bf16.mxu0 %v3205
    %3562 = vmatmul.mubr.bf16.gmra.mrb[0].mxu0 %v3189
    %v3563 = vpop.f32.mrb[0].mxu0
    %v3564 = vadd.f32 %v3279, %v3563
    %v3565 = vpop.f32.mrb[0].mxu0
    %v3566 = vpop.f32.mrb[0].mxu0
    %v3567 = vadd.f32 %v3279, %v3566
    %v3568 = vpop.f32.mrb[0].mxu0
    %3569 = vmatprep.mubr.bf16.mxu0 %v3206
    %3570 = vmatmul.mubr.bf16.gmra.mrb[0].mxu0 %v3190
    %v3571 = vpop.f32.mrb[0].mxu0
    %v3572 = vadd.f32 %v3279, %v3571
    %v3573 = vpop.f32.mrb[0].mxu0
    %v3574 = vpop.f32.mrb[0].mxu0
    %v3575 = vadd.f32 %v3279, %v3574
    %v3576 = vpop.f32.mrb[0].mxu0
    %3577 = vmatprep.mubr.bf16.mxu0 %v3207
    %3578 = vmatmul.mubr.bf16.gmra.mrb[0].mxu0 %v3191
    %v3579 = vpop.f32.mrb[0].mxu0
    %v3580 = vadd.f32 %v3279, %v3579
    %v3581 = vpop.f32.mrb[0].mxu0
    %v3582 = vpop.f32.mrb[0].mxu0
    %v3583 = vadd.f32 %v3279, %v3582
    %v3584 = vpop.f32.mrb[0].mxu0
    %3585 = vdwg.mxu0
    %3586 = vmatprep.subr.bf16.mxu0 0
    %3587 = vmatpush1.bf16.msra.mxu0 %v3393
    %3588 = vmatprep.subr.bf16.mxu0 0
    %3589 = vmatpush1.bf16.msra.mxu0 %v3394
    %3590 = vmatprep.subr.bf16.mxu0 0
    %3591 = vmatpush1.bf16.msra.mxu0 %v3395
    %3592 = vmatprep.subr.bf16.mxu0 0
    %3593 = vmatpush1.bf16.msra.mxu0 %v3396
    %3594 = vmatprep.subr.bf16.mxu0 0
    %3595 = vmatpush1.bf16.msra.mxu0 %v3397
    %3596 = vmatprep.subr.bf16.mxu0 0
    %3597 = vmatpush1.bf16.msra.mxu0 %v3398
    %3598 = vmatprep.subr.bf16.mxu0 0
    %3599 = vmatpush1.bf16.msra.mxu0 %v3399
    %3600 = vmatprep.subr.bf16.mxu0 0
    %3601 = vmatpush1.bf16.msra.mxu0 %v3400
    %3602 = vmatprep.subr.bf16.mxu0 0
    %3603 = vmatpush1.bf16.msra.mxu0 0
    %3604 = vmatprep.subr.bf16.mxu0 0
    %3605 = vmatpush1.bf16.msra.mxu0 0
    %3606 = vmatprep.subr.bf16.mxu0 0
    %3607 = vmatpush1.bf16.msra.mxu0 0
    %3608 = vmatprep.subr.bf16.mxu0 0
    %3609 = vmatpush1.bf16.msra.mxu0 0
    %3610 = vmatprep.subr.bf16.mxu0 0
    %3611 = vmatpush1.bf16.msra.mxu0 0
    %3612 = vmatprep.subr.bf16.mxu0 0
    %3613 = vmatpush1.bf16.msra.mxu0 0
    %3614 = vmatprep.subr.bf16.mxu0 0
    %3615 = vmatpush1.bf16.msra.mxu0 0
    %3616 = vmatprep.subr.bf16.mxu0 0
    %3617 = vmatpush1.bf16.msra.mxu0 0
    %3618 = vmatprep.mubr.bf16.mxu0 0
    %3619 = vmatmul.mubr.bf16.gmra.mrb[0].mxu0 %v3208
    %v3620 = vpop.f32.mrb[0].mxu0
    %v3621 = vadd.f32 %v3460, %v3620
    %v3622 = vpop.f32.mrb[0].mxu0
    %v3623 = vpop.f32.mrb[0].mxu0
    %v3624 = vadd.f32 %v3463, %v3623
    %v3625 = vpop.f32.mrb[0].mxu0
    %3626 = vmatprep.mubr.bf16.mxu0 0
    %3627 = vmatmul.mubr.bf16.gmra.mrb[0].mxu0 %v3209
    %v3628 = vpop.f32.mrb[0].mxu0
    %v3629 = vadd.f32 %v3468, %v3628
    %v3630 = vpop.f32.mrb[0].mxu0
    %v3631 = vpop.f32.mrb[0].mxu0
    %v3632 = vadd.f32 %v3471, %v3631
    %v3633 = vpop.f32.mrb[0].mxu0
    %3634 = vmatprep.mubr.bf16.mxu0 0
    %3635 = vmatmul.mubr.bf16.gmra.mrb[0].mxu0 %v3210
    %v3636 = vpop.f32.mrb[0].mxu0
    %v3637 = vadd.f32 %v3476, %v3636
    %v3638 = vpop.f32.mrb[0].mxu0
    %v3639 = vpop.f32.mrb[0].mxu0
    %v3640 = vadd.f32 %v3479, %v3639
    %v3641 = vpop.f32.mrb[0].mxu0
    %3642 = vmatprep.mubr.bf16.mxu0 0
    %3643 = vmatmul.mubr.bf16.gmra.mrb[0].mxu0 %v3211
    %v3644 = vpop.f32.mrb[0].mxu0
    %v3645 = vadd.f32 %v3484, %v3644
    %v3646 = vpop.f32.mrb[0].mxu0
    %v3647 = vpop.f32.mrb[0].mxu0
    %v3648 = vadd.f32 %v3487, %v3647
    %v3649 = vpop.f32.mrb[0].mxu0
    %3650 = vmatprep.mubr.bf16.mxu0 0
    %3651 = vmatmul.mubr.bf16.gmra.mrb[0].mxu0 %v3212
    %v3652 = vpop.f32.mrb[0].mxu0
    %v3653 = vadd.f32 %v3492, %v3652
    %v3654 = vpop.f32.mrb[0].mxu0
    %v3655 = vpop.f32.mrb[0].mxu0
    %v3656 = vadd.f32 %v3495, %v3655
    %v3657 = vpop.f32.mrb[0].mxu0
    %3658 = vmatprep.mubr.bf16.mxu0 0
    %3659 = vmatmul.mubr.bf16.gmra.mrb[0].mxu0 %v3213
    %v3660 = vpop.f32.mrb[0].mxu0
    %v3661 = vadd.f32 %v3500, %v3660
    %v3662 = vpop.f32.mrb[0].mxu0
    %v3663 = vpop.f32.mrb[0].mxu0
    %v3664 = vadd.f32 %v3503, %v3663
    %v3665 = vpop.f32.mrb[0].mxu0
    %3666 = vmatprep.mubr.bf16.mxu0 0
    %3667 = vmatmul.mubr.bf16.gmra.mrb[0].mxu0 %v3214
    %v3668 = vpop.f32.mrb[0].mxu0
    %v3669 = vadd.f32 %v3508, %v3668
    %v3670 = vpop.f32.mrb[0].mxu0
    %v3671 = vpop.f32.mrb[0].mxu0
    %v3672 = vadd.f32 %v3511, %v3671
    %v3673 = vpop.f32.mrb[0].mxu0
    %3674 = vmatprep.mubr.bf16.mxu0 0
    %3675 = vmatmul.mubr.bf16.gmra.mrb[0].mxu0 %v3215
    %v3676 = vpop.f32.mrb[0].mxu0
    %v3677 = vadd.f32 %v3516, %v3676
    %v3678 = vpop.f32.mrb[0].mxu0
    %v3679 = vpop.f32.mrb[0].mxu0
    %v3680 = vadd.f32 %v3519, %v3679
    %v3681 = vpop.f32.mrb[0].mxu0
    %3682 = vmatprep.mubr.bf16.mxu0 0
    %3683 = vmatmul.mubr.bf16.gmra.mrb[0].mxu0 %v3216
    %v3684 = vpop.f32.mrb[0].mxu0
    %v3685 = vadd.f32 %v3524, %v3684
    %v3686 = vpop.f32.mrb[0].mxu0
    %v3687 = vpop.f32.mrb[0].mxu0
    %v3688 = vadd.f32 %v3527, %v3687
    %v3689 = vpop.f32.mrb[0].mxu0
    %3690 = vmatprep.mubr.bf16.mxu0 0
    %3691 = vmatmul.mubr.bf16.gmra.mrb[0].mxu0 %v3217
    %v3692 = vpop.f32.mrb[0].mxu0
    %v3693 = vadd.f32 %v3532, %v3692
    %v3694 = vpop.f32.mrb[0].mxu0
    %v3695 = vpop.f32.mrb[0].mxu0
    %v3696 = vadd.f32 %v3535, %v3695
    %v3697 = vpop.f32.mrb[0].mxu0
    %3698 = vmatprep.mubr.bf16.mxu0 0
    %3699 = vmatmul.mubr.bf16.gmra.mrb[0].mxu0 %v3218
    %v3700 = vpop.f32.mrb[0].mxu0
    %v3701 = vadd.f32 %v3540, %v3700
    %v3702 = vpop.f32.mrb[0].mxu0
    %v3703 = vpop.f32.mrb[0].mxu0
    %v3704 = vadd.f32 %v3543, %v3703
    %v3705 = vpop.f32.mrb[0].mxu0
    %3706 = vmatprep.mubr.bf16.mxu0 0
    %3707 = vmatmul.mubr.bf16.gmra.mrb[0].mxu0 %v3219
    %v3708 = vpop.f32.mrb[0].mxu0
    %v3709 = vadd.f32 %v3548, %v3708
    %v3710 = vpop.f32.mrb[0].mxu0
    %v3711 = vpop.f32.mrb[0].mxu0
    %v3712 = vadd.f32 %v3551, %v3711
    %v3713 = vpop.f32.mrb[0].mxu0
    %3714 = vmatprep.mubr.bf16.mxu0 0
    %3715 = vmatmul.mubr.bf16.gmra.mrb[0].mxu0 %v3220
    %v3716 = vpop.f32.mrb[0].mxu0
    %v3717 = vadd.f32 %v3556, %v3716
    %v3718 = vpop.f32.mrb[0].mxu0
    %v3719 = vpop.f32.mrb[0].mxu0
    %v3720 = vadd.f32 %v3559, %v3719
    %v3721 = vpop.f32.mrb[0].mxu0
    %3722 = vmatprep.mubr.bf16.mxu0 0
    %3723 = vmatmul.mubr.bf16.gmra.mrb[0].mxu0 %v3221
    %v3724 = vpop.f32.mrb[0].mxu0
    %v3725 = vadd.f32 %v3564, %v3724
    %v3726 = vpop.f32.mrb[0].mxu0
    %v3727 = vpop.f32.mrb[0].mxu0
    %v3728 = vadd.f32 %v3567, %v3727
    %v3729 = vpop.f32.mrb[0].mxu0
    %3730 = vmatprep.mubr.bf16.mxu0 0
    %3731 = vmatmul.mubr.bf16.gmra.mrb[0].mxu0 %v3222
    %v3732 = vpop.f32.mrb[0].mxu0
    %v3733 = vadd.f32 %v3572, %v3732
    %v3734 = vpop.f32.mrb[0].mxu0
    %v3735 = vpop.f32.mrb[0].mxu0
    %v3736 = vadd.f32 %v3575, %v3735
    %v3737 = vpop.f32.mrb[0].mxu0
    %3738 = vmatprep.mubr.bf16.mxu0 0
    %3739 = vmatmul.mubr.bf16.gmra.mrb[0].mxu0 %v3223
    %v3740 = vpop.f32.mrb[0].mxu0
    %v3741 = vadd.f32 %v3580, %v3740
    %v3742 = vpop.f32.mrb[0].mxu0
    %v3743 = vpop.f32.mrb[0].mxu0
    %v3744 = vadd.f32 %v3583, %v3743
    %v3745 = vpop.f32.mrb[0].mxu0
    %3746 = vdwg.mxu0
    %v3747 = vmax.f32 %v3621, 0.0
    %v3748 = vmax.f32 %v3624, 0.0
    %v3749 = vmax.f32 %v3629, 0.0
    %v3750 = vmax.f32 %v3632, 0.0
    %v3751 = vmax.f32 %v3637, 0.0
    %v3752 = vmax.f32 %v3640, 0.0
    %v3753 = vmax.f32 %v3645, 0.0
    %v3754 = vmax.f32 %v3648, 0.0
    %v3755 = vmax.f32 %v3653, 0.0
    %v3756 = vmax.f32 %v3656, 0.0
    %v3757 = vmax.f32 %v3661, 0.0
    %v3758 = vmax.f32 %v3664, 0.0
    %v3759 = vmax.f32 %v3669, 0.0
    %v3760 = vmax.f32 %v3672, 0.0
    %v3761 = vmax.f32 %v3677, 0.0
    %v3762 = vmax.f32 %v3680, 0.0
    %v3763 = vmax.f32 %v3685, 0.0
    %v3764 = vmax.f32 %v3688, 0.0
    %v3765 = vmax.f32 %v3693, 0.0
    %v3766 = vmax.f32 %v3696, 0.0
    %v3767 = vmax.f32 %v3701, 0.0
    %v3768 = vmax.f32 %v3704, 0.0
    %v3769 = vmax.f32 %v3709, 0.0
    %v3770 = vmax.f32 %v3712, 0.0
    %v3771 = vmax.f32 %v3717, 0.0
    %v3772 = vmax.f32 %v3720, 0.0
    %v3773 = vmax.f32 %v3725, 0.0
    %v3774 = vmax.f32 %v3728, 0.0
    %v3775 = vmax.f32 %v3733, 0.0
    %v3776 = vmax.f32 %v3736, 0.0
    %v3777 = vmax.f32 %v3741, 0.0
    %v3778 = vmax.f32 %v3744, 0.0
    %v3779 = vpack.c.bf16 %v3748, %v3747
    %v3780 = vpack.c.bf16 %v3750, %v3749
    %v3781 = vpack.c.bf16 %v3752, %v3751
    %v3782 = vpack.c.bf16 %v3754, %v3753
    %v3783 = vpack.c.bf16 %v3756, %v3755
    %v3784 = vpack.c.bf16 %v3758, %v3757
    %v3785 = vpack.c.bf16 %v3760, %v3759
    %v3786 = vpack.c.bf16 %v3762, %v3761
    %v3787 = vpack.c.bf16 %v3764, %v3763
    %v3788 = vpack.c.bf16 %v3766, %v3765
    %v3789 = vpack.c.bf16 %v3768, %v3767
    %v3790 = vpack.c.bf16 %v3770, %v3769
    %v3791 = vpack.c.bf16 %v3772, %v3771
    %v3792 = vpack.c.bf16 %v3774, %v3773
    %v3793 = vpack.c.bf16 %v3776, %v3775
    %v3794 = vpack.c.bf16 %v3778, %v3777
    %s3795 = scalar_lea.vmem [#allocation5], 960
    %v3796 = vld [vmem:[%s3795 + $0x40] sm:$0xf]
    %v3797 = vld [vmem:[%s3795 + $0x44] sm:$0xf]
    %v3798 = vld [vmem:[%s3795 + $0x48] sm:$0xf]
    %v3799 = vld [vmem:[%s3795 + $0x4c] sm:$0xf]
    %v3800 = vld [vmem:[%s3795 + $0x50] sm:$0xf]
    %v3801 = vld [vmem:[%s3795 + $0x54] sm:$0xf]
    %v3802 = vld [vmem:[%s3795 + $0x58] sm:$0xf]
    %v3803 = vld [vmem:[%s3795 + $0x5c] sm:$0xf]
    %v3804 = vld [vmem:[%s3795 + $0x60] sm:$0xf]
    %v3805 = vld [vmem:[%s3795 + $0x64] sm:$0xf]
    %v3806 = vld [vmem:[%s3795 + $0x68] sm:$0xf]
    %v3807 = vld [vmem:[%s3795 + $0x6c] sm:$0xf]
    %v3808 = vld [vmem:[%s3795 + $0x70] sm:$0xf]
    %v3809 = vld [vmem:[%s3795 + $0x74] sm:$0xf]
    %v3810 = vld [vmem:[%s3795 + $0x78] sm:$0xf]
    %v3811 = vld [vmem:[%s3795 + $0x7c] sm:$0xf]
    %s3812 = scalar_lea.vmem %s2, 5
    %v3813 = vld [vmem:[%s3812] sm:$0x1]
    %v3815 = vlaneseq
    %v3816 = vshrl.u32 %v3815, 7
    %v3817 = vsub.s32 0, %v3816
    %v3818 = vrot.slane %v3813, %v3817
    %v3836 = vunpack.c.l.b16 %v3796
    %v3837 = vunpack.c.l.b16 %v3797
    %v3838 = vunpack.c.l.b16 %v3798
    %v3839 = vunpack.c.l.b16 %v3799
    %v3840 = vunpack.c.l.b16 %v3800
    %v3841 = vunpack.c.l.b16 %v3801
    %v3842 = vunpack.c.l.b16 %v3802
    %v3843 = vunpack.c.l.b16 %v3803
    %v3844 = vunpack.c.l.b16 %v3804
    %v3845 = vunpack.c.l.b16 %v3805
    %v3846 = vunpack.c.l.b16 %v3806
    %v3847 = vunpack.c.l.b16 %v3807
    %v3848 = vunpack.c.l.b16 %v3808
    %v3849 = vunpack.c.l.b16 %v3809
    %v3850 = vunpack.c.l.b16 %v3810
    %v3851 = vunpack.c.l.b16 %v3811
    %v3852 = vpack.c.b16 %v3837, %v3836
    %v3853 = vpack.c.b16 %v3839, %v3838
    %v3854 = vpack.c.b16 %v3841, %v3840
    %v3855 = vpack.c.b16 %v3843, %v3842
    %v3856 = vpack.c.b16 %v3845, %v3844
    %v3857 = vpack.c.b16 %v3847, %v3846
    %v3858 = vpack.c.b16 %v3849, %v3848
    %v3859 = vpack.c.b16 %v3851, %v3850
    %3868 = vmatprep.subr.bf16.mxu0 0
    %3869 = vmatpush1.bf16.msra.mxu0 %v3852
    %3870 = vmatprep.subr.bf16.mxu0 0
    %3871 = vmatpush1.bf16.msra.mxu0 %v3853
    %3872 = vmatprep.subr.bf16.mxu0 0
    %3873 = vmatpush1.bf16.msra.mxu0 %v3854
    %3874 = vmatprep.subr.bf16.mxu0 0
    %3875 = vmatpush1.bf16.msra.mxu0 %v3855
    %3876 = vmatprep.subr.bf16.mxu0 0
    %3877 = vmatpush1.bf16.msra.mxu0 %v3856
    %3878 = vmatprep.subr.bf16.mxu0 0
    %3879 = vmatpush1.bf16.msra.mxu0 %v3857
    %3880 = vmatprep.subr.bf16.mxu0 0
    %3881 = vmatpush1.bf16.msra.mxu0 %v3858
    %3882 = vmatprep.subr.bf16.mxu0 0
    %3883 = vmatpush1.bf16.msra.mxu0 %v3859
    %3884 = vmatprep.subr.bf16.mxu0 0
    %3885 = vmatpush1.bf16.msra.mxu0 0
    %3886 = vmatprep.subr.bf16.mxu0 0
    %3887 = vmatpush1.bf16.msra.mxu0 0
    %3888 = vmatprep.subr.bf16.mxu0 0
    %3889 = vmatpush1.bf16.msra.mxu0 0
    %3890 = vmatprep.subr.bf16.mxu0 0
    %3891 = vmatpush1.bf16.msra.mxu0 0
    %3892 = vmatprep.subr.bf16.mxu0 0
    %3893 = vmatpush1.bf16.msra.mxu0 0
    %3894 = vmatprep.subr.bf16.mxu0 0
    %3895 = vmatpush1.bf16.msra.mxu0 0
    %3896 = vmatprep.subr.bf16.mxu0 0
    %3897 = vmatpush1.bf16.msra.mxu0 0
    %3898 = vmatprep.subr.bf16.mxu0 0
    %3899 = vmatpush1.bf16.msra.mxu0 0
    %3900 = vmatprep.mubr.bf16.mxu0 0
    %3901 = vmatmul.mubr.bf16.gmra.mrb[0].mxu0 %v3779
    %v3902 = vpop.f32.mrb[0].mxu0
    %v3903 = vadd.f32 %v3818, %v3902
    %v3904 = vpop.f32.mrb[0].mxu0
    %v3905 = vpop.f32.mrb[0].mxu0
    %v3906 = vadd.f32 %v3818, %v3905
    %v3907 = vpop.f32.mrb[0].mxu0
    %3908 = vmatprep.mubr.bf16.mxu0 0
    %3909 = vmatmul.mubr.bf16.gmra.mrb[0].mxu0 %v3780
    %v3910 = vpop.f32.mrb[0].mxu0
    %v3911 = vadd.f32 %v3818, %v3910
    %v3912 = vpop.f32.mrb[0].mxu0
    %v3913 = vpop.f32.mrb[0].mxu0
    %v3914 = vadd.f32 %v3818, %v3913
    %v3915 = vpop.f32.mrb[0].mxu0
    %3916 = vmatprep.mubr.bf16.mxu0 0
    %3917 = vmatmul.mubr.bf16.gmra.mrb[0].mxu0 %v3781
    %v3918 = vpop.f32.mrb[0].mxu0
    %v3919 = vadd.f32 %v3818, %v3918
    %v3920 = vpop.f32.mrb[0].mxu0
    %v3921 = vpop.f32.mrb[0].mxu0
    %v3922 = vadd.f32 %v3818, %v3921
    %v3923 = vpop.f32.mrb[0].mxu0
    %3924 = vmatprep.mubr.bf16.mxu0 0
    %3925 = vmatmul.mubr.bf16.gmra.mrb[0].mxu0 %v3782
    %v3926 = vpop.f32.mrb[0].mxu0
    %v3927 = vadd.f32 %v3818, %v3926
    %v3928 = vpop.f32.mrb[0].mxu0
    %v3929 = vpop.f32.mrb[0].mxu0
    %v3930 = vadd.f32 %v3818, %v3929
    %v3931 = vpop.f32.mrb[0].mxu0
    %3932 = vmatprep.mubr.bf16.mxu0 0
    %3933 = vmatmul.mubr.bf16.gmra.mrb[0].mxu0 %v3783
    %v3934 = vpop.f32.mrb[0].mxu0
    %v3935 = vadd.f32 %v3818, %v3934
    %v3936 = vpop.f32.mrb[0].mxu0
    %v3937 = vpop.f32.mrb[0].mxu0
    %v3938 = vadd.f32 %v3818, %v3937
    %v3939 = vpop.f32.mrb[0].mxu0
    %3940 = vmatprep.mubr.bf16.mxu0 0
    %3941 = vmatmul.mubr.bf16.gmra.mrb[0].mxu0 %v3784
    %v3942 = vpop.f32.mrb[0].mxu0
    %v3943 = vadd.f32 %v3818, %v3942
    %v3944 = vpop.f32.mrb[0].mxu0
    %v3945 = vpop.f32.mrb[0].mxu0
    %v3946 = vadd.f32 %v3818, %v3945
    %v3947 = vpop.f32.mrb[0].mxu0
    %3948 = vmatprep.mubr.bf16.mxu0 0
    %3949 = vmatmul.mubr.bf16.gmra.mrb[0].mxu0 %v3785
    %v3950 = vpop.f32.mrb[0].mxu0
    %v3951 = vadd.f32 %v3818, %v3950
    %v3952 = vpop.f32.mrb[0].mxu0
    %v3953 = vpop.f32.mrb[0].mxu0
    %v3954 = vadd.f32 %v3818, %v3953
    %v3955 = vpop.f32.mrb[0].mxu0
    %3956 = vmatprep.mubr.bf16.mxu0 0
    %3957 = vmatmul.mubr.bf16.gmra.mrb[0].mxu0 %v3786
    %v3958 = vpop.f32.mrb[0].mxu0
    %v3959 = vadd.f32 %v3818, %v3958
    %v3960 = vpop.f32.mrb[0].mxu0
    %v3961 = vpop.f32.mrb[0].mxu0
    %v3962 = vadd.f32 %v3818, %v3961
    %v3963 = vpop.f32.mrb[0].mxu0
    %3964 = vmatprep.mubr.bf16.mxu0 0
    %3965 = vmatmul.mubr.bf16.gmra.mrb[0].mxu0 %v3787
    %v3966 = vpop.f32.mrb[0].mxu0
    %v3967 = vadd.f32 %v3818, %v3966
    %v3968 = vpop.f32.mrb[0].mxu0
    %v3969 = vpop.f32.mrb[0].mxu0
    %v3970 = vadd.f32 %v3818, %v3969
    %v3971 = vpop.f32.mrb[0].mxu0
    %3972 = vmatprep.mubr.bf16.mxu0 0
    %3973 = vmatmul.mubr.bf16.gmra.mrb[0].mxu0 %v3788
    %v3974 = vpop.f32.mrb[0].mxu0
    %v3975 = vadd.f32 %v3818, %v3974
    %v3976 = vpop.f32.mrb[0].mxu0
    %v3977 = vpop.f32.mrb[0].mxu0
    %v3978 = vadd.f32 %v3818, %v3977
    %v3979 = vpop.f32.mrb[0].mxu0
    %3980 = vmatprep.mubr.bf16.mxu0 0
    %3981 = vmatmul.mubr.bf16.gmra.mrb[0].mxu0 %v3789
    %v3982 = vpop.f32.mrb[0].mxu0
    %v3983 = vadd.f32 %v3818, %v3982
    %v3984 = vpop.f32.mrb[0].mxu0
    %v3985 = vpop.f32.mrb[0].mxu0
    %v3986 = vadd.f32 %v3818, %v3985
    %v3987 = vpop.f32.mrb[0].mxu0
    %3988 = vmatprep.mubr.bf16.mxu0 0
    %3989 = vmatmul.mubr.bf16.gmra.mrb[0].mxu0 %v3790
    %v3990 = vpop.f32.mrb[0].mxu0
    %v3991 = vadd.f32 %v3818, %v3990
    %v3992 = vpop.f32.mrb[0].mxu0
    %v3993 = vpop.f32.mrb[0].mxu0
    %v3994 = vadd.f32 %v3818, %v3993
    %v3995 = vpop.f32.mrb[0].mxu0
    %3996 = vmatprep.mubr.bf16.mxu0 0
    %3997 = vmatmul.mubr.bf16.gmra.mrb[0].mxu0 %v3791
    %v3998 = vpop.f32.mrb[0].mxu0
    %v3999 = vadd.f32 %v3818, %v3998
    %v4000 = vpop.f32.mrb[0].mxu0
    %v4001 = vpop.f32.mrb[0].mxu0
    %v4002 = vadd.f32 %v3818, %v4001
    %v4003 = vpop.f32.mrb[0].mxu0
    %4004 = vmatprep.mubr.bf16.mxu0 0
    %4005 = vmatmul.mubr.bf16.gmra.mrb[0].mxu0 %v3792
    %v4006 = vpop.f32.mrb[0].mxu0
    %v4007 = vadd.f32 %v3818, %v4006
    %v4008 = vpop.f32.mrb[0].mxu0
    %v4009 = vpop.f32.mrb[0].mxu0
    %v4010 = vadd.f32 %v3818, %v4009
    %v4011 = vpop.f32.mrb[0].mxu0
    %4012 = vmatprep.mubr.bf16.mxu0 0
    %4013 = vmatmul.mubr.bf16.gmra.mrb[0].mxu0 %v3793
    %v4014 = vpop.f32.mrb[0].mxu0
    %v4015 = vadd.f32 %v3818, %v4014
    %v4016 = vpop.f32.mrb[0].mxu0
    %v4017 = vpop.f32.mrb[0].mxu0
    %v4018 = vadd.f32 %v3818, %v4017
    %v4019 = vpop.f32.mrb[0].mxu0
    %4020 = vmatprep.mubr.bf16.mxu0 0
    %4021 = vmatmul.mubr.bf16.gmra.mrb[0].mxu0 %v3794
    %v4022 = vpop.f32.mrb[0].mxu0
    %v4023 = vadd.f32 %v3818, %v4022
    %v4024 = vpop.f32.mrb[0].mxu0
    %v4025 = vpop.f32.mrb[0].mxu0
    %v4026 = vadd.f32 %v3818, %v4025
    %v4027 = vpop.f32.mrb[0].mxu0
    %4028 = vdwg.mxu0
    %v4029 = vmax.f32 %v3903, 0.0
    %v4030 = vmax.f32 %v3906, 0.0
    %v4031 = vmax.f32 %v3911, 0.0
    %v4032 = vmax.f32 %v3914, 0.0
    %v4033 = vmax.f32 %v3919, 0.0
    %v4034 = vmax.f32 %v3922, 0.0
    %v4035 = vmax.f32 %v3927, 0.0
    %v4036 = vmax.f32 %v3930, 0.0
    %v4037 = vmax.f32 %v3935, 0.0
    %v4038 = vmax.f32 %v3938, 0.0
    %v4039 = vmax.f32 %v3943, 0.0
    %v4040 = vmax.f32 %v3946, 0.0
    %v4041 = vmax.f32 %v3951, 0.0
    %v4042 = vmax.f32 %v3954, 0.0
    %v4043 = vmax.f32 %v3959, 0.0
    %v4044 = vmax.f32 %v3962, 0.0
    %v4045 = vmax.f32 %v3967, 0.0
    %v4046 = vmax.f32 %v3970, 0.0
    %v4047 = vmax.f32 %v3975, 0.0
    %v4048 = vmax.f32 %v3978, 0.0
    %v4049 = vmax.f32 %v3983, 0.0
    %v4050 = vmax.f32 %v3986, 0.0
    %v4051 = vmax.f32 %v3991, 0.0
    %v4052 = vmax.f32 %v3994, 0.0
    %v4053 = vmax.f32 %v3999, 0.0
    %v4054 = vmax.f32 %v4002, 0.0
    %v4055 = vmax.f32 %v4007, 0.0
    %v4056 = vmax.f32 %v4010, 0.0
    %v4057 = vmax.f32 %v4015, 0.0
    %v4058 = vmax.f32 %v4018, 0.0
    %v4059 = vmax.f32 %v4023, 0.0
    %v4060 = vmax.f32 %v4026, 0.0
    %4061 = vst [vmem:[#allocation7] sm:$0xff] %v4029
    %4062 = vst [vmem:[#allocation7 + $0x8] sm:$0xff] %v4030
    %4063 = vst [vmem:[#allocation7 + $0x10] sm:$0xff] %v4031
    %4064 = vst [vmem:[#allocation7 + $0x18] sm:$0xff] %v4032
    %4065 = vst [vmem:[#allocation7 + $0x20] sm:$0xff] %v4033
    %4066 = vst [vmem:[#allocation7 + $0x28] sm:$0xff] %v4034
    %4067 = vst [vmem:[#allocation7 + $0x30] sm:$0xff] %v4035
    %4068 = vst [vmem:[#allocation7 + $0x38] sm:$0xff] %v4036
    %4069 = vst [vmem:[#allocation7 + $0x40] sm:$0xff] %v4037
    %4070 = vst [vmem:[#allocation7 + $0x48] sm:$0xff] %v4038
    %4071 = vst [vmem:[#allocation7 + $0x50] sm:$0xff] %v4039
    %4072 = vst [vmem:[#allocation7 + $0x58] sm:$0xff] %v4040
    %4073 = vst [vmem:[#allocation7 + $0x60] sm:$0xff] %v4041
    %4074 = vst [vmem:[#allocation7 + $0x68] sm:$0xff] %v4042
    %4075 = vst [vmem:[#allocation7 + $0x70] sm:$0xff] %v4043
    %4076 = vst [vmem:[#allocation7 + $0x78] sm:$0xff] %v4044
    %4077 = vst [vmem:[#allocation7 + $0x80] sm:$0xff] %v4045
    %4078 = vst [vmem:[#allocation7 + $0x88] sm:$0xff] %v4046
    %4079 = vst [vmem:[#allocation7 + $0x90] sm:$0xff] %v4047
    %4080 = vst [vmem:[#allocation7 + $0x98] sm:$0xff] %v4048
    %4081 = vst [vmem:[#allocation7 + $0xa0] sm:$0xff] %v4049
    %4082 = vst [vmem:[#allocation7 + $0xa8] sm:$0xff] %v4050
    %4083 = vst [vmem:[#allocation7 + $0xb0] sm:$0xff] %v4051
    %4084 = vst [vmem:[#allocation7 + $0xb8] sm:$0xff] %v4052
    %4085 = vst [vmem:[#allocation7 + $0xc0] sm:$0xff] %v4053
    %4086 = vst [vmem:[#allocation7 + $0xc8] sm:$0xff] %v4054
    %4087 = vst [vmem:[#allocation7 + $0xd0] sm:$0xff] %v4055
    %4088 = vst [vmem:[#allocation7 + $0xd8] sm:$0xff] %v4056
    %4089 = vst [vmem:[#allocation7 + $0xe0] sm:$0xff] %v4057
    %4090 = vst [vmem:[#allocation7 + $0xe8] sm:$0xff] %v4058
    %4091 = vst [vmem:[#allocation7 + $0xf0] sm:$0xff] %v4059
    %4092 = vst [vmem:[#allocation7 + $0xf8] sm:$0xff] %v4060
    // Predicated region
    $region22: #{tcn_forward.1} parent=1 // pred_check
      _
    $region23: #{tcn_forward.1} parent=1 // pred_check_branch
      %4094 = sbr.rel (0) target = $region25
    $region24: #{tcn_forward.1} parent=1 // pred_region
      %s4096 = ssub.s32 4096, 4096
      %4097 = vsyncadd [#allocation4], %s4096
      %s4098 = sshll.u32 [#allocation7], 4
      %s4099 = int_to_ptr.vmem [resolvable:$true] %s4098
      %4104 = dma.vmem_to_hbm [thread:$0]  %s4099, 4096, %s3, [#allocation4], 128, 128, 8
    $region25: #{tcn_forward.1} parent=1 // pred_fallthru
      _
    // Predicated region
    $region26: #{tcn_forward.1} parent=1 // pred_check
      _
    $region27: #{tcn_forward.1} parent=1 // pred_check_branch
      %4106 = sbr.rel (0) target = $region29
    $region28: #{tcn_forward.1} parent=1 // pred_region
      %4107 = dma.done [#allocation4], 4096
    $region29: #{tcn_forward.1} parent=1 // pred_fallthru
      _
    %4108 = vsyncpa [#allocation3], 1
    %4109 = vsyncpa [#allocation6], 1
    %4110 = vsyncpa [#allocation4], 1

</llo_original>
